<compile_context>
chip_gen: v7x
topology: tpu7x:2x2x1
jax: 0.10.0
libtpu: 0.0.40
codegen_flags: <defaults>
</compile_context>

<pallas_src>
import numpy as np
import jax
import jax.numpy as jnp
from jax.experimental import pallas as pl
from jax.experimental.pallas import tpu as pltpu

# ----------------------------- config -------------------------------------
NUM_MELS = 80
EMBED_DIM = 128          # small embed dim for the test (module default is 512)
MEL_HOP_SCALE = 1        # TODO(synk): mel_hop_scale>1 channel-reshuffle path not implemented
SAMPLING_RATE = 16000
FFT_SIZE = 1024
FEATURE_DS_RATE = 320
HOP_SIZE = FEATURE_DS_RATE // MEL_HOP_SCALE
FMIN, FMAX = 80.0, 7600.0
EPS = 1e-10

N_BINS = FFT_SIZE // 2 + 1       # 513 rFFT bins
# With fmax = 7600 Hz the Slaney mel basis is identically zero for bins >= 487,
# so keeping only the first 512 bins is bit-exact for the log-mel output and
# keeps the DFT output 128-lane aligned / an exact multiple of the 256-wide MXU.
N_BINS_KEEP = 512
TILE_F_MAX = 256                 # frame-tile size (multiple of 8 sublanes, 256 MXU)
LOG10_INV = np.float32(1.0 / np.log(10.0))


# ----------------- parameter / basis construction (glue, numpy) ------------
def _hz_to_mel(freqs):
    freqs = np.asarray(freqs, dtype=np.float64)
    f_sp = 200.0 / 3.0
    mels = freqs / f_sp
    min_log_hz = 1000.0
    min_log_mel = min_log_hz / f_sp
    logstep = np.log(6.4) / 27.0
    return np.where(freqs >= min_log_hz,
                    min_log_mel + np.log(np.maximum(freqs, 1e-10) / min_log_hz) / logstep,
                    mels)


def _mel_to_hz(mels):
    mels = np.asarray(mels, dtype=np.float64)
    f_sp = 200.0 / 3.0
    freqs = f_sp * mels
    min_log_hz = 1000.0
    min_log_mel = min_log_hz / f_sp
    logstep = np.log(6.4) / 27.0
    return np.where(mels >= min_log_mel,
                    min_log_hz * np.exp(logstep * (mels - min_log_mel)),
                    freqs)


def mel_filterbank(sr, n_fft, n_mels, fmin, fmax):
    """Slaney-style mel filterbank, matches librosa.filters.mel defaults."""
    n_bins = n_fft // 2 + 1
    fftfreqs = np.linspace(0.0, sr / 2.0, n_bins)
    mel_f = _mel_to_hz(np.linspace(_hz_to_mel(fmin), _hz_to_mel(fmax), n_mels + 2))
    fdiff = np.diff(mel_f)
    ramps = mel_f[:, None] - fftfreqs[None, :]
    weights = np.zeros((n_mels, n_bins), dtype=np.float64)
    for i in range(n_mels):
        lower = -ramps[i] / fdiff[i]
        upper = ramps[i + 2] / fdiff[i + 1]
        weights[i] = np.maximum(0.0, np.minimum(lower, upper))
    enorm = 2.0 / (mel_f[2:n_mels + 2] - mel_f[:n_mels])
    weights *= enorm[:, None]
    return weights                                    # (n_mels, n_bins)


def hann_window_periodic(n):
    return 0.5 - 0.5 * np.cos(2.0 * np.pi * np.arange(n, dtype=np.float64) / n)


def dft_matrix(n_fft, n_keep, window):
    """Window-folded real-DFT matrix, cos | -sin concatenated: (n_fft, 2*n_keep)."""
    n = np.arange(n_fft, dtype=np.float64)[:, None]
    k = np.arange(n_keep, dtype=np.float64)[None, :]
    ang = 2.0 * np.pi * n * k / n_fft
    cos_m = np.cos(ang) * window[:, None]
    sin_m = -np.sin(ang) * window[:, None]
    return np.concatenate([cos_m, sin_m], axis=1).astype(np.float32)


# ------------------------------ Pallas kernel ------------------------------
def mel_feature_kernel(frames_ref, dft_ref, mel_ref, w_ref, b_ref, o_ref):
    # frames_ref: (TILE_F, FFT_SIZE) bf16     dft_ref: (FFT_SIZE, 2*N_BINS_KEEP) bf16
    # mel_ref:    (N_BINS_KEEP, NUM_MELS) f32 w_ref:   (NUM_MELS, EMBED_DIM) f32
    # b_ref:      (1, EMBED_DIM) f32          o_ref:   (EMBED_DIM, TILE_F) f32
    x = frames_ref[...]
    # single weight-stationary MXU pass for the whole real DFT (bf16 in, f32 acc)
    y = jnp.dot(x, dft_ref[...], preferred_element_type=jnp.float32)
    re = y[:, :N_BINS_KEEP]
    im = y[:, N_BINS_KEEP:]
    mag = jnp.sqrt(re * re + im * im)                       # |rFFT| (truncated bins)
    mel = jnp.dot(mag, mel_ref[...], preferred_element_type=jnp.float32)
    logmel = jnp.log(jnp.maximum(mel, EPS))                 # log10 scale folded into w
    out = jnp.dot(logmel, w_ref[...], preferred_element_type=jnp.float32) + b_ref[...]
    # write pre-transposed: (TILE_F, E) -> (E, TILE_F); XLU slot is idle here.
    o_ref[...] = out.T.astype(o_ref.dtype)


def mel_feature_extraction(audio, weight, bias, dft_m, mel_m):
    """audio: (B, T) float32. Returns (B, EMBED_DIM, F) matching PyTorch."""
    B, T = audio.shape
    n_frames = 1 + T // HOP_SIZE
    f_pad8 = ((n_frames + 7) // 8) * 8
    tile_f = min(TILE_F_MAX, f_pad8)
    f_pad = ((f_pad8 + tile_f - 1) // tile_f) * tile_f
    n_tiles = f_pad // tile_f

    # framing with librosa-style reflect padding (glue)
    # TODO(synk): for very long audio the framing gather could move into the
    #             kernel via manual DMA of overlapping sample windows.
    padded = jnp.pad(audio, ((0, 0), (FFT_SIZE // 2, FFT_SIZE // 2)), mode="reflect")
    idx = (np.arange(n_frames)[:, None] * HOP_SIZE + np.arange(FFT_SIZE)[None, :])
    frames = padded[:, idx]                                 # (B, F, FFT_SIZE)
    frames = jnp.pad(frames, ((0, 0), (0, f_pad - n_frames), (0, 0)))
    frames = frames.astype(jnp.bfloat16)                    # halve DMA, native MXU rate

    # fold the 1/ln(10) log10 scale into the Linear weight
    w_eff = (weight * LOG10_INV).astype(jnp.float32)
    bias2d = bias.reshape(1, EMBED_DIM).astype(jnp.float32)

    out = pl.pallas_call(
        mel_feature_kernel,
        out_shape=jax.ShapeDtypeStruct((B, EMBED_DIM, f_pad), jnp.float32),
        grid=(B, n_tiles),
        in_specs=[
            pl.BlockSpec((None, tile_f, FFT_SIZE), lambda b, t: (b, t, 0)),
            pl.BlockSpec((FFT_SIZE, 2 * N_BINS_KEEP), lambda b, t: (0, 0)),
            pl.BlockSpec((N_BINS_KEEP, NUM_MELS), lambda b, t: (0, 0)),
            pl.BlockSpec((NUM_MELS, EMBED_DIM), lambda b, t: (0, 0)),
            pl.BlockSpec((1, EMBED_DIM), lambda b, t: (0, 0)),
        ],
        out_specs=pl.BlockSpec((None, EMBED_DIM, tile_f), lambda b, t: (b, 0, t)),
        compiler_params=pltpu.CompilerParams(
            dimension_semantics=("parallel", "parallel")),
    )(frames, dft_m, mel_m, w_eff, bias2d)

    # output is already (B, EMBED_DIM, F_pad); just drop the padded frames
    return out[:, :, :n_frames]


# ------------------------------- reference ---------------------------------
def reference_numpy(audio_np, mel_basis, w_np, b_np, window):
    B, T = audio_np.shape
    n_frames = 1 + T // HOP_SIZE
    outs = []
    for x_i in audio_np.astype(np.float64):
        xp = np.pad(x_i, FFT_SIZE // 2, mode="reflect")
        idx = np.arange(n_frames)[:, None] * HOP_SIZE + np.arange(FFT_SIZE)[None, :]
        fr = xp[idx] * window[None, :]
        spc = np.abs(np.fft.rfft(fr, n=FFT_SIZE, axis=-1))          # (F, N_BINS)
        outs.append(np.log10(np.maximum(EPS, spc @ mel_basis.T)))   # (F, NUM_MELS)
    y = np.stack(outs)                                              # (B, F, NUM_MELS)
    out = y @ w_np + b_np                                           # (B, F, EMBED_DIM)
    return out.transpose(0, 2, 1)                                   # (B, EMBED_DIM, F)


# --------------------------------- main -------------------------------------
if __name__ == "__main__":
    key = jax.random.PRNGKey(0)
    k_audio, k_w, k_b = jax.random.split(key, 3)

    B, T = 2, 3200                                   # -> 11 frames
    audio = jax.random.normal(k_audio, (B, T), dtype=jnp.float32)

    # deterministic Linear(num_mels*mel_hop_scale -> embed_dim) parameters
    in_dim = NUM_MELS * MEL_HOP_SCALE
    weight = (jax.random.normal(k_w, (in_dim, EMBED_DIM), dtype=jnp.float32)
              * (1.0 / np.sqrt(in_dim)))
    bias = jax.random.normal(k_b, (EMBED_DIM,), dtype=jnp.float32) * 0.01

    # fixed (non-learned) bases from the forward pass
    window = hann_window_periodic(FFT_SIZE)
    dft_np = dft_matrix(FFT_SIZE, N_BINS_KEEP, window)          # (1024, 1024)
    mel_basis = mel_filterbank(SAMPLING_RATE, FFT_SIZE, NUM_MELS, FMIN, FMAX)
    mel_np = mel_basis.T[:N_BINS_KEEP, :].astype(np.float32)    # (512, 80), exact

    dft_m = jnp.asarray(dft_np).astype(jnp.bfloat16)
    mel_m = jnp.asarray(mel_np)

    out = mel_feature_extraction(audio, weight, bias, dft_m, mel_m)
    out = jax.block_until_ready(out)

    ref = reference_numpy(np.asarray(audio), mel_basis,
                          np.asarray(weight).astype(np.float64),
                          np.asarray(bias).astype(np.float64), window)

    assert out.shape == (B, EMBED_DIM, 1 + T // HOP_SIZE), out.shape
    assert np.max(np.abs(np.asarray(out, dtype=np.float64) - ref)) < 5e-2

    print("KERNEL_OK")
</pallas_src>

<mosaic_0001>
module attributes {stable_mosaic.version = 11 : i64} {
  func.func @mel_feature_kernel(%arg0: i32, %arg1: i32, %arg2: memref<1x16x1024xbf16, #tpu.memory_space<vmem>>, %arg3: memref<1024x1024xbf16, #tpu.memory_space<vmem>>, %arg4: memref<512x80xf32, #tpu.memory_space<vmem>>, %arg5: memref<80x128xf32, #tpu.memory_space<vmem>>, %arg6: memref<1x128xf32, #tpu.memory_space<vmem>>, %arg7: memref<1x128x16xf32, #tpu.memory_space<vmem>>) attributes {dimension_semantics = [#tpu.dimension_semantics<parallel>, #tpu.dimension_semantics<parallel>], iteration_bounds = array<i64: 2, 1>, scalar_prefetch = 0 : i64, scratch_operands = 0 : i64, tpu.core_type = #tpu.core_type<tc>, window_params = [{transform_indices = @transform_0, window_bounds = array<i64: 1, 16, 1024>}, {pipeline_mode = #tpu.pipeline_mode<synchronous>, transform_indices = @transform_1, window_bounds = array<i64: 1024, 1024>}, {pipeline_mode = #tpu.pipeline_mode<synchronous>, transform_indices = @transform_2, window_bounds = array<i64: 512, 80>}, {pipeline_mode = #tpu.pipeline_mode<synchronous>, transform_indices = @transform_3, window_bounds = array<i64: 80, 128>}, {pipeline_mode = #tpu.pipeline_mode<synchronous>, transform_indices = @transform_4, window_bounds = array<i64: 1, 128>}, {transform_indices = @transform_5, window_bounds = array<i64: 1, 128, 16>}]} {
    %c0 = arith.constant 0 : index
    %c0_0 = arith.constant 0 : index
    %c0_1 = arith.constant 0 : index
    %0 = vector.load %arg2[%c0, %c0_0, %c0_1] : memref<1x16x1024xbf16, #tpu.memory_space<vmem>>, vector<1x16x1024xbf16>
    %1 = vector.shape_cast %0 : vector<1x16x1024xbf16> to vector<16x1024xbf16>
    %c0_2 = arith.constant 0 : index
    %c0_3 = arith.constant 0 : index
    %2 = vector.load %arg3[%c0_2, %c0_3] : memref<1024x1024xbf16, #tpu.memory_space<vmem>>, vector<1024x1024xbf16>
    %cst = arith.constant dense<0.000000e+00> : vector<16x1024xf32>
    %3 = tpu.matmul %1, %2, %cst {dimension_numbers = #tpu.dot_dimension_numbers<[1], [0], [0], [1], [0, 0, 1, 1], [], []>} : vector<16x1024xbf16>, vector<1024x1024xbf16>, vector<16x1024xf32> -> vector<16x1024xf32>
    %4 = vector.extract_strided_slice %3 {offsets = [0, 0], sizes = [16, 512], strides = [1, 1]} : vector<16x1024xf32> to vector<16x512xf32>
    %5 = vector.extract_strided_slice %3 {offsets = [0, 512], sizes = [16, 512], strides = [1, 1]} : vector<16x1024xf32> to vector<16x512xf32>
    %6 = arith.mulf %4, %4 : vector<16x512xf32>
    %7 = arith.mulf %5, %5 : vector<16x512xf32>
    %8 = arith.addf %6, %7 : vector<16x512xf32>
    %9 = math.sqrt %8 : vector<16x512xf32>
    %c0_4 = arith.constant 0 : index
    %c0_5 = arith.constant 0 : index
    %10 = vector.load %arg4[%c0_4, %c0_5] : memref<512x80xf32, #tpu.memory_space<vmem>>, vector<512x80xf32>
    %cst_6 = arith.constant dense<0.000000e+00> : vector<16x80xf32>
    %11 = tpu.matmul %9, %10, %cst_6 {dimension_numbers = #tpu.dot_dimension_numbers<[1], [0], [0], [1], [0, 0, 1, 1], [], []>} : vector<16x512xf32>, vector<512x80xf32>, vector<16x80xf32> -> vector<16x80xf32>
    %cst_7 = arith.constant 1.000000e-10 : f32
    %12 = vector.broadcast %cst_7 : f32 to vector<16x80xf32>
    %13 = arith.maximumf %11, %12 : vector<16x80xf32>
    %14 = math.log %13 : vector<16x80xf32>
    %c0_8 = arith.constant 0 : index
    %c0_9 = arith.constant 0 : index
    %15 = vector.load %arg5[%c0_8, %c0_9] : memref<80x128xf32, #tpu.memory_space<vmem>>, vector<80x128xf32>
    %cst_10 = arith.constant dense<0.000000e+00> : vector<16x128xf32>
    %16 = tpu.matmul %14, %15, %cst_10 {dimension_numbers = #tpu.dot_dimension_numbers<[1], [0], [0], [1], [0, 0, 1, 1], [], []>} : vector<16x80xf32>, vector<80x128xf32>, vector<16x128xf32> -> vector<16x128xf32>
    %c0_11 = arith.constant 0 : index
    %c0_12 = arith.constant 0 : index
    %17 = vector.load %arg6[%c0_11, %c0_12] : memref<1x128xf32, #tpu.memory_space<vmem>>, vector<1x128xf32>
    %18 = vector.broadcast %17 : vector<1x128xf32> to vector<16x128xf32>
    %19 = arith.addf %16, %18 : vector<16x128xf32>
    %20 = tpu.transpose %19, [1, 0] : vector<16x128xf32> -> vector<128x16xf32>
    %c0_13 = arith.constant 0 : index
    %c0_14 = arith.constant 0 : index
    %c0_15 = arith.constant 0 : index
    %21 = vector.load %arg7[%c0_13, %c0_14, %c0_15] : memref<1x128x16xf32, #tpu.memory_space<vmem>>, vector<1x128x16xf32>
    %22 = vector.shape_cast %21 : vector<1x128x16xf32> to vector<128x16xf32>
    %23 = vector.shape_cast %20 : vector<128x16xf32> to vector<1x128x16xf32>
    tpu.vector_store %arg7[%c0_13, %c0_14, %c0_15], %23 {strides = array<i32>} : memref<1x128x16xf32, #tpu.memory_space<vmem>>, vector<1x128x16xf32>,
    return
  }
  func.func @transform_0(%arg0: i32, %arg1: i32) -> (i32, i32, i32) {
    %c0_i32 = arith.constant 0 : i32
    %c0_i32_0 = arith.constant 0 : i32
    return %arg0, %arg1, %c0_i32 : i32, i32, i32
  }
  func.func @transform_1(%arg0: i32, %arg1: i32) -> (i32, i32) {
    %c0_i32 = arith.constant 0 : i32
    %c0_i32_0 = arith.constant 0 : i32
    %c0_i32_1 = arith.constant 0 : i32
    return %c0_i32, %c0_i32_0 : i32, i32
  }
  func.func @transform_2(%arg0: i32, %arg1: i32) -> (i32, i32) {
    %c0_i32 = arith.constant 0 : i32
    %c0_i32_0 = arith.constant 0 : i32
    %c0_i32_1 = arith.constant 0 : i32
    return %c0_i32, %c0_i32_0 : i32, i32
  }
  func.func @transform_3(%arg0: i32, %arg1: i32) -> (i32, i32) {
    %c0_i32 = arith.constant 0 : i32
    %c0_i32_0 = arith.constant 0 : i32
    %c0_i32_1 = arith.constant 0 : i32
    return %c0_i32, %c0_i32_0 : i32, i32
  }
  func.func @transform_4(%arg0: i32, %arg1: i32) -> (i32, i32) {
    %c0_i32 = arith.constant 0 : i32
    %c0_i32_0 = arith.constant 0 : i32
    %c0_i32_1 = arith.constant 0 : i32
    return %c0_i32, %c0_i32_0 : i32, i32
  }
  func.func @transform_5(%arg0: i32, %arg1: i32) -> (i32, i32, i32) {
    %c0_i32 = arith.constant 0 : i32
    %c0_i32_0 = arith.constant 0 : i32
    return %arg0, %c0_i32, %arg1 : i32, i32, i32
  }
}

</mosaic_0001>

<llo_original>
// kernel: tpu_custom_call.1
$region0: #{tpu_custom_call.1}
  #allocation0 [shape = 'u32[]', space=smem, size = 0x4, offset = 0x4, fixed_abs, tag = 'smem constant byte address 0x4 - core index']
  #allocation1 [shape = 'u32[144,128]{1,0:T(1,128)}', space=vmem, size = 0x12000, scoped, tag = 'internal scratch']
  %s0 = inlined_call_operand.hbm [shape: bf16[2,16,1024], index: 0, kind: input, shape index: {}]
  %s1 = inlined_call_operand.hbm [shape: bf16[1024,1024], index: 1, kind: input, shape index: {}]
  %s2 = inlined_call_operand.vmem [shape: f32[512,80], index: 2, kind: input, shape index: {}]
  %s3 = inlined_call_operand.hbm [shape: f32[80,128], index: 3, kind: input, shape index: {}]
  %s4 = inlined_call_operand.hbm [shape: f32[1,128], index: 4, kind: input, shape index: {}]
  %s5 = inlined_call_operand.vmem [shape: f32[2,128,16], index: 5, kind: output, shape index: {}]
  %s6 = sld [smem:[#allocation0]]
  $region69: #{tpu_custom_call.1} parent=0
    _
  %s8 = ssub.s32 1, %s6
  %s9 = scalar_select 0, %s8, %s6
  $region1: #{tpu_custom_call.1} parent=0
    #allocation2 [shape = 'u8[65536]{0}', space=vmem, size = 0x10000, scoped, tag = 'input window, operand 0']
    #allocation3 [shape = 's32[2]{0}', space=sflag, size = 0x8, scoped, tag = 'scoped memory for tpu_custom_call.1']
    #allocation4 [shape = 'u8[2097152]{0}', space=vmem, size = 0x200000, scoped, tag = 'input window, operand 1, single buffered']
    #allocation5 [shape = 's32[1]{0}', space=sflag, size = 0x4, scoped, tag = 'scoped memory for tpu_custom_call.1']
    #allocation6 [shape = 'u8[40960]{0}', space=vmem, size = 0xa000, scoped, tag = 'input window, operand 3, single buffered']
    #allocation7 [shape = 'u8[512]{0}', space=vmem, size = 0x400, scoped, tag = 'input window, operand 4, single buffered']
    #allocation8 [shape = 's32[1]{0}', space=sflag, size = 0x4, scoped, tag = 'scoped memory for tpu_custom_call.1']
    %10 = vsyncpa [#allocation3], 0
    %s11 = scalar_lea.sflag [#allocation3], 1
    %12 = vsyncpa %s11, 0
    %13 = vsyncpa [#allocation5], 0
    %14 = vsyncpa [#allocation8], 0
    loop: start=0, step=1, limit=4
    $region2: #{tpu_custom_call.1} parent=1 // loop_pre_header
      _
    $region3: #{tpu_custom_call.1} parent=1 // loop_header
      %s16 = sphi 0, %s20
      %p17 = scmp.ge.s32.totalorder %s16, 4
      %s23 = sphi 0, %s35
      %s24 = sphi 0, %s31
      %s25 = sphi 0, %s23
      %s26 = sphi 0, %s24
      %s27 = sphi 0, %s25
      %s28 = sphi 0, %s26
      %s40 = sphi 0, %s42
      %s43 = sphi 0, %s40
      %s44 = sphi 0, %s43
      %s60 = sphi 0, %s44
      %s64 = sphi 0, %s64
      %s66 = sphi 0, %s64
      %s67 = sphi 0, %s66
      %s81 = sphi 0, %s67
      %s85 = sphi 0, %s85
      %s87 = sphi 0, %s85
      %s88 = sphi 0, %s87
      %s102 = sphi 0, %s88
      %s106 = sphi 0, %s106
      %s108 = sphi 0, %s106
      %s109 = sphi 0, %s108
      %s123 = sphi 0, %s109
      %s127 = sphi 0, %s127
      %s129 = sphi 0, %s127
      %s130 = sphi 0, %s129
      %s144 = sphi 0, %s130
      %s152 = sphi 0, %s154
      %s155 = sphi 0, %s152
      %s156 = sphi 0, %s155
      %s172 = sphi 0, %s156
    $region4: #{tpu_custom_call.1} parent=1 // loop_header_branch
      %19 = sbr.rel (%p17) target = $region8
    $region5: #{tpu_custom_call.1} parent=1 // loop_body
      %s21 = ssub.s32 %s16, 1
      %s22 = ssub.s32 %s16, 2
      %s29 = sadd.s32 1, %s24
      %p30 = scmp.ge.s32.totalorder %s29, 1
      %s31 = scalar_select %p30, 0, %s29
      %s32 = sadd.s32 1, %s23
      %s33 = scalar_select %p30, %s32, %s23
      %p34 = scmp.ge.s32.totalorder %s33, 2
      %s35 = scalar_select %p34, 0, %s33
      %s36 = ssub.s32 %s23, %s35
      %s37 = ssub.s32 %s24, %s31
      %s38 = sor.u32 %s36, %s37
      %p39 = scmp.eq.s32.totalorder %s38, 0
      %s41 = sadd.s32 %s40, 1
      %s42 = scalar_select %p39, %s40, %s41
      %p45 = pneg %p39
      %p46 = scmp.eq.s32.totalorder %s16, 1
      %p47 = por %p45, %p46
      %p48 = scmp.ne.s32.totalorder %s40, %s43
      %p49 = scmp.eq.s32.totalorder %s16, 0
      %p50 = por %p48, %p49
      %p51 = scmp.ne.s32.totalorder %s40, %s43
      %p52 = scmp.eq.s32.totalorder %s21, 1
      %p53 = por %p51, %p52
      %p54 = scmp.ne.s32.totalorder %s43, %s44
      %p55 = scmp.eq.s32.totalorder %s21, 0
      %p56 = por %p54, %p55
      %p57 = scmp.ne.s32.totalorder %s43, %s44
      %p58 = scmp.eq.s32.totalorder %s22, 1
      %p59 = por %p57, %p58
      %p61 = scmp.ne.s32.totalorder %s44, %s60
      %p62 = scmp.eq.s32.totalorder %s22, 0
      %p63 = por %p61, %p62
      %s65 = sadd.s32 %s64, 1
      %p68 = scmp.eq.s32.totalorder %s16, 1
      %p69 = scmp.ne.s32.totalorder %s64, %s66
      %p70 = scmp.eq.s32.totalorder %s16, 0
      %p71 = por %p69, %p70
      %p72 = scmp.ne.s32.totalorder %s64, %s66
      %p73 = scmp.eq.s32.totalorder %s21, 1
      %p74 = por %p72, %p73
      %p75 = scmp.ne.s32.totalorder %s66, %s67
      %p76 = scmp.eq.s32.totalorder %s21, 0
      %p77 = por %p75, %p76
      %p78 = scmp.ne.s32.totalorder %s66, %s67
      %p79 = scmp.eq.s32.totalorder %s22, 1
      %p80 = por %p78, %p79
      %p82 = scmp.ne.s32.totalorder %s67, %s81
      %p83 = scmp.eq.s32.totalorder %s22, 0
      %p84 = por %p82, %p83
      %s86 = sadd.s32 %s85, 1
      %p89 = scmp.eq.s32.totalorder %s16, 1
      %p90 = scmp.ne.s32.totalorder %s85, %s87
      %p91 = scmp.eq.s32.totalorder %s16, 0
      %p92 = por %p90, %p91
      %p93 = scmp.ne.s32.totalorder %s85, %s87
      %p94 = scmp.eq.s32.totalorder %s21, 1
      %p95 = por %p93, %p94
      %p96 = scmp.ne.s32.totalorder %s87, %s88
      %p97 = scmp.eq.s32.totalorder %s21, 0
      %p98 = por %p96, %p97
      %p99 = scmp.ne.s32.totalorder %s87, %s88
      %p100 = scmp.eq.s32.totalorder %s22, 1
      %p101 = por %p99, %p100
      %p103 = scmp.ne.s32.totalorder %s88, %s102
      %p104 = scmp.eq.s32.totalorder %s22, 0
      %p105 = por %p103, %p104
      %s107 = sadd.s32 %s106, 1
      %p110 = scmp.eq.s32.totalorder %s16, 1
      %p111 = scmp.ne.s32.totalorder %s106, %s108
      %p112 = scmp.eq.s32.totalorder %s16, 0
      %p113 = por %p111, %p112
      %p114 = scmp.ne.s32.totalorder %s106, %s108
      %p115 = scmp.eq.s32.totalorder %s21, 1
      %p116 = por %p114, %p115
      %p117 = scmp.ne.s32.totalorder %s108, %s109
      %p118 = scmp.eq.s32.totalorder %s21, 0
      %p119 = por %p117, %p118
      %p120 = scmp.ne.s32.totalorder %s108, %s109
      %p121 = scmp.eq.s32.totalorder %s22, 1
      %p122 = por %p120, %p121
      %p124 = scmp.ne.s32.totalorder %s109, %s123
      %p125 = scmp.eq.s32.totalorder %s22, 0
      %p126 = por %p124, %p125
      %s128 = sadd.s32 %s127, 1
      %p131 = scmp.eq.s32.totalorder %s16, 1
      %p132 = scmp.ne.s32.totalorder %s127, %s129
      %p133 = scmp.eq.s32.totalorder %s16, 0
      %p134 = por %p132, %p133
      %p135 = scmp.ne.s32.totalorder %s127, %s129
      %p136 = scmp.eq.s32.totalorder %s21, 1
      %p137 = por %p135, %p136
      %p138 = scmp.ne.s32.totalorder %s129, %s130
      %p139 = scmp.eq.s32.totalorder %s21, 0
      %p140 = por %p138, %p139
      %p141 = scmp.ne.s32.totalorder %s129, %s130
      %p142 = scmp.eq.s32.totalorder %s22, 1
      %p143 = por %p141, %p142
      %p145 = scmp.ne.s32.totalorder %s130, %s144
      %p146 = scmp.eq.s32.totalorder %s22, 0
      %p147 = por %p145, %p146
      %s148 = ssub.s32 %s23, %s35
      %s149 = ssub.s32 %s24, %s31
      %s150 = sor.u32 %s148, %s149
      %p151 = scmp.eq.s32.totalorder %s150, 0
      %s153 = sadd.s32 %s152, 1
      %s154 = scalar_select %p151, %s152, %s153
      %p157 = pneg %p151
      %p158 = scmp.eq.s32.totalorder %s16, 1
      %p159 = por %p157, %p158
      %p160 = scmp.ne.s32.totalorder %s152, %s155
      %p161 = scmp.eq.s32.totalorder %s16, 0
      %p162 = por %p160, %p161
      %p163 = scmp.ne.s32.totalorder %s152, %s155
      %p164 = scmp.eq.s32.totalorder %s21, 1
      %p165 = por %p163, %p164
      %p166 = scmp.ne.s32.totalorder %s155, %s156
      %p167 = scmp.eq.s32.totalorder %s21, 0
      %p168 = por %p166, %p167
      %p169 = scmp.ne.s32.totalorder %s155, %s156
      %p170 = scmp.eq.s32.totalorder %s22, 1
      %p171 = por %p169, %p170
      %p173 = scmp.ne.s32.totalorder %s156, %s172
      %p174 = scmp.eq.s32.totalorder %s22, 0
      %p175 = por %p173, %p174
      %p176 = scmp.le.s32.totalorder 1, %s16
      %p177 = scmp.lt.s32.totalorder %s16, 3
      %p178 = pnand %p176, %p177
      %p179 = pneg %p178
      // Predicated region
      $region9: #{tpu_custom_call.1} parent=5 // pred_check
        _
      $region10: #{tpu_custom_call.1} parent=5 // pred_check_branch
        %181 = sbr.rel (%p178) target = $region12
      $region11: #{tpu_custom_call.1} parent=5 // pred_region
        %s182 = ssub.s32 %s16, 1
        // Predicated region
        $region13: #{tpu_custom_call.1} parent=11 // pred_check
          %p183 = pneg %p77
        $region14: #{tpu_custom_call.1} parent=11 // pred_check_branch
          %185 = sbr.rel (%p183) target = $region16
        $region15: #{tpu_custom_call.1} parent=11 // pred_region
          %s187 = ssub.s32 65536, 65536
          %188 = vsyncadd [#allocation5], %s187
          %s189 = sshll.u32 [#allocation4], 4
          %s190 = int_to_ptr.vmem [resolvable:$true] %s189
          %195 = dma.hbm_to_vmem [thread:$0]  %s1, 65536, %s190, [#allocation5], 512, 512, 32
        $region16: #{tpu_custom_call.1} parent=11 // pred_fallthru
          _
        // Predicated region
        $region17: #{tpu_custom_call.1} parent=11 // pred_check
          %p196 = pneg %p98
        $region18: #{tpu_custom_call.1} parent=11 // pred_check_branch
          %198 = sbr.rel (%p196) target = $region20
        $region19: #{tpu_custom_call.1} parent=11 // pred_region
          _
        $region20: #{tpu_custom_call.1} parent=11 // pred_fallthru
          _
        // Predicated region
        $region21: #{tpu_custom_call.1} parent=11 // pred_check
          %p199 = pneg %p119
        $region22: #{tpu_custom_call.1} parent=11 // pred_check_branch
          %201 = sbr.rel (%p199) target = $region24
        $region23: #{tpu_custom_call.1} parent=11 // pred_region
          %s203 = ssub.s32 1280, 1280
          %204 = vsyncadd [#allocation5], %s203
          %s205 = sshll.u32 [#allocation6], 4
          %s206 = int_to_ptr.vmem [resolvable:$true] %s205
          %211 = dma.hbm_to_vmem [thread:$0]  %s3, 1280, %s206, [#allocation5], 128, 128, 8
        $region24: #{tpu_custom_call.1} parent=11 // pred_fallthru
          _
        // Predicated region
        $region25: #{tpu_custom_call.1} parent=11 // pred_check
          %p212 = pneg %p140
        $region26: #{tpu_custom_call.1} parent=11 // pred_check_branch
          %214 = sbr.rel (%p212) target = $region28
        $region27: #{tpu_custom_call.1} parent=11 // pred_region
          %s216 = ssub.s32 16, 16
          %217 = vsyncadd [#allocation8], %s216
          %s219 = sshll.u32 [#allocation7], 4
          %s220 = int_to_ptr.vmem [resolvable:$true] %s219
          %222 = dma.hbm_to_vmem [thread:$0]  %s4, 16, %s220, [#allocation8]
        $region28: #{tpu_custom_call.1} parent=11 // pred_fallthru
          _
      $region12: #{tpu_custom_call.1} parent=5 // pred_fallthru
        _
      %p223 = scmp.lt.s32.totalorder %s16, 2
      // Predicated region
      $region29: #{tpu_custom_call.1} parent=5 // pred_check
        %p224 = pneg %p223
      $region30: #{tpu_custom_call.1} parent=5 // pred_check_branch
        %226 = sbr.rel (%p224) target = $region32
      $region31: #{tpu_custom_call.1} parent=5 // pred_region
        // Predicated region
        $region33: #{tpu_custom_call.1} parent=31 // pred_check
          %p227 = pneg %p50
        $region34: #{tpu_custom_call.1} parent=31 // pred_check_branch
          %229 = sbr.rel (%p227) target = $region36
        $region35: #{tpu_custom_call.1} parent=31 // pred_region
          %s230 = sand.u32 %s40, 1
          %s231 = scalar_lea.sflag [#allocation3], %s230
          %s232 = sand.u32 %s40, 1
          %s233 = smul.addr %s232, 64
          %s234 = scalar_lea.vmem [#allocation2], %s233
          %s235 = smul.u32 2, %s24
          %s237 = ssub.s32 1024, 1024
          %238 = vsyncadd %s231, %s237
          %s239 = smul.addr %s235, 8
          %s240 = smul.addr %s23, 16
          %s241 = sadd.s32 %s239, %s240
          %s242 = smul.addr %s241, 64
          %s243 = scalar_lea.hbm %s0, %s242
          %s244 = sshll.u32 %s234, 4
          %s245 = int_to_ptr.vmem [resolvable:$true] %s244
          %250 = dma.hbm_to_vmem [thread:$0]  %s243, 1024, %s245, %s231, 512, 512, 32
        $region36: #{tpu_custom_call.1} parent=31 // pred_fallthru
          _
      $region32: #{tpu_custom_call.1} parent=5 // pred_fallthru
        _
      %p251 = scmp.le.s32.totalorder 1, %s16
      %p252 = scmp.lt.s32.totalorder %s16, 3
      %p253 = pnand %p251, %p252
      %p254 = pneg %p253
      // Predicated region
      $region37: #{tpu_custom_call.1} parent=5 // pred_check
        _
      $region38: #{tpu_custom_call.1} parent=5 // pred_check_branch
        %256 = sbr.rel (%p253) target = $region40
      $region39: #{tpu_custom_call.1} parent=5 // pred_region
        %s257 = ssub.s32 %s16, 1
        %s258 = sand.u32 %s43, 1
        %s259 = scalar_lea.sflag [#allocation3], %s258
        %s260 = sand.u32 %s43, 1
        %s261 = smul.addr %s260, 64
        %s262 = scalar_lea.vmem [#allocation2], %s261
        // Predicated region
        $region41: #{tpu_custom_call.1} parent=39 // pred_check
          %p263 = pneg %p56
        $region42: #{tpu_custom_call.1} parent=39 // pred_check_branch
          %265 = sbr.rel (%p263) target = $region44
        $region43: #{tpu_custom_call.1} parent=39 // pred_region
          %266 = dma.done %s259, 1024
        $region44: #{tpu_custom_call.1} parent=39 // pred_fallthru
          _
        // Predicated region
        $region45: #{tpu_custom_call.1} parent=39 // pred_check
          %p267 = pneg %p77
        $region46: #{tpu_custom_call.1} parent=39 // pred_check_branch
          %269 = sbr.rel (%p267) target = $region48
        $region47: #{tpu_custom_call.1} parent=39 // pred_region
          %270 = dma.done [#allocation5], 65536
        $region48: #{tpu_custom_call.1} parent=39 // pred_fallthru
          _
        // Predicated region
        $region49: #{tpu_custom_call.1} parent=39 // pred_check
          %p271 = pneg %p119
        $region50: #{tpu_custom_call.1} parent=39 // pred_check_branch
          %273 = sbr.rel (%p271) target = $region52
        $region51: #{tpu_custom_call.1} parent=39 // pred_region
          %274 = dma.done [#allocation5], 1280
        $region52: #{tpu_custom_call.1} parent=39 // pred_fallthru
          _
        // Predicated region
        $region53: #{tpu_custom_call.1} parent=39 // pred_check
          %p275 = pneg %p140
        $region54: #{tpu_custom_call.1} parent=39 // pred_check_branch
          %277 = sbr.rel (%p275) target = $region56
        $region55: #{tpu_custom_call.1} parent=39 // pred_region
          %278 = dma.done [#allocation8], 16
        $region56: #{tpu_custom_call.1} parent=39 // pred_fallthru
          _
        %s279 = sand.u32 %s43, 1
        %s280 = scalar_lea.sflag [#allocation3], %s279
        %s281 = sand.u32 %s43, 1
        %s282 = smul.addr %s281, 64
        %s283 = scalar_lea.vmem [#allocation2], %s282
        %p284 = pneg %p56
        %p285 = pneg %p53
        %p286 = pneg %p77
        %p287 = pneg %p74
        %p288 = pneg %p98
        %p289 = pneg %p95
        %p290 = pneg %p119
        %p291 = pneg %p116
        %p292 = pneg %p140
        %p293 = pneg %p137
        %p294 = pneg %p168
        %p295 = pneg %p165
        %p296 = scmp.lt.s32.totalorder %s25, 1
        %s297 = scalar_select %p296, %s25, 1
        %p298 = scmp.lt.s32.totalorder %s26, 0
        %s299 = scalar_select %p298, %s26, 0
        %s300 = smul.addr %s297, 16
        %s301 = sadd.s32 %s299, %s300
        %s302 = smul.addr %s301, 8
        %s303 = scalar_lea.vmem %s5, %s302
        %s304 = smul.u32 2, %s26
        %p305 = scmp.lt.s32.totalorder %s25, 1
        %s306 = scalar_select %p305, %s25, 1
        %p307 = scmp.lt.s32.totalorder %s26, 0
        %s308 = scalar_select %p307, %s26, 0
        %s309 = smul.addr %s306, 16
        %s310 = sadd.s32 %s308, %s309
        %s311 = smul.addr %s310, 8
        %s312 = scalar_lea.vmem %s5, %s311
        %v313 = vld [vmem:[%s262] sm:$0xff]
        %v314 = vld [vmem:[%s262 + $0x8] sm:$0xff]
        %v315 = vld [vmem:[%s262 + $0x10] sm:$0xff]
        %v316 = vld [vmem:[%s262 + $0x18] sm:$0xff]
        %v317 = vld [vmem:[%s262 + $0x20] sm:$0xff]
        %v318 = vld [vmem:[%s262 + $0x28] sm:$0xff]
        %v319 = vld [vmem:[%s262 + $0x30] sm:$0xff]
        %v320 = vld [vmem:[%s262 + $0x38] sm:$0xff]
        %v321 = vld [vmem:[#allocation4] sm:$0xff]
        %v322 = vld [vmem:[#allocation4 + $0x8] sm:$0xff]
        %v323 = vld [vmem:[#allocation4 + $0x10] sm:$0xff]
        %v324 = vld [vmem:[#allocation4 + $0x18] sm:$0xff]
        %v325 = vld [vmem:[#allocation4 + $0x20] sm:$0xff]
        %v326 = vld [vmem:[#allocation4 + $0x28] sm:$0xff]
        %v327 = vld [vmem:[#allocation4 + $0x30] sm:$0xff]
        %v328 = vld [vmem:[#allocation4 + $0x38] sm:$0xff]
        %v329 = vld [vmem:[#allocation4 + $0x40] sm:$0xff]
        %v330 = vld [vmem:[#allocation4 + $0x48] sm:$0xff]
        %v331 = vld [vmem:[#allocation4 + $0x50] sm:$0xff]
        %v332 = vld [vmem:[#allocation4 + $0x58] sm:$0xff]
        %v333 = vld [vmem:[#allocation4 + $0x60] sm:$0xff]
        %v334 = vld [vmem:[#allocation4 + $0x68] sm:$0xff]
        %v335 = vld [vmem:[#allocation4 + $0x70] sm:$0xff]
        %v336 = vld [vmem:[#allocation4 + $0x78] sm:$0xff]
        %v337 = vld [vmem:[#allocation4 + $0x80] sm:$0xff]
        %v338 = vld [vmem:[#allocation4 + $0x88] sm:$0xff]
        %v339 = vld [vmem:[#allocation4 + $0x90] sm:$0xff]
        %v340 = vld [vmem:[#allocation4 + $0x98] sm:$0xff]
        %v341 = vld [vmem:[#allocation4 + $0xa0] sm:$0xff]
        %v342 = vld [vmem:[#allocation4 + $0xa8] sm:$0xff]
        %v343 = vld [vmem:[#allocation4 + $0xb0] sm:$0xff]
        %v344 = vld [vmem:[#allocation4 + $0xb8] sm:$0xff]
        %v345 = vld [vmem:[#allocation4 + $0xc0] sm:$0xff]
        %v346 = vld [vmem:[#allocation4 + $0xc8] sm:$0xff]
        %v347 = vld [vmem:[#allocation4 + $0xd0] sm:$0xff]
        %v348 = vld [vmem:[#allocation4 + $0xd8] sm:$0xff]
        %v349 = vld [vmem:[#allocation4 + $0xe0] sm:$0xff]
        %v350 = vld [vmem:[#allocation4 + $0xe8] sm:$0xff]
        %v351 = vld [vmem:[#allocation4 + $0xf0] sm:$0xff]
        %v352 = vld [vmem:[#allocation4 + $0xf8] sm:$0xff]
        %v353 = vld [vmem:[#allocation4 + $0x100] sm:$0xff]
        %v354 = vld [vmem:[#allocation4 + $0x108] sm:$0xff]
        %v355 = vld [vmem:[#allocation4 + $0x110] sm:$0xff]
        %v356 = vld [vmem:[#allocation4 + $0x118] sm:$0xff]
        %v357 = vld [vmem:[#allocation4 + $0x120] sm:$0xff]
        %v358 = vld [vmem:[#allocation4 + $0x128] sm:$0xff]
        %v359 = vld [vmem:[#allocation4 + $0x130] sm:$0xff]
        %v360 = vld [vmem:[#allocation4 + $0x138] sm:$0xff]
        %v361 = vld [vmem:[#allocation4 + $0x140] sm:$0xff]
        %v362 = vld [vmem:[#allocation4 + $0x148] sm:$0xff]
        %v363 = vld [vmem:[#allocation4 + $0x150] sm:$0xff]
        %v364 = vld [vmem:[#allocation4 + $0x158] sm:$0xff]
        %v365 = vld [vmem:[#allocation4 + $0x160] sm:$0xff]
        %v366 = vld [vmem:[#allocation4 + $0x168] sm:$0xff]
        %v367 = vld [vmem:[#allocation4 + $0x170] sm:$0xff]
        %v368 = vld [vmem:[#allocation4 + $0x178] sm:$0xff]
        %v369 = vld [vmem:[#allocation4 + $0x180] sm:$0xff]
        %v370 = vld [vmem:[#allocation4 + $0x188] sm:$0xff]
        %v371 = vld [vmem:[#allocation4 + $0x190] sm:$0xff]
        %v372 = vld [vmem:[#allocation4 + $0x198] sm:$0xff]
        %v373 = vld [vmem:[#allocation4 + $0x1a0] sm:$0xff]
        %v374 = vld [vmem:[#allocation4 + $0x1a8] sm:$0xff]
        %v375 = vld [vmem:[#allocation4 + $0x1b0] sm:$0xff]
        %v376 = vld [vmem:[#allocation4 + $0x1b8] sm:$0xff]
        %v377 = vld [vmem:[#allocation4 + $0x1c0] sm:$0xff]
        %v378 = vld [vmem:[#allocation4 + $0x1c8] sm:$0xff]
        %v379 = vld [vmem:[#allocation4 + $0x1d0] sm:$0xff]
        %v380 = vld [vmem:[#allocation4 + $0x1d8] sm:$0xff]
        %v381 = vld [vmem:[#allocation4 + $0x1e0] sm:$0xff]
        %v382 = vld [vmem:[#allocation4 + $0x1e8] sm:$0xff]
        %v383 = vld [vmem:[#allocation4 + $0x1f0] sm:$0xff]
        %v384 = vld [vmem:[#allocation4 + $0x1f8] sm:$0xff]
        %v385 = vld [vmem:[#allocation4 + $0x200] sm:$0xff]
        %v386 = vld [vmem:[#allocation4 + $0x208] sm:$0xff]
        %v387 = vld [vmem:[#allocation4 + $0x210] sm:$0xff]
        %v388 = vld [vmem:[#allocation4 + $0x218] sm:$0xff]
        %v389 = vld [vmem:[#allocation4 + $0x220] sm:$0xff]
        %v390 = vld [vmem:[#allocation4 + $0x228] sm:$0xff]
        %v391 = vld [vmem:[#allocation4 + $0x230] sm:$0xff]
        %v392 = vld [vmem:[#allocation4 + $0x238] sm:$0xff]
        %v393 = vld [vmem:[#allocation4 + $0x240] sm:$0xff]
        %v394 = vld [vmem:[#allocation4 + $0x248] sm:$0xff]
        %v395 = vld [vmem:[#allocation4 + $0x250] sm:$0xff]
        %v396 = vld [vmem:[#allocation4 + $0x258] sm:$0xff]
        %v397 = vld [vmem:[#allocation4 + $0x260] sm:$0xff]
        %v398 = vld [vmem:[#allocation4 + $0x268] sm:$0xff]
        %v399 = vld [vmem:[#allocation4 + $0x270] sm:$0xff]
        %v400 = vld [vmem:[#allocation4 + $0x278] sm:$0xff]
        %v401 = vld [vmem:[#allocation4 + $0x280] sm:$0xff]
        %v402 = vld [vmem:[#allocation4 + $0x288] sm:$0xff]
        %v403 = vld [vmem:[#allocation4 + $0x290] sm:$0xff]
        %v404 = vld [vmem:[#allocation4 + $0x298] sm:$0xff]
        %v405 = vld [vmem:[#allocation4 + $0x2a0] sm:$0xff]
        %v406 = vld [vmem:[#allocation4 + $0x2a8] sm:$0xff]
        %v407 = vld [vmem:[#allocation4 + $0x2b0] sm:$0xff]
        %v408 = vld [vmem:[#allocation4 + $0x2b8] sm:$0xff]
        %v409 = vld [vmem:[#allocation4 + $0x2c0] sm:$0xff]
        %v410 = vld [vmem:[#allocation4 + $0x2c8] sm:$0xff]
        %v411 = vld [vmem:[#allocation4 + $0x2d0] sm:$0xff]
        %v412 = vld [vmem:[#allocation4 + $0x2d8] sm:$0xff]
        %v413 = vld [vmem:[#allocation4 + $0x2e0] sm:$0xff]
        %v414 = vld [vmem:[#allocation4 + $0x2e8] sm:$0xff]
        %v415 = vld [vmem:[#allocation4 + $0x2f0] sm:$0xff]
        %v416 = vld [vmem:[#allocation4 + $0x2f8] sm:$0xff]
        %v417 = vld [vmem:[#allocation4 + $0x300] sm:$0xff]
        %v418 = vld [vmem:[#allocation4 + $0x308] sm:$0xff]
        %v419 = vld [vmem:[#allocation4 + $0x310] sm:$0xff]
        %v420 = vld [vmem:[#allocation4 + $0x318] sm:$0xff]
        %v421 = vld [vmem:[#allocation4 + $0x320] sm:$0xff]
        %v422 = vld [vmem:[#allocation4 + $0x328] sm:$0xff]
        %v423 = vld [vmem:[#allocation4 + $0x330] sm:$0xff]
        %v424 = vld [vmem:[#allocation4 + $0x338] sm:$0xff]
        %v425 = vld [vmem:[#allocation4 + $0x340] sm:$0xff]
        %v426 = vld [vmem:[#allocation4 + $0x348] sm:$0xff]
        %v427 = vld [vmem:[#allocation4 + $0x350] sm:$0xff]
        %v428 = vld [vmem:[#allocation4 + $0x358] sm:$0xff]
        %v429 = vld [vmem:[#allocation4 + $0x360] sm:$0xff]
        %v430 = vld [vmem:[#allocation4 + $0x368] sm:$0xff]
        %v431 = vld [vmem:[#allocation4 + $0x370] sm:$0xff]
        %v432 = vld [vmem:[#allocation4 + $0x378] sm:$0xff]
        %v433 = vld [vmem:[#allocation4 + $0x380] sm:$0xff]
        %v434 = vld [vmem:[#allocation4 + $0x388] sm:$0xff]
        %v435 = vld [vmem:[#allocation4 + $0x390] sm:$0xff]
        %v436 = vld [vmem:[#allocation4 + $0x398] sm:$0xff]
        %v437 = vld [vmem:[#allocation4 + $0x3a0] sm:$0xff]
        %v438 = vld [vmem:[#allocation4 + $0x3a8] sm:$0xff]
        %v439 = vld [vmem:[#allocation4 + $0x3b0] sm:$0xff]
        %v440 = vld [vmem:[#allocation4 + $0x3b8] sm:$0xff]
        %v441 = vld [vmem:[#allocation4 + $0x3c0] sm:$0xff]
        %v442 = vld [vmem:[#allocation4 + $0x3c8] sm:$0xff]
        %v443 = vld [vmem:[#allocation4 + $0x3d0] sm:$0xff]
        %v444 = vld [vmem:[#allocation4 + $0x3d8] sm:$0xff]
        %v445 = vld [vmem:[#allocation4 + $0x3e0] sm:$0xff]
        %v446 = vld [vmem:[#allocation4 + $0x3e8] sm:$0xff]
        %v447 = vld [vmem:[#allocation4 + $0x3f0] sm:$0xff]
        %v448 = vld [vmem:[#allocation4 + $0x3f8] sm:$0xff]
        %v449 = vld [vmem:[#allocation4 + $0x400] sm:$0xff]
        %v450 = vld [vmem:[#allocation4 + $0x408] sm:$0xff]
        %v451 = vld [vmem:[#allocation4 + $0x410] sm:$0xff]
        %v452 = vld [vmem:[#allocation4 + $0x418] sm:$0xff]
        %v453 = vld [vmem:[#allocation4 + $0x420] sm:$0xff]
        %v454 = vld [vmem:[#allocation4 + $0x428] sm:$0xff]
        %v455 = vld [vmem:[#allocation4 + $0x430] sm:$0xff]
        %v456 = vld [vmem:[#allocation4 + $0x438] sm:$0xff]
        %v457 = vld [vmem:[#allocation4 + $0x440] sm:$0xff]
        %v458 = vld [vmem:[#allocation4 + $0x448] sm:$0xff]
        %v459 = vld [vmem:[#allocation4 + $0x450] sm:$0xff]
        %v460 = vld [vmem:[#allocation4 + $0x458] sm:$0xff]
        %v461 = vld [vmem:[#allocation4 + $0x460] sm:$0xff]
        %v462 = vld [vmem:[#allocation4 + $0x468] sm:$0xff]
        %v463 = vld [vmem:[#allocation4 + $0x470] sm:$0xff]
        %v464 = vld [vmem:[#allocation4 + $0x478] sm:$0xff]
        %v465 = vld [vmem:[#allocation4 + $0x480] sm:$0xff]
        %v466 = vld [vmem:[#allocation4 + $0x488] sm:$0xff]
        %v467 = vld [vmem:[#allocation4 + $0x490] sm:$0xff]
        %v468 = vld [vmem:[#allocation4 + $0x498] sm:$0xff]
        %v469 = vld [vmem:[#allocation4 + $0x4a0] sm:$0xff]
        %v470 = vld [vmem:[#allocation4 + $0x4a8] sm:$0xff]
        %v471 = vld [vmem:[#allocation4 + $0x4b0] sm:$0xff]
        %v472 = vld [vmem:[#allocation4 + $0x4b8] sm:$0xff]
        %v473 = vld [vmem:[#allocation4 + $0x4c0] sm:$0xff]
        %v474 = vld [vmem:[#allocation4 + $0x4c8] sm:$0xff]
        %v475 = vld [vmem:[#allocation4 + $0x4d0] sm:$0xff]
        %v476 = vld [vmem:[#allocation4 + $0x4d8] sm:$0xff]
        %v477 = vld [vmem:[#allocation4 + $0x4e0] sm:$0xff]
        %v478 = vld [vmem:[#allocation4 + $0x4e8] sm:$0xff]
        %v479 = vld [vmem:[#allocation4 + $0x4f0] sm:$0xff]
        %v480 = vld [vmem:[#allocation4 + $0x4f8] sm:$0xff]
        %v481 = vld [vmem:[#allocation4 + $0x500] sm:$0xff]
        %v482 = vld [vmem:[#allocation4 + $0x508] sm:$0xff]
        %v483 = vld [vmem:[#allocation4 + $0x510] sm:$0xff]
        %v484 = vld [vmem:[#allocation4 + $0x518] sm:$0xff]
        %v485 = vld [vmem:[#allocation4 + $0x520] sm:$0xff]
        %v486 = vld [vmem:[#allocation4 + $0x528] sm:$0xff]
        %v487 = vld [vmem:[#allocation4 + $0x530] sm:$0xff]
        %v488 = vld [vmem:[#allocation4 + $0x538] sm:$0xff]
        %v489 = vld [vmem:[#allocation4 + $0x540] sm:$0xff]
        %v490 = vld [vmem:[#allocation4 + $0x548] sm:$0xff]
        %v491 = vld [vmem:[#allocation4 + $0x550] sm:$0xff]
        %v492 = vld [vmem:[#allocation4 + $0x558] sm:$0xff]
        %v493 = vld [vmem:[#allocation4 + $0x560] sm:$0xff]
        %v494 = vld [vmem:[#allocation4 + $0x568] sm:$0xff]
        %v495 = vld [vmem:[#allocation4 + $0x570] sm:$0xff]
        %v496 = vld [vmem:[#allocation4 + $0x578] sm:$0xff]
        %v497 = vld [vmem:[#allocation4 + $0x580] sm:$0xff]
        %v498 = vld [vmem:[#allocation4 + $0x588] sm:$0xff]
        %v499 = vld [vmem:[#allocation4 + $0x590] sm:$0xff]
        %v500 = vld [vmem:[#allocation4 + $0x598] sm:$0xff]
        %v501 = vld [vmem:[#allocation4 + $0x5a0] sm:$0xff]
        %v502 = vld [vmem:[#allocation4 + $0x5a8] sm:$0xff]
        %v503 = vld [vmem:[#allocation4 + $0x5b0] sm:$0xff]
        %v504 = vld [vmem:[#allocation4 + $0x5b8] sm:$0xff]
        %v505 = vld [vmem:[#allocation4 + $0x5c0] sm:$0xff]
        %v506 = vld [vmem:[#allocation4 + $0x5c8] sm:$0xff]
        %v507 = vld [vmem:[#allocation4 + $0x5d0] sm:$0xff]
        %v508 = vld [vmem:[#allocation4 + $0x5d8] sm:$0xff]
        %v509 = vld [vmem:[#allocation4 + $0x5e0] sm:$0xff]
        %v510 = vld [vmem:[#allocation4 + $0x5e8] sm:$0xff]
        %v511 = vld [vmem:[#allocation4 + $0x5f0] sm:$0xff]
        %v512 = vld [vmem:[#allocation4 + $0x5f8] sm:$0xff]
        %v513 = vld [vmem:[#allocation4 + $0x600] sm:$0xff]
        %v514 = vld [vmem:[#allocation4 + $0x608] sm:$0xff]
        %v515 = vld [vmem:[#allocation4 + $0x610] sm:$0xff]
        %v516 = vld [vmem:[#allocation4 + $0x618] sm:$0xff]
        %v517 = vld [vmem:[#allocation4 + $0x620] sm:$0xff]
        %v518 = vld [vmem:[#allocation4 + $0x628] sm:$0xff]
        %v519 = vld [vmem:[#allocation4 + $0x630] sm:$0xff]
        %v520 = vld [vmem:[#allocation4 + $0x638] sm:$0xff]
        %v521 = vld [vmem:[#allocation4 + $0x640] sm:$0xff]
        %v522 = vld [vmem:[#allocation4 + $0x648] sm:$0xff]
        %v523 = vld [vmem:[#allocation4 + $0x650] sm:$0xff]
        %v524 = vld [vmem:[#allocation4 + $0x658] sm:$0xff]
        %v525 = vld [vmem:[#allocation4 + $0x660] sm:$0xff]
        %v526 = vld [vmem:[#allocation4 + $0x668] sm:$0xff]
        %v527 = vld [vmem:[#allocation4 + $0x670] sm:$0xff]
        %v528 = vld [vmem:[#allocation4 + $0x678] sm:$0xff]
        %v529 = vld [vmem:[#allocation4 + $0x680] sm:$0xff]
        %v530 = vld [vmem:[#allocation4 + $0x688] sm:$0xff]
        %v531 = vld [vmem:[#allocation4 + $0x690] sm:$0xff]
        %v532 = vld [vmem:[#allocation4 + $0x698] sm:$0xff]
        %v533 = vld [vmem:[#allocation4 + $0x6a0] sm:$0xff]
        %v534 = vld [vmem:[#allocation4 + $0x6a8] sm:$0xff]
        %v535 = vld [vmem:[#allocation4 + $0x6b0] sm:$0xff]
        %v536 = vld [vmem:[#allocation4 + $0x6b8] sm:$0xff]
        %v537 = vld [vmem:[#allocation4 + $0x6c0] sm:$0xff]
        %v538 = vld [vmem:[#allocation4 + $0x6c8] sm:$0xff]
        %v539 = vld [vmem:[#allocation4 + $0x6d0] sm:$0xff]
        %v540 = vld [vmem:[#allocation4 + $0x6d8] sm:$0xff]
        %v541 = vld [vmem:[#allocation4 + $0x6e0] sm:$0xff]
        %v542 = vld [vmem:[#allocation4 + $0x6e8] sm:$0xff]
        %v543 = vld [vmem:[#allocation4 + $0x6f0] sm:$0xff]
        %v544 = vld [vmem:[#allocation4 + $0x6f8] sm:$0xff]
        %v545 = vld [vmem:[#allocation4 + $0x700] sm:$0xff]
        %v546 = vld [vmem:[#allocation4 + $0x708] sm:$0xff]
        %v547 = vld [vmem:[#allocation4 + $0x710] sm:$0xff]
        %v548 = vld [vmem:[#allocation4 + $0x718] sm:$0xff]
        %v549 = vld [vmem:[#allocation4 + $0x720] sm:$0xff]
        %v550 = vld [vmem:[#allocation4 + $0x728] sm:$0xff]
        %v551 = vld [vmem:[#allocation4 + $0x730] sm:$0xff]
        %v552 = vld [vmem:[#allocation4 + $0x738] sm:$0xff]
        %v553 = vld [vmem:[#allocation4 + $0x740] sm:$0xff]
        %v554 = vld [vmem:[#allocation4 + $0x748] sm:$0xff]
        %v555 = vld [vmem:[#allocation4 + $0x750] sm:$0xff]
        %v556 = vld [vmem:[#allocation4 + $0x758] sm:$0xff]
        %v557 = vld [vmem:[#allocation4 + $0x760] sm:$0xff]
        %v558 = vld [vmem:[#allocation4 + $0x768] sm:$0xff]
        %v559 = vld [vmem:[#allocation4 + $0x770] sm:$0xff]
        %v560 = vld [vmem:[#allocation4 + $0x778] sm:$0xff]
        %v561 = vld [vmem:[#allocation4 + $0x780] sm:$0xff]
        %v562 = vld [vmem:[#allocation4 + $0x788] sm:$0xff]
        %v563 = vld [vmem:[#allocation4 + $0x790] sm:$0xff]
        %v564 = vld [vmem:[#allocation4 + $0x798] sm:$0xff]
        %v565 = vld [vmem:[#allocation4 + $0x7a0] sm:$0xff]
        %v566 = vld [vmem:[#allocation4 + $0x7a8] sm:$0xff]
        %v567 = vld [vmem:[#allocation4 + $0x7b0] sm:$0xff]
        %v568 = vld [vmem:[#allocation4 + $0x7b8] sm:$0xff]
        %v569 = vld [vmem:[#allocation4 + $0x7c0] sm:$0xff]
        %v570 = vld [vmem:[#allocation4 + $0x7c8] sm:$0xff]
        %v571 = vld [vmem:[#allocation4 + $0x7d0] sm:$0xff]
        %v572 = vld [vmem:[#allocation4 + $0x7d8] sm:$0xff]
        %v573 = vld [vmem:[#allocation4 + $0x7e0] sm:$0xff]
        %v574 = vld [vmem:[#allocation4 + $0x7e8] sm:$0xff]
        %v575 = vld [vmem:[#allocation4 + $0x7f0] sm:$0xff]
        %v576 = vld [vmem:[#allocation4 + $0x7f8] sm:$0xff]
        %v577 = vld [vmem:[#allocation4 + $0x800] sm:$0xff]
        %v578 = vld [vmem:[#allocation4 + $0x808] sm:$0xff]
        %v579 = vld [vmem:[#allocation4 + $0x810] sm:$0xff]
        %v580 = vld [vmem:[#allocation4 + $0x818] sm:$0xff]
        %v581 = vld [vmem:[#allocation4 + $0x820] sm:$0xff]
        %v582 = vld [vmem:[#allocation4 + $0x828] sm:$0xff]
        %v583 = vld [vmem:[#allocation4 + $0x830] sm:$0xff]
        %v584 = vld [vmem:[#allocation4 + $0x838] sm:$0xff]
        %v585 = vld [vmem:[#allocation4 + $0x840] sm:$0xff]
        %v586 = vld [vmem:[#allocation4 + $0x848] sm:$0xff]
        %v587 = vld [vmem:[#allocation4 + $0x850] sm:$0xff]
        %v588 = vld [vmem:[#allocation4 + $0x858] sm:$0xff]
        %v589 = vld [vmem:[#allocation4 + $0x860] sm:$0xff]
        %v590 = vld [vmem:[#allocation4 + $0x868] sm:$0xff]
        %v591 = vld [vmem:[#allocation4 + $0x870] sm:$0xff]
        %v592 = vld [vmem:[#allocation4 + $0x878] sm:$0xff]
        %v593 = vld [vmem:[#allocation4 + $0x880] sm:$0xff]
        %v594 = vld [vmem:[#allocation4 + $0x888] sm:$0xff]
        %v595 = vld [vmem:[#allocation4 + $0x890] sm:$0xff]
        %v596 = vld [vmem:[#allocation4 + $0x898] sm:$0xff]
        %v597 = vld [vmem:[#allocation4 + $0x8a0] sm:$0xff]
        %v598 = vld [vmem:[#allocation4 + $0x8a8] sm:$0xff]
        %v599 = vld [vmem:[#allocation4 + $0x8b0] sm:$0xff]
        %v600 = vld [vmem:[#allocation4 + $0x8b8] sm:$0xff]
        %v601 = vld [vmem:[#allocation4 + $0x8c0] sm:$0xff]
        %v602 = vld [vmem:[#allocation4 + $0x8c8] sm:$0xff]
        %v603 = vld [vmem:[#allocation4 + $0x8d0] sm:$0xff]
        %v604 = vld [vmem:[#allocation4 + $0x8d8] sm:$0xff]
        %v605 = vld [vmem:[#allocation4 + $0x8e0] sm:$0xff]
        %v606 = vld [vmem:[#allocation4 + $0x8e8] sm:$0xff]
        %v607 = vld [vmem:[#allocation4 + $0x8f0] sm:$0xff]
        %v608 = vld [vmem:[#allocation4 + $0x8f8] sm:$0xff]
        %v609 = vld [vmem:[#allocation4 + $0x900] sm:$0xff]
        %v610 = vld [vmem:[#allocation4 + $0x908] sm:$0xff]
        %v611 = vld [vmem:[#allocation4 + $0x910] sm:$0xff]
        %v612 = vld [vmem:[#allocation4 + $0x918] sm:$0xff]
        %v613 = vld [vmem:[#allocation4 + $0x920] sm:$0xff]
        %v614 = vld [vmem:[#allocation4 + $0x928] sm:$0xff]
        %v615 = vld [vmem:[#allocation4 + $0x930] sm:$0xff]
        %v616 = vld [vmem:[#allocation4 + $0x938] sm:$0xff]
        %v617 = vld [vmem:[#allocation4 + $0x940] sm:$0xff]
        %v618 = vld [vmem:[#allocation4 + $0x948] sm:$0xff]
        %v619 = vld [vmem:[#allocation4 + $0x950] sm:$0xff]
        %v620 = vld [vmem:[#allocation4 + $0x958] sm:$0xff]
        %v621 = vld [vmem:[#allocation4 + $0x960] sm:$0xff]
        %v622 = vld [vmem:[#allocation4 + $0x968] sm:$0xff]
        %v623 = vld [vmem:[#allocation4 + $0x970] sm:$0xff]
        %v624 = vld [vmem:[#allocation4 + $0x978] sm:$0xff]
        %v625 = vld [vmem:[#allocation4 + $0x980] sm:$0xff]
        %v626 = vld [vmem:[#allocation4 + $0x988] sm:$0xff]
        %v627 = vld [vmem:[#allocation4 + $0x990] sm:$0xff]
        %v628 = vld [vmem:[#allocation4 + $0x998] sm:$0xff]
        %v629 = vld [vmem:[#allocation4 + $0x9a0] sm:$0xff]
        %v630 = vld [vmem:[#allocation4 + $0x9a8] sm:$0xff]
        %v631 = vld [vmem:[#allocation4 + $0x9b0] sm:$0xff]
        %v632 = vld [vmem:[#allocation4 + $0x9b8] sm:$0xff]
        %v633 = vld [vmem:[#allocation4 + $0x9c0] sm:$0xff]
        %v634 = vld [vmem:[#allocation4 + $0x9c8] sm:$0xff]
        %v635 = vld [vmem:[#allocation4 + $0x9d0] sm:$0xff]
        %v636 = vld [vmem:[#allocation4 + $0x9d8] sm:$0xff]
        %v637 = vld [vmem:[#allocation4 + $0x9e0] sm:$0xff]
        %v638 = vld [vmem:[#allocation4 + $0x9e8] sm:$0xff]
        %v639 = vld [vmem:[#allocation4 + $0x9f0] sm:$0xff]
        %v640 = vld [vmem:[#allocation4 + $0x9f8] sm:$0xff]
        %v641 = vld [vmem:[#allocation4 + $0xa00] sm:$0xff]
        %v642 = vld [vmem:[#allocation4 + $0xa08] sm:$0xff]
        %v643 = vld [vmem:[#allocation4 + $0xa10] sm:$0xff]
        %v644 = vld [vmem:[#allocation4 + $0xa18] sm:$0xff]
        %v645 = vld [vmem:[#allocation4 + $0xa20] sm:$0xff]
        %v646 = vld [vmem:[#allocation4 + $0xa28] sm:$0xff]
        %v647 = vld [vmem:[#allocation4 + $0xa30] sm:$0xff]
        %v648 = vld [vmem:[#allocation4 + $0xa38] sm:$0xff]
        %v649 = vld [vmem:[#allocation4 + $0xa40] sm:$0xff]
        %v650 = vld [vmem:[#allocation4 + $0xa48] sm:$0xff]
        %v651 = vld [vmem:[#allocation4 + $0xa50] sm:$0xff]
        %v652 = vld [vmem:[#allocation4 + $0xa58] sm:$0xff]
        %v653 = vld [vmem:[#allocation4 + $0xa60] sm:$0xff]
        %v654 = vld [vmem:[#allocation4 + $0xa68] sm:$0xff]
        %v655 = vld [vmem:[#allocation4 + $0xa70] sm:$0xff]
        %v656 = vld [vmem:[#allocation4 + $0xa78] sm:$0xff]
        %v657 = vld [vmem:[#allocation4 + $0xa80] sm:$0xff]
        %v658 = vld [vmem:[#allocation4 + $0xa88] sm:$0xff]
        %v659 = vld [vmem:[#allocation4 + $0xa90] sm:$0xff]
        %v660 = vld [vmem:[#allocation4 + $0xa98] sm:$0xff]
        %v661 = vld [vmem:[#allocation4 + $0xaa0] sm:$0xff]
        %v662 = vld [vmem:[#allocation4 + $0xaa8] sm:$0xff]
        %v663 = vld [vmem:[#allocation4 + $0xab0] sm:$0xff]
        %v664 = vld [vmem:[#allocation4 + $0xab8] sm:$0xff]
        %v665 = vld [vmem:[#allocation4 + $0xac0] sm:$0xff]
        %v666 = vld [vmem:[#allocation4 + $0xac8] sm:$0xff]
        %v667 = vld [vmem:[#allocation4 + $0xad0] sm:$0xff]
        %v668 = vld [vmem:[#allocation4 + $0xad8] sm:$0xff]
        %v669 = vld [vmem:[#allocation4 + $0xae0] sm:$0xff]
        %v670 = vld [vmem:[#allocation4 + $0xae8] sm:$0xff]
        %v671 = vld [vmem:[#allocation4 + $0xaf0] sm:$0xff]
        %v672 = vld [vmem:[#allocation4 + $0xaf8] sm:$0xff]
        %v673 = vld [vmem:[#allocation4 + $0xb00] sm:$0xff]
        %v674 = vld [vmem:[#allocation4 + $0xb08] sm:$0xff]
        %v675 = vld [vmem:[#allocation4 + $0xb10] sm:$0xff]
        %v676 = vld [vmem:[#allocation4 + $0xb18] sm:$0xff]
        %v677 = vld [vmem:[#allocation4 + $0xb20] sm:$0xff]
        %v678 = vld [vmem:[#allocation4 + $0xb28] sm:$0xff]
        %v679 = vld [vmem:[#allocation4 + $0xb30] sm:$0xff]
        %v680 = vld [vmem:[#allocation4 + $0xb38] sm:$0xff]
        %v681 = vld [vmem:[#allocation4 + $0xb40] sm:$0xff]
        %v682 = vld [vmem:[#allocation4 + $0xb48] sm:$0xff]
        %v683 = vld [vmem:[#allocation4 + $0xb50] sm:$0xff]
        %v684 = vld [vmem:[#allocation4 + $0xb58] sm:$0xff]
        %v685 = vld [vmem:[#allocation4 + $0xb60] sm:$0xff]
        %v686 = vld [vmem:[#allocation4 + $0xb68] sm:$0xff]
        %v687 = vld [vmem:[#allocation4 + $0xb70] sm:$0xff]
        %v688 = vld [vmem:[#allocation4 + $0xb78] sm:$0xff]
        %v689 = vld [vmem:[#allocation4 + $0xb80] sm:$0xff]
        %v690 = vld [vmem:[#allocation4 + $0xb88] sm:$0xff]
        %v691 = vld [vmem:[#allocation4 + $0xb90] sm:$0xff]
        %v692 = vld [vmem:[#allocation4 + $0xb98] sm:$0xff]
        %v693 = vld [vmem:[#allocation4 + $0xba0] sm:$0xff]
        %v694 = vld [vmem:[#allocation4 + $0xba8] sm:$0xff]
        %v695 = vld [vmem:[#allocation4 + $0xbb0] sm:$0xff]
        %v696 = vld [vmem:[#allocation4 + $0xbb8] sm:$0xff]
        %v697 = vld [vmem:[#allocation4 + $0xbc0] sm:$0xff]
        %v698 = vld [vmem:[#allocation4 + $0xbc8] sm:$0xff]
        %v699 = vld [vmem:[#allocation4 + $0xbd0] sm:$0xff]
        %v700 = vld [vmem:[#allocation4 + $0xbd8] sm:$0xff]
        %v701 = vld [vmem:[#allocation4 + $0xbe0] sm:$0xff]
        %v702 = vld [vmem:[#allocation4 + $0xbe8] sm:$0xff]
        %v703 = vld [vmem:[#allocation4 + $0xbf0] sm:$0xff]
        %v704 = vld [vmem:[#allocation4 + $0xbf8] sm:$0xff]
        %v705 = vld [vmem:[#allocation4 + $0xc00] sm:$0xff]
        %v706 = vld [vmem:[#allocation4 + $0xc08] sm:$0xff]
        %v707 = vld [vmem:[#allocation4 + $0xc10] sm:$0xff]
        %v708 = vld [vmem:[#allocation4 + $0xc18] sm:$0xff]
        %v709 = vld [vmem:[#allocation4 + $0xc20] sm:$0xff]
        %v710 = vld [vmem:[#allocation4 + $0xc28] sm:$0xff]
        %v711 = vld [vmem:[#allocation4 + $0xc30] sm:$0xff]
        %v712 = vld [vmem:[#allocation4 + $0xc38] sm:$0xff]
        %v713 = vld [vmem:[#allocation4 + $0xc40] sm:$0xff]
        %v714 = vld [vmem:[#allocation4 + $0xc48] sm:$0xff]
        %v715 = vld [vmem:[#allocation4 + $0xc50] sm:$0xff]
        %v716 = vld [vmem:[#allocation4 + $0xc58] sm:$0xff]
        %v717 = vld [vmem:[#allocation4 + $0xc60] sm:$0xff]
        %v718 = vld [vmem:[#allocation4 + $0xc68] sm:$0xff]
        %v719 = vld [vmem:[#allocation4 + $0xc70] sm:$0xff]
        %v720 = vld [vmem:[#allocation4 + $0xc78] sm:$0xff]
        %v721 = vld [vmem:[#allocation4 + $0xc80] sm:$0xff]
        %v722 = vld [vmem:[#allocation4 + $0xc88] sm:$0xff]
        %v723 = vld [vmem:[#allocation4 + $0xc90] sm:$0xff]
        %v724 = vld [vmem:[#allocation4 + $0xc98] sm:$0xff]
        %v725 = vld [vmem:[#allocation4 + $0xca0] sm:$0xff]
        %v726 = vld [vmem:[#allocation4 + $0xca8] sm:$0xff]
        %v727 = vld [vmem:[#allocation4 + $0xcb0] sm:$0xff]
        %v728 = vld [vmem:[#allocation4 + $0xcb8] sm:$0xff]
        %v729 = vld [vmem:[#allocation4 + $0xcc0] sm:$0xff]
        %v730 = vld [vmem:[#allocation4 + $0xcc8] sm:$0xff]
        %v731 = vld [vmem:[#allocation4 + $0xcd0] sm:$0xff]
        %v732 = vld [vmem:[#allocation4 + $0xcd8] sm:$0xff]
        %v733 = vld [vmem:[#allocation4 + $0xce0] sm:$0xff]
        %v734 = vld [vmem:[#allocation4 + $0xce8] sm:$0xff]
        %v735 = vld [vmem:[#allocation4 + $0xcf0] sm:$0xff]
        %v736 = vld [vmem:[#allocation4 + $0xcf8] sm:$0xff]
        %v737 = vld [vmem:[#allocation4 + $0xd00] sm:$0xff]
        %v738 = vld [vmem:[#allocation4 + $0xd08] sm:$0xff]
        %v739 = vld [vmem:[#allocation4 + $0xd10] sm:$0xff]
        %v740 = vld [vmem:[#allocation4 + $0xd18] sm:$0xff]
        %v741 = vld [vmem:[#allocation4 + $0xd20] sm:$0xff]
        %v742 = vld [vmem:[#allocation4 + $0xd28] sm:$0xff]
        %v743 = vld [vmem:[#allocation4 + $0xd30] sm:$0xff]
        %v744 = vld [vmem:[#allocation4 + $0xd38] sm:$0xff]
        %v745 = vld [vmem:[#allocation4 + $0xd40] sm:$0xff]
        %v746 = vld [vmem:[#allocation4 + $0xd48] sm:$0xff]
        %v747 = vld [vmem:[#allocation4 + $0xd50] sm:$0xff]
        %v748 = vld [vmem:[#allocation4 + $0xd58] sm:$0xff]
        %v749 = vld [vmem:[#allocation4 + $0xd60] sm:$0xff]
        %v750 = vld [vmem:[#allocation4 + $0xd68] sm:$0xff]
        %v751 = vld [vmem:[#allocation4 + $0xd70] sm:$0xff]
        %v752 = vld [vmem:[#allocation4 + $0xd78] sm:$0xff]
        %v753 = vld [vmem:[#allocation4 + $0xd80] sm:$0xff]
        %v754 = vld [vmem:[#allocation4 + $0xd88] sm:$0xff]
        %v755 = vld [vmem:[#allocation4 + $0xd90] sm:$0xff]
        %v756 = vld [vmem:[#allocation4 + $0xd98] sm:$0xff]
        %v757 = vld [vmem:[#allocation4 + $0xda0] sm:$0xff]
        %v758 = vld [vmem:[#allocation4 + $0xda8] sm:$0xff]
        %v759 = vld [vmem:[#allocation4 + $0xdb0] sm:$0xff]
        %v760 = vld [vmem:[#allocation4 + $0xdb8] sm:$0xff]
        %v761 = vld [vmem:[#allocation4 + $0xdc0] sm:$0xff]
        %v762 = vld [vmem:[#allocation4 + $0xdc8] sm:$0xff]
        %v763 = vld [vmem:[#allocation4 + $0xdd0] sm:$0xff]
        %v764 = vld [vmem:[#allocation4 + $0xdd8] sm:$0xff]
        %v765 = vld [vmem:[#allocation4 + $0xde0] sm:$0xff]
        %v766 = vld [vmem:[#allocation4 + $0xde8] sm:$0xff]
        %v767 = vld [vmem:[#allocation4 + $0xdf0] sm:$0xff]
        %v768 = vld [vmem:[#allocation4 + $0xdf8] sm:$0xff]
        %v769 = vld [vmem:[#allocation4 + $0xe00] sm:$0xff]
        %v770 = vld [vmem:[#allocation4 + $0xe08] sm:$0xff]
        %v771 = vld [vmem:[#allocation4 + $0xe10] sm:$0xff]
        %v772 = vld [vmem:[#allocation4 + $0xe18] sm:$0xff]
        %v773 = vld [vmem:[#allocation4 + $0xe20] sm:$0xff]
        %v774 = vld [vmem:[#allocation4 + $0xe28] sm:$0xff]
        %v775 = vld [vmem:[#allocation4 + $0xe30] sm:$0xff]
        %v776 = vld [vmem:[#allocation4 + $0xe38] sm:$0xff]
        %v777 = vld [vmem:[#allocation4 + $0xe40] sm:$0xff]
        %v778 = vld [vmem:[#allocation4 + $0xe48] sm:$0xff]
        %v779 = vld [vmem:[#allocation4 + $0xe50] sm:$0xff]
        %v780 = vld [vmem:[#allocation4 + $0xe58] sm:$0xff]
        %v781 = vld [vmem:[#allocation4 + $0xe60] sm:$0xff]
        %v782 = vld [vmem:[#allocation4 + $0xe68] sm:$0xff]
        %v783 = vld [vmem:[#allocation4 + $0xe70] sm:$0xff]
        %v784 = vld [vmem:[#allocation4 + $0xe78] sm:$0xff]
        %v785 = vld [vmem:[#allocation4 + $0xe80] sm:$0xff]
        %v786 = vld [vmem:[#allocation4 + $0xe88] sm:$0xff]
        %v787 = vld [vmem:[#allocation4 + $0xe90] sm:$0xff]
        %v788 = vld [vmem:[#allocation4 + $0xe98] sm:$0xff]
        %v789 = vld [vmem:[#allocation4 + $0xea0] sm:$0xff]
        %v790 = vld [vmem:[#allocation4 + $0xea8] sm:$0xff]
        %v791 = vld [vmem:[#allocation4 + $0xeb0] sm:$0xff]
        %v792 = vld [vmem:[#allocation4 + $0xeb8] sm:$0xff]
        %v793 = vld [vmem:[#allocation4 + $0xec0] sm:$0xff]
        %v794 = vld [vmem:[#allocation4 + $0xec8] sm:$0xff]
        %v795 = vld [vmem:[#allocation4 + $0xed0] sm:$0xff]
        %v796 = vld [vmem:[#allocation4 + $0xed8] sm:$0xff]
        %v797 = vld [vmem:[#allocation4 + $0xee0] sm:$0xff]
        %v798 = vld [vmem:[#allocation4 + $0xee8] sm:$0xff]
        %v799 = vld [vmem:[#allocation4 + $0xef0] sm:$0xff]
        %v800 = vld [vmem:[#allocation4 + $0xef8] sm:$0xff]
        %v801 = vld [vmem:[#allocation4 + $0xf00] sm:$0xff]
        %v802 = vld [vmem:[#allocation4 + $0xf08] sm:$0xff]
        %v803 = vld [vmem:[#allocation4 + $0xf10] sm:$0xff]
        %v804 = vld [vmem:[#allocation4 + $0xf18] sm:$0xff]
        %v805 = vld [vmem:[#allocation4 + $0xf20] sm:$0xff]
        %v806 = vld [vmem:[#allocation4 + $0xf28] sm:$0xff]
        %v807 = vld [vmem:[#allocation4 + $0xf30] sm:$0xff]
        %v808 = vld [vmem:[#allocation4 + $0xf38] sm:$0xff]
        %v809 = vld [vmem:[#allocation4 + $0xf40] sm:$0xff]
        %v810 = vld [vmem:[#allocation4 + $0xf48] sm:$0xff]
        %v811 = vld [vmem:[#allocation4 + $0xf50] sm:$0xff]
        %v812 = vld [vmem:[#allocation4 + $0xf58] sm:$0xff]
        %v813 = vld [vmem:[#allocation4 + $0xf60] sm:$0xff]
        %v814 = vld [vmem:[#allocation4 + $0xf68] sm:$0xff]
        %v815 = vld [vmem:[#allocation4 + $0xf70] sm:$0xff]
        %v816 = vld [vmem:[#allocation4 + $0xf78] sm:$0xff]
        %v817 = vld [vmem:[#allocation4 + $0xf80] sm:$0xff]
        %v818 = vld [vmem:[#allocation4 + $0xf88] sm:$0xff]
        %v819 = vld [vmem:[#allocation4 + $0xf90] sm:$0xff]
        %v820 = vld [vmem:[#allocation4 + $0xf98] sm:$0xff]
        %v821 = vld [vmem:[#allocation4 + $0xfa0] sm:$0xff]
        %v822 = vld [vmem:[#allocation4 + $0xfa8] sm:$0xff]
        %v823 = vld [vmem:[#allocation4 + $0xfb0] sm:$0xff]
        %v824 = vld [vmem:[#allocation4 + $0xfb8] sm:$0xff]
        %v825 = vld [vmem:[#allocation4 + $0xfc0] sm:$0xff]
        %v826 = vld [vmem:[#allocation4 + $0xfc8] sm:$0xff]
        %v827 = vld [vmem:[#allocation4 + $0xfd0] sm:$0xff]
        %v828 = vld [vmem:[#allocation4 + $0xfd8] sm:$0xff]
        %v829 = vld [vmem:[#allocation4 + $0xfe0] sm:$0xff]
        %v830 = vld [vmem:[#allocation4 + $0xfe8] sm:$0xff]
        %v831 = vld [vmem:[#allocation4 + $0xff0] sm:$0xff]
        %v832 = vld [vmem:[#allocation4 + $0xff8] sm:$0xff]
        %v841 = vunpack.c.l.b16 %v313
        %v842 = vunpack.c.h.b16 %v313
        %v843 = vunpack.c.l.b16 %v314
        %v844 = vunpack.c.h.b16 %v314
        %v845 = vunpack.c.l.b16 %v315
        %v846 = vunpack.c.h.b16 %v315
        %v847 = vunpack.c.l.b16 %v316
        %v848 = vunpack.c.h.b16 %v316
        %v849 = vunpack.c.l.b16 %v317
        %v850 = vunpack.c.h.b16 %v317
        %v851 = vunpack.c.l.b16 %v318
        %v852 = vunpack.c.h.b16 %v318
        %v853 = vunpack.c.l.b16 %v319
        %v854 = vunpack.c.h.b16 %v319
        %v855 = vunpack.c.l.b16 %v320
        %v856 = vunpack.c.h.b16 %v320
        %v857 = vpack.c.b16 %v849, %v841
        %v858 = vpack.c.b16 %v850, %v842
        %v859 = vpack.c.b16 %v851, %v843
        %v860 = vpack.c.b16 %v852, %v844
        %v861 = vpack.c.b16 %v853, %v845
        %v862 = vpack.c.b16 %v854, %v846
        %v863 = vpack.c.b16 %v855, %v847
        %v864 = vpack.c.b16 %v856, %v848
        %v1385 = vunpack.c.l.b16 %v321
        %v1386 = vunpack.c.h.b16 %v321
        %v1387 = vunpack.c.l.b16 %v322
        %v1388 = vunpack.c.h.b16 %v322
        %v1389 = vunpack.c.l.b16 %v323
        %v1390 = vunpack.c.h.b16 %v323
        %v1391 = vunpack.c.l.b16 %v324
        %v1392 = vunpack.c.h.b16 %v324
        %v1393 = vunpack.c.l.b16 %v325
        %v1394 = vunpack.c.h.b16 %v325
        %v1395 = vunpack.c.l.b16 %v326
        %v1396 = vunpack.c.h.b16 %v326
        %v1397 = vunpack.c.l.b16 %v327
        %v1398 = vunpack.c.h.b16 %v327
        %v1399 = vunpack.c.l.b16 %v328
        %v1400 = vunpack.c.h.b16 %v328
        %v1401 = vunpack.c.l.b16 %v329
        %v1402 = vunpack.c.h.b16 %v329
        %v1403 = vunpack.c.l.b16 %v330
        %v1404 = vunpack.c.h.b16 %v330
        %v1405 = vunpack.c.l.b16 %v331
        %v1406 = vunpack.c.h.b16 %v331
        %v1407 = vunpack.c.l.b16 %v332
        %v1408 = vunpack.c.h.b16 %v332
        %v1409 = vunpack.c.l.b16 %v333
        %v1410 = vunpack.c.h.b16 %v333
        %v1411 = vunpack.c.l.b16 %v334
        %v1412 = vunpack.c.h.b16 %v334
        %v1413 = vunpack.c.l.b16 %v335
        %v1414 = vunpack.c.h.b16 %v335
        %v1415 = vunpack.c.l.b16 %v336
        %v1416 = vunpack.c.h.b16 %v336
        %v1417 = vunpack.c.l.b16 %v337
        %v1418 = vunpack.c.h.b16 %v337
        %v1419 = vunpack.c.l.b16 %v338
        %v1420 = vunpack.c.h.b16 %v338
        %v1421 = vunpack.c.l.b16 %v339
        %v1422 = vunpack.c.h.b16 %v339
        %v1423 = vunpack.c.l.b16 %v340
        %v1424 = vunpack.c.h.b16 %v340
        %v1425 = vunpack.c.l.b16 %v341
        %v1426 = vunpack.c.h.b16 %v341
        %v1427 = vunpack.c.l.b16 %v342
        %v1428 = vunpack.c.h.b16 %v342
        %v1429 = vunpack.c.l.b16 %v343
        %v1430 = vunpack.c.h.b16 %v343
        %v1431 = vunpack.c.l.b16 %v344
        %v1432 = vunpack.c.h.b16 %v344
        %v1433 = vunpack.c.l.b16 %v345
        %v1434 = vunpack.c.h.b16 %v345
        %v1435 = vunpack.c.l.b16 %v346
        %v1436 = vunpack.c.h.b16 %v346
        %v1437 = vunpack.c.l.b16 %v347
        %v1438 = vunpack.c.h.b16 %v347
        %v1439 = vunpack.c.l.b16 %v348
        %v1440 = vunpack.c.h.b16 %v348
        %v1441 = vunpack.c.l.b16 %v349
        %v1442 = vunpack.c.h.b16 %v349
        %v1443 = vunpack.c.l.b16 %v350
        %v1444 = vunpack.c.h.b16 %v350
        %v1445 = vunpack.c.l.b16 %v351
        %v1446 = vunpack.c.h.b16 %v351
        %v1447 = vunpack.c.l.b16 %v352
        %v1448 = vunpack.c.h.b16 %v352
        %v1449 = vunpack.c.l.b16 %v353
        %v1450 = vunpack.c.h.b16 %v353
        %v1451 = vunpack.c.l.b16 %v354
        %v1452 = vunpack.c.h.b16 %v354
        %v1453 = vunpack.c.l.b16 %v355
        %v1454 = vunpack.c.h.b16 %v355
        %v1455 = vunpack.c.l.b16 %v356
        %v1456 = vunpack.c.h.b16 %v356
        %v1457 = vunpack.c.l.b16 %v357
        %v1458 = vunpack.c.h.b16 %v357
        %v1459 = vunpack.c.l.b16 %v358
        %v1460 = vunpack.c.h.b16 %v358
        %v1461 = vunpack.c.l.b16 %v359
        %v1462 = vunpack.c.h.b16 %v359
        %v1463 = vunpack.c.l.b16 %v360
        %v1464 = vunpack.c.h.b16 %v360
        %v1465 = vunpack.c.l.b16 %v361
        %v1466 = vunpack.c.h.b16 %v361
        %v1467 = vunpack.c.l.b16 %v362
        %v1468 = vunpack.c.h.b16 %v362
        %v1469 = vunpack.c.l.b16 %v363
        %v1470 = vunpack.c.h.b16 %v363
        %v1471 = vunpack.c.l.b16 %v364
        %v1472 = vunpack.c.h.b16 %v364
        %v1473 = vunpack.c.l.b16 %v365
        %v1474 = vunpack.c.h.b16 %v365
        %v1475 = vunpack.c.l.b16 %v366
        %v1476 = vunpack.c.h.b16 %v366
        %v1477 = vunpack.c.l.b16 %v367
        %v1478 = vunpack.c.h.b16 %v367
        %v1479 = vunpack.c.l.b16 %v368
        %v1480 = vunpack.c.h.b16 %v368
        %v1481 = vunpack.c.l.b16 %v369
        %v1482 = vunpack.c.h.b16 %v369
        %v1483 = vunpack.c.l.b16 %v370
        %v1484 = vunpack.c.h.b16 %v370
        %v1485 = vunpack.c.l.b16 %v371
        %v1486 = vunpack.c.h.b16 %v371
        %v1487 = vunpack.c.l.b16 %v372
        %v1488 = vunpack.c.h.b16 %v372
        %v1489 = vunpack.c.l.b16 %v373
        %v1490 = vunpack.c.h.b16 %v373
        %v1491 = vunpack.c.l.b16 %v374
        %v1492 = vunpack.c.h.b16 %v374
        %v1493 = vunpack.c.l.b16 %v375
        %v1494 = vunpack.c.h.b16 %v375
        %v1495 = vunpack.c.l.b16 %v376
        %v1496 = vunpack.c.h.b16 %v376
        %v1497 = vunpack.c.l.b16 %v377
        %v1498 = vunpack.c.h.b16 %v377
        %v1499 = vunpack.c.l.b16 %v378
        %v1500 = vunpack.c.h.b16 %v378
        %v1501 = vunpack.c.l.b16 %v379
        %v1502 = vunpack.c.h.b16 %v379
        %v1503 = vunpack.c.l.b16 %v380
        %v1504 = vunpack.c.h.b16 %v380
        %v1505 = vunpack.c.l.b16 %v381
        %v1506 = vunpack.c.h.b16 %v381
        %v1507 = vunpack.c.l.b16 %v382
        %v1508 = vunpack.c.h.b16 %v382
        %v1509 = vunpack.c.l.b16 %v383
        %v1510 = vunpack.c.h.b16 %v383
        %v1511 = vunpack.c.l.b16 %v384
        %v1512 = vunpack.c.h.b16 %v384
        %v1513 = vunpack.c.l.b16 %v385
        %v1514 = vunpack.c.h.b16 %v385
        %v1515 = vunpack.c.l.b16 %v386
        %v1516 = vunpack.c.h.b16 %v386
        %v1517 = vunpack.c.l.b16 %v387
        %v1518 = vunpack.c.h.b16 %v387
        %v1519 = vunpack.c.l.b16 %v388
        %v1520 = vunpack.c.h.b16 %v388
        %v1521 = vunpack.c.l.b16 %v389
        %v1522 = vunpack.c.h.b16 %v389
        %v1523 = vunpack.c.l.b16 %v390
        %v1524 = vunpack.c.h.b16 %v390
        %v1525 = vunpack.c.l.b16 %v391
        %v1526 = vunpack.c.h.b16 %v391
        %v1527 = vunpack.c.l.b16 %v392
        %v1528 = vunpack.c.h.b16 %v392
        %v1529 = vunpack.c.l.b16 %v393
        %v1530 = vunpack.c.h.b16 %v393
        %v1531 = vunpack.c.l.b16 %v394
        %v1532 = vunpack.c.h.b16 %v394
        %v1533 = vunpack.c.l.b16 %v395
        %v1534 = vunpack.c.h.b16 %v395
        %v1535 = vunpack.c.l.b16 %v396
        %v1536 = vunpack.c.h.b16 %v396
        %v1537 = vunpack.c.l.b16 %v397
        %v1538 = vunpack.c.h.b16 %v397
        %v1539 = vunpack.c.l.b16 %v398
        %v1540 = vunpack.c.h.b16 %v398
        %v1541 = vunpack.c.l.b16 %v399
        %v1542 = vunpack.c.h.b16 %v399
        %v1543 = vunpack.c.l.b16 %v400
        %v1544 = vunpack.c.h.b16 %v400
        %v1545 = vunpack.c.l.b16 %v401
        %v1546 = vunpack.c.h.b16 %v401
        %v1547 = vunpack.c.l.b16 %v402
        %v1548 = vunpack.c.h.b16 %v402
        %v1549 = vunpack.c.l.b16 %v403
        %v1550 = vunpack.c.h.b16 %v403
        %v1551 = vunpack.c.l.b16 %v404
        %v1552 = vunpack.c.h.b16 %v404
        %v1553 = vunpack.c.l.b16 %v405
        %v1554 = vunpack.c.h.b16 %v405
        %v1555 = vunpack.c.l.b16 %v406
        %v1556 = vunpack.c.h.b16 %v406
        %v1557 = vunpack.c.l.b16 %v407
        %v1558 = vunpack.c.h.b16 %v407
        %v1559 = vunpack.c.l.b16 %v408
        %v1560 = vunpack.c.h.b16 %v408
        %v1561 = vunpack.c.l.b16 %v409
        %v1562 = vunpack.c.h.b16 %v409
        %v1563 = vunpack.c.l.b16 %v410
        %v1564 = vunpack.c.h.b16 %v410
        %v1565 = vunpack.c.l.b16 %v411
        %v1566 = vunpack.c.h.b16 %v411
        %v1567 = vunpack.c.l.b16 %v412
        %v1568 = vunpack.c.h.b16 %v412
        %v1569 = vunpack.c.l.b16 %v413
        %v1570 = vunpack.c.h.b16 %v413
        %v1571 = vunpack.c.l.b16 %v414
        %v1572 = vunpack.c.h.b16 %v414
        %v1573 = vunpack.c.l.b16 %v415
        %v1574 = vunpack.c.h.b16 %v415
        %v1575 = vunpack.c.l.b16 %v416
        %v1576 = vunpack.c.h.b16 %v416
        %v1577 = vunpack.c.l.b16 %v417
        %v1578 = vunpack.c.h.b16 %v417
        %v1579 = vunpack.c.l.b16 %v418
        %v1580 = vunpack.c.h.b16 %v418
        %v1581 = vunpack.c.l.b16 %v419
        %v1582 = vunpack.c.h.b16 %v419
        %v1583 = vunpack.c.l.b16 %v420
        %v1584 = vunpack.c.h.b16 %v420
        %v1585 = vunpack.c.l.b16 %v421
        %v1586 = vunpack.c.h.b16 %v421
        %v1587 = vunpack.c.l.b16 %v422
        %v1588 = vunpack.c.h.b16 %v422
        %v1589 = vunpack.c.l.b16 %v423
        %v1590 = vunpack.c.h.b16 %v423
        %v1591 = vunpack.c.l.b16 %v424
        %v1592 = vunpack.c.h.b16 %v424
        %v1593 = vunpack.c.l.b16 %v425
        %v1594 = vunpack.c.h.b16 %v425
        %v1595 = vunpack.c.l.b16 %v426
        %v1596 = vunpack.c.h.b16 %v426
        %v1597 = vunpack.c.l.b16 %v427
        %v1598 = vunpack.c.h.b16 %v427
        %v1599 = vunpack.c.l.b16 %v428
        %v1600 = vunpack.c.h.b16 %v428
        %v1601 = vunpack.c.l.b16 %v429
        %v1602 = vunpack.c.h.b16 %v429
        %v1603 = vunpack.c.l.b16 %v430
        %v1604 = vunpack.c.h.b16 %v430
        %v1605 = vunpack.c.l.b16 %v431
        %v1606 = vunpack.c.h.b16 %v431
        %v1607 = vunpack.c.l.b16 %v432
        %v1608 = vunpack.c.h.b16 %v432
        %v1609 = vunpack.c.l.b16 %v433
        %v1610 = vunpack.c.h.b16 %v433
        %v1611 = vunpack.c.l.b16 %v434
        %v1612 = vunpack.c.h.b16 %v434
        %v1613 = vunpack.c.l.b16 %v435
        %v1614 = vunpack.c.h.b16 %v435
        %v1615 = vunpack.c.l.b16 %v436
        %v1616 = vunpack.c.h.b16 %v436
        %v1617 = vunpack.c.l.b16 %v437
        %v1618 = vunpack.c.h.b16 %v437
        %v1619 = vunpack.c.l.b16 %v438
        %v1620 = vunpack.c.h.b16 %v438
        %v1621 = vunpack.c.l.b16 %v439
        %v1622 = vunpack.c.h.b16 %v439
        %v1623 = vunpack.c.l.b16 %v440
        %v1624 = vunpack.c.h.b16 %v440
        %v1625 = vunpack.c.l.b16 %v441
        %v1626 = vunpack.c.h.b16 %v441
        %v1627 = vunpack.c.l.b16 %v442
        %v1628 = vunpack.c.h.b16 %v442
        %v1629 = vunpack.c.l.b16 %v443
        %v1630 = vunpack.c.h.b16 %v443
        %v1631 = vunpack.c.l.b16 %v444
        %v1632 = vunpack.c.h.b16 %v444
        %v1633 = vunpack.c.l.b16 %v445
        %v1634 = vunpack.c.h.b16 %v445
        %v1635 = vunpack.c.l.b16 %v446
        %v1636 = vunpack.c.h.b16 %v446
        %v1637 = vunpack.c.l.b16 %v447
        %v1638 = vunpack.c.h.b16 %v447
        %v1639 = vunpack.c.l.b16 %v448
        %v1640 = vunpack.c.h.b16 %v448
        %v1641 = vunpack.c.l.b16 %v449
        %v1642 = vunpack.c.h.b16 %v449
        %v1643 = vunpack.c.l.b16 %v450
        %v1644 = vunpack.c.h.b16 %v450
        %v1645 = vunpack.c.l.b16 %v451
        %v1646 = vunpack.c.h.b16 %v451
        %v1647 = vunpack.c.l.b16 %v452
        %v1648 = vunpack.c.h.b16 %v452
        %v1649 = vunpack.c.l.b16 %v453
        %v1650 = vunpack.c.h.b16 %v453
        %v1651 = vunpack.c.l.b16 %v454
        %v1652 = vunpack.c.h.b16 %v454
        %v1653 = vunpack.c.l.b16 %v455
        %v1654 = vunpack.c.h.b16 %v455
        %v1655 = vunpack.c.l.b16 %v456
        %v1656 = vunpack.c.h.b16 %v456
        %v1657 = vunpack.c.l.b16 %v457
        %v1658 = vunpack.c.h.b16 %v457
        %v1659 = vunpack.c.l.b16 %v458
        %v1660 = vunpack.c.h.b16 %v458
        %v1661 = vunpack.c.l.b16 %v459
        %v1662 = vunpack.c.h.b16 %v459
        %v1663 = vunpack.c.l.b16 %v460
        %v1664 = vunpack.c.h.b16 %v460
        %v1665 = vunpack.c.l.b16 %v461
        %v1666 = vunpack.c.h.b16 %v461
        %v1667 = vunpack.c.l.b16 %v462
        %v1668 = vunpack.c.h.b16 %v462
        %v1669 = vunpack.c.l.b16 %v463
        %v1670 = vunpack.c.h.b16 %v463
        %v1671 = vunpack.c.l.b16 %v464
        %v1672 = vunpack.c.h.b16 %v464
        %v1673 = vunpack.c.l.b16 %v465
        %v1674 = vunpack.c.h.b16 %v465
        %v1675 = vunpack.c.l.b16 %v466
        %v1676 = vunpack.c.h.b16 %v466
        %v1677 = vunpack.c.l.b16 %v467
        %v1678 = vunpack.c.h.b16 %v467
        %v1679 = vunpack.c.l.b16 %v468
        %v1680 = vunpack.c.h.b16 %v468
        %v1681 = vunpack.c.l.b16 %v469
        %v1682 = vunpack.c.h.b16 %v469
        %v1683 = vunpack.c.l.b16 %v470
        %v1684 = vunpack.c.h.b16 %v470
        %v1685 = vunpack.c.l.b16 %v471
        %v1686 = vunpack.c.h.b16 %v471
        %v1687 = vunpack.c.l.b16 %v472
        %v1688 = vunpack.c.h.b16 %v472
        %v1689 = vunpack.c.l.b16 %v473
        %v1690 = vunpack.c.h.b16 %v473
        %v1691 = vunpack.c.l.b16 %v474
        %v1692 = vunpack.c.h.b16 %v474
        %v1693 = vunpack.c.l.b16 %v475
        %v1694 = vunpack.c.h.b16 %v475
        %v1695 = vunpack.c.l.b16 %v476
        %v1696 = vunpack.c.h.b16 %v476
        %v1697 = vunpack.c.l.b16 %v477
        %v1698 = vunpack.c.h.b16 %v477
        %v1699 = vunpack.c.l.b16 %v478
        %v1700 = vunpack.c.h.b16 %v478
        %v1701 = vunpack.c.l.b16 %v479
        %v1702 = vunpack.c.h.b16 %v479
        %v1703 = vunpack.c.l.b16 %v480
        %v1704 = vunpack.c.h.b16 %v480
        %v1705 = vunpack.c.l.b16 %v481
        %v1706 = vunpack.c.h.b16 %v481
        %v1707 = vunpack.c.l.b16 %v482
        %v1708 = vunpack.c.h.b16 %v482
        %v1709 = vunpack.c.l.b16 %v483
        %v1710 = vunpack.c.h.b16 %v483
        %v1711 = vunpack.c.l.b16 %v484
        %v1712 = vunpack.c.h.b16 %v484
        %v1713 = vunpack.c.l.b16 %v485
        %v1714 = vunpack.c.h.b16 %v485
        %v1715 = vunpack.c.l.b16 %v486
        %v1716 = vunpack.c.h.b16 %v486
        %v1717 = vunpack.c.l.b16 %v487
        %v1718 = vunpack.c.h.b16 %v487
        %v1719 = vunpack.c.l.b16 %v488
        %v1720 = vunpack.c.h.b16 %v488
        %v1721 = vunpack.c.l.b16 %v489
        %v1722 = vunpack.c.h.b16 %v489
        %v1723 = vunpack.c.l.b16 %v490
        %v1724 = vunpack.c.h.b16 %v490
        %v1725 = vunpack.c.l.b16 %v491
        %v1726 = vunpack.c.h.b16 %v491
        %v1727 = vunpack.c.l.b16 %v492
        %v1728 = vunpack.c.h.b16 %v492
        %v1729 = vunpack.c.l.b16 %v493
        %v1730 = vunpack.c.h.b16 %v493
        %v1731 = vunpack.c.l.b16 %v494
        %v1732 = vunpack.c.h.b16 %v494
        %v1733 = vunpack.c.l.b16 %v495
        %v1734 = vunpack.c.h.b16 %v495
        %v1735 = vunpack.c.l.b16 %v496
        %v1736 = vunpack.c.h.b16 %v496
        %v1737 = vunpack.c.l.b16 %v497
        %v1738 = vunpack.c.h.b16 %v497
        %v1739 = vunpack.c.l.b16 %v498
        %v1740 = vunpack.c.h.b16 %v498
        %v1741 = vunpack.c.l.b16 %v499
        %v1742 = vunpack.c.h.b16 %v499
        %v1743 = vunpack.c.l.b16 %v500
        %v1744 = vunpack.c.h.b16 %v500
        %v1745 = vunpack.c.l.b16 %v501
        %v1746 = vunpack.c.h.b16 %v501
        %v1747 = vunpack.c.l.b16 %v502
        %v1748 = vunpack.c.h.b16 %v502
        %v1749 = vunpack.c.l.b16 %v503
        %v1750 = vunpack.c.h.b16 %v503
        %v1751 = vunpack.c.l.b16 %v504
        %v1752 = vunpack.c.h.b16 %v504
        %v1753 = vunpack.c.l.b16 %v505
        %v1754 = vunpack.c.h.b16 %v505
        %v1755 = vunpack.c.l.b16 %v506
        %v1756 = vunpack.c.h.b16 %v506
        %v1757 = vunpack.c.l.b16 %v507
        %v1758 = vunpack.c.h.b16 %v507
        %v1759 = vunpack.c.l.b16 %v508
        %v1760 = vunpack.c.h.b16 %v508
        %v1761 = vunpack.c.l.b16 %v509
        %v1762 = vunpack.c.h.b16 %v509
        %v1763 = vunpack.c.l.b16 %v510
        %v1764 = vunpack.c.h.b16 %v510
        %v1765 = vunpack.c.l.b16 %v511
        %v1766 = vunpack.c.h.b16 %v511
        %v1767 = vunpack.c.l.b16 %v512
        %v1768 = vunpack.c.h.b16 %v512
        %v1769 = vunpack.c.l.b16 %v513
        %v1770 = vunpack.c.h.b16 %v513
        %v1771 = vunpack.c.l.b16 %v514
        %v1772 = vunpack.c.h.b16 %v514
        %v1773 = vunpack.c.l.b16 %v515
        %v1774 = vunpack.c.h.b16 %v515
        %v1775 = vunpack.c.l.b16 %v516
        %v1776 = vunpack.c.h.b16 %v516
        %v1777 = vunpack.c.l.b16 %v517
        %v1778 = vunpack.c.h.b16 %v517
        %v1779 = vunpack.c.l.b16 %v518
        %v1780 = vunpack.c.h.b16 %v518
        %v1781 = vunpack.c.l.b16 %v519
        %v1782 = vunpack.c.h.b16 %v519
        %v1783 = vunpack.c.l.b16 %v520
        %v1784 = vunpack.c.h.b16 %v520
        %v1785 = vunpack.c.l.b16 %v521
        %v1786 = vunpack.c.h.b16 %v521
        %v1787 = vunpack.c.l.b16 %v522
        %v1788 = vunpack.c.h.b16 %v522
        %v1789 = vunpack.c.l.b16 %v523
        %v1790 = vunpack.c.h.b16 %v523
        %v1791 = vunpack.c.l.b16 %v524
        %v1792 = vunpack.c.h.b16 %v524
        %v1793 = vunpack.c.l.b16 %v525
        %v1794 = vunpack.c.h.b16 %v525
        %v1795 = vunpack.c.l.b16 %v526
        %v1796 = vunpack.c.h.b16 %v526
        %v1797 = vunpack.c.l.b16 %v527
        %v1798 = vunpack.c.h.b16 %v527
        %v1799 = vunpack.c.l.b16 %v528
        %v1800 = vunpack.c.h.b16 %v528
        %v1801 = vunpack.c.l.b16 %v529
        %v1802 = vunpack.c.h.b16 %v529
        %v1803 = vunpack.c.l.b16 %v530
        %v1804 = vunpack.c.h.b16 %v530
        %v1805 = vunpack.c.l.b16 %v531
        %v1806 = vunpack.c.h.b16 %v531
        %v1807 = vunpack.c.l.b16 %v532
        %v1808 = vunpack.c.h.b16 %v532
        %v1809 = vunpack.c.l.b16 %v533
        %v1810 = vunpack.c.h.b16 %v533
        %v1811 = vunpack.c.l.b16 %v534
        %v1812 = vunpack.c.h.b16 %v534
        %v1813 = vunpack.c.l.b16 %v535
        %v1814 = vunpack.c.h.b16 %v535
        %v1815 = vunpack.c.l.b16 %v536
        %v1816 = vunpack.c.h.b16 %v536
        %v1817 = vunpack.c.l.b16 %v537
        %v1818 = vunpack.c.h.b16 %v537
        %v1819 = vunpack.c.l.b16 %v538
        %v1820 = vunpack.c.h.b16 %v538
        %v1821 = vunpack.c.l.b16 %v539
        %v1822 = vunpack.c.h.b16 %v539
        %v1823 = vunpack.c.l.b16 %v540
        %v1824 = vunpack.c.h.b16 %v540
        %v1825 = vunpack.c.l.b16 %v541
        %v1826 = vunpack.c.h.b16 %v541
        %v1827 = vunpack.c.l.b16 %v542
        %v1828 = vunpack.c.h.b16 %v542
        %v1829 = vunpack.c.l.b16 %v543
        %v1830 = vunpack.c.h.b16 %v543
        %v1831 = vunpack.c.l.b16 %v544
        %v1832 = vunpack.c.h.b16 %v544
        %v1833 = vunpack.c.l.b16 %v545
        %v1834 = vunpack.c.h.b16 %v545
        %v1835 = vunpack.c.l.b16 %v546
        %v1836 = vunpack.c.h.b16 %v546
        %v1837 = vunpack.c.l.b16 %v547
        %v1838 = vunpack.c.h.b16 %v547
        %v1839 = vunpack.c.l.b16 %v548
        %v1840 = vunpack.c.h.b16 %v548
        %v1841 = vunpack.c.l.b16 %v549
        %v1842 = vunpack.c.h.b16 %v549
        %v1843 = vunpack.c.l.b16 %v550
        %v1844 = vunpack.c.h.b16 %v550
        %v1845 = vunpack.c.l.b16 %v551
        %v1846 = vunpack.c.h.b16 %v551
        %v1847 = vunpack.c.l.b16 %v552
        %v1848 = vunpack.c.h.b16 %v552
        %v1849 = vunpack.c.l.b16 %v553
        %v1850 = vunpack.c.h.b16 %v553
        %v1851 = vunpack.c.l.b16 %v554
        %v1852 = vunpack.c.h.b16 %v554
        %v1853 = vunpack.c.l.b16 %v555
        %v1854 = vunpack.c.h.b16 %v555
        %v1855 = vunpack.c.l.b16 %v556
        %v1856 = vunpack.c.h.b16 %v556
        %v1857 = vunpack.c.l.b16 %v557
        %v1858 = vunpack.c.h.b16 %v557
        %v1859 = vunpack.c.l.b16 %v558
        %v1860 = vunpack.c.h.b16 %v558
        %v1861 = vunpack.c.l.b16 %v559
        %v1862 = vunpack.c.h.b16 %v559
        %v1863 = vunpack.c.l.b16 %v560
        %v1864 = vunpack.c.h.b16 %v560
        %v1865 = vunpack.c.l.b16 %v561
        %v1866 = vunpack.c.h.b16 %v561
        %v1867 = vunpack.c.l.b16 %v562
        %v1868 = vunpack.c.h.b16 %v562
        %v1869 = vunpack.c.l.b16 %v563
        %v1870 = vunpack.c.h.b16 %v563
        %v1871 = vunpack.c.l.b16 %v564
        %v1872 = vunpack.c.h.b16 %v564
        %v1873 = vunpack.c.l.b16 %v565
        %v1874 = vunpack.c.h.b16 %v565
        %v1875 = vunpack.c.l.b16 %v566
        %v1876 = vunpack.c.h.b16 %v566
        %v1877 = vunpack.c.l.b16 %v567
        %v1878 = vunpack.c.h.b16 %v567
        %v1879 = vunpack.c.l.b16 %v568
        %v1880 = vunpack.c.h.b16 %v568
        %v1881 = vunpack.c.l.b16 %v569
        %v1882 = vunpack.c.h.b16 %v569
        %v1883 = vunpack.c.l.b16 %v570
        %v1884 = vunpack.c.h.b16 %v570
        %v1885 = vunpack.c.l.b16 %v571
        %v1886 = vunpack.c.h.b16 %v571
        %v1887 = vunpack.c.l.b16 %v572
        %v1888 = vunpack.c.h.b16 %v572
        %v1889 = vunpack.c.l.b16 %v573
        %v1890 = vunpack.c.h.b16 %v573
        %v1891 = vunpack.c.l.b16 %v574
        %v1892 = vunpack.c.h.b16 %v574
        %v1893 = vunpack.c.l.b16 %v575
        %v1894 = vunpack.c.h.b16 %v575
        %v1895 = vunpack.c.l.b16 %v576
        %v1896 = vunpack.c.h.b16 %v576
        %v1897 = vunpack.c.l.b16 %v577
        %v1898 = vunpack.c.h.b16 %v577
        %v1899 = vunpack.c.l.b16 %v578
        %v1900 = vunpack.c.h.b16 %v578
        %v1901 = vunpack.c.l.b16 %v579
        %v1902 = vunpack.c.h.b16 %v579
        %v1903 = vunpack.c.l.b16 %v580
        %v1904 = vunpack.c.h.b16 %v580
        %v1905 = vunpack.c.l.b16 %v581
        %v1906 = vunpack.c.h.b16 %v581
        %v1907 = vunpack.c.l.b16 %v582
        %v1908 = vunpack.c.h.b16 %v582
        %v1909 = vunpack.c.l.b16 %v583
        %v1910 = vunpack.c.h.b16 %v583
        %v1911 = vunpack.c.l.b16 %v584
        %v1912 = vunpack.c.h.b16 %v584
        %v1913 = vunpack.c.l.b16 %v585
        %v1914 = vunpack.c.h.b16 %v585
        %v1915 = vunpack.c.l.b16 %v586
        %v1916 = vunpack.c.h.b16 %v586
        %v1917 = vunpack.c.l.b16 %v587
        %v1918 = vunpack.c.h.b16 %v587
        %v1919 = vunpack.c.l.b16 %v588
        %v1920 = vunpack.c.h.b16 %v588
        %v1921 = vunpack.c.l.b16 %v589
        %v1922 = vunpack.c.h.b16 %v589
        %v1923 = vunpack.c.l.b16 %v590
        %v1924 = vunpack.c.h.b16 %v590
        %v1925 = vunpack.c.l.b16 %v591
        %v1926 = vunpack.c.h.b16 %v591
        %v1927 = vunpack.c.l.b16 %v592
        %v1928 = vunpack.c.h.b16 %v592
        %v1929 = vunpack.c.l.b16 %v593
        %v1930 = vunpack.c.h.b16 %v593
        %v1931 = vunpack.c.l.b16 %v594
        %v1932 = vunpack.c.h.b16 %v594
        %v1933 = vunpack.c.l.b16 %v595
        %v1934 = vunpack.c.h.b16 %v595
        %v1935 = vunpack.c.l.b16 %v596
        %v1936 = vunpack.c.h.b16 %v596
        %v1937 = vunpack.c.l.b16 %v597
        %v1938 = vunpack.c.h.b16 %v597
        %v1939 = vunpack.c.l.b16 %v598
        %v1940 = vunpack.c.h.b16 %v598
        %v1941 = vunpack.c.l.b16 %v599
        %v1942 = vunpack.c.h.b16 %v599
        %v1943 = vunpack.c.l.b16 %v600
        %v1944 = vunpack.c.h.b16 %v600
        %v1945 = vunpack.c.l.b16 %v601
        %v1946 = vunpack.c.h.b16 %v601
        %v1947 = vunpack.c.l.b16 %v602
        %v1948 = vunpack.c.h.b16 %v602
        %v1949 = vunpack.c.l.b16 %v603
        %v1950 = vunpack.c.h.b16 %v603
        %v1951 = vunpack.c.l.b16 %v604
        %v1952 = vunpack.c.h.b16 %v604
        %v1953 = vunpack.c.l.b16 %v605
        %v1954 = vunpack.c.h.b16 %v605
        %v1955 = vunpack.c.l.b16 %v606
        %v1956 = vunpack.c.h.b16 %v606
        %v1957 = vunpack.c.l.b16 %v607
        %v1958 = vunpack.c.h.b16 %v607
        %v1959 = vunpack.c.l.b16 %v608
        %v1960 = vunpack.c.h.b16 %v608
        %v1961 = vunpack.c.l.b16 %v609
        %v1962 = vunpack.c.h.b16 %v609
        %v1963 = vunpack.c.l.b16 %v610
        %v1964 = vunpack.c.h.b16 %v610
        %v1965 = vunpack.c.l.b16 %v611
        %v1966 = vunpack.c.h.b16 %v611
        %v1967 = vunpack.c.l.b16 %v612
        %v1968 = vunpack.c.h.b16 %v612
        %v1969 = vunpack.c.l.b16 %v613
        %v1970 = vunpack.c.h.b16 %v613
        %v1971 = vunpack.c.l.b16 %v614
        %v1972 = vunpack.c.h.b16 %v614
        %v1973 = vunpack.c.l.b16 %v615
        %v1974 = vunpack.c.h.b16 %v615
        %v1975 = vunpack.c.l.b16 %v616
        %v1976 = vunpack.c.h.b16 %v616
        %v1977 = vunpack.c.l.b16 %v617
        %v1978 = vunpack.c.h.b16 %v617
        %v1979 = vunpack.c.l.b16 %v618
        %v1980 = vunpack.c.h.b16 %v618
        %v1981 = vunpack.c.l.b16 %v619
        %v1982 = vunpack.c.h.b16 %v619
        %v1983 = vunpack.c.l.b16 %v620
        %v1984 = vunpack.c.h.b16 %v620
        %v1985 = vunpack.c.l.b16 %v621
        %v1986 = vunpack.c.h.b16 %v621
        %v1987 = vunpack.c.l.b16 %v622
        %v1988 = vunpack.c.h.b16 %v622
        %v1989 = vunpack.c.l.b16 %v623
        %v1990 = vunpack.c.h.b16 %v623
        %v1991 = vunpack.c.l.b16 %v624
        %v1992 = vunpack.c.h.b16 %v624
        %v1993 = vunpack.c.l.b16 %v625
        %v1994 = vunpack.c.h.b16 %v625
        %v1995 = vunpack.c.l.b16 %v626
        %v1996 = vunpack.c.h.b16 %v626
        %v1997 = vunpack.c.l.b16 %v627
        %v1998 = vunpack.c.h.b16 %v627
        %v1999 = vunpack.c.l.b16 %v628
        %v2000 = vunpack.c.h.b16 %v628
        %v2001 = vunpack.c.l.b16 %v629
        %v2002 = vunpack.c.h.b16 %v629
        %v2003 = vunpack.c.l.b16 %v630
        %v2004 = vunpack.c.h.b16 %v630
        %v2005 = vunpack.c.l.b16 %v631
        %v2006 = vunpack.c.h.b16 %v631
        %v2007 = vunpack.c.l.b16 %v632
        %v2008 = vunpack.c.h.b16 %v632
        %v2009 = vunpack.c.l.b16 %v633
        %v2010 = vunpack.c.h.b16 %v633
        %v2011 = vunpack.c.l.b16 %v634
        %v2012 = vunpack.c.h.b16 %v634
        %v2013 = vunpack.c.l.b16 %v635
        %v2014 = vunpack.c.h.b16 %v635
        %v2015 = vunpack.c.l.b16 %v636
        %v2016 = vunpack.c.h.b16 %v636
        %v2017 = vunpack.c.l.b16 %v637
        %v2018 = vunpack.c.h.b16 %v637
        %v2019 = vunpack.c.l.b16 %v638
        %v2020 = vunpack.c.h.b16 %v638
        %v2021 = vunpack.c.l.b16 %v639
        %v2022 = vunpack.c.h.b16 %v639
        %v2023 = vunpack.c.l.b16 %v640
        %v2024 = vunpack.c.h.b16 %v640
        %v2025 = vunpack.c.l.b16 %v641
        %v2026 = vunpack.c.h.b16 %v641
        %v2027 = vunpack.c.l.b16 %v642
        %v2028 = vunpack.c.h.b16 %v642
        %v2029 = vunpack.c.l.b16 %v643
        %v2030 = vunpack.c.h.b16 %v643
        %v2031 = vunpack.c.l.b16 %v644
        %v2032 = vunpack.c.h.b16 %v644
        %v2033 = vunpack.c.l.b16 %v645
        %v2034 = vunpack.c.h.b16 %v645
        %v2035 = vunpack.c.l.b16 %v646
        %v2036 = vunpack.c.h.b16 %v646
        %v2037 = vunpack.c.l.b16 %v647
        %v2038 = vunpack.c.h.b16 %v647
        %v2039 = vunpack.c.l.b16 %v648
        %v2040 = vunpack.c.h.b16 %v648
        %v2041 = vunpack.c.l.b16 %v649
        %v2042 = vunpack.c.h.b16 %v649
        %v2043 = vunpack.c.l.b16 %v650
        %v2044 = vunpack.c.h.b16 %v650
        %v2045 = vunpack.c.l.b16 %v651
        %v2046 = vunpack.c.h.b16 %v651
        %v2047 = vunpack.c.l.b16 %v652
        %v2048 = vunpack.c.h.b16 %v652
        %v2049 = vunpack.c.l.b16 %v653
        %v2050 = vunpack.c.h.b16 %v653
        %v2051 = vunpack.c.l.b16 %v654
        %v2052 = vunpack.c.h.b16 %v654
        %v2053 = vunpack.c.l.b16 %v655
        %v2054 = vunpack.c.h.b16 %v655
        %v2055 = vunpack.c.l.b16 %v656
        %v2056 = vunpack.c.h.b16 %v656
        %v2057 = vunpack.c.l.b16 %v657
        %v2058 = vunpack.c.h.b16 %v657
        %v2059 = vunpack.c.l.b16 %v658
        %v2060 = vunpack.c.h.b16 %v658
        %v2061 = vunpack.c.l.b16 %v659
        %v2062 = vunpack.c.h.b16 %v659
        %v2063 = vunpack.c.l.b16 %v660
        %v2064 = vunpack.c.h.b16 %v660
        %v2065 = vunpack.c.l.b16 %v661
        %v2066 = vunpack.c.h.b16 %v661
        %v2067 = vunpack.c.l.b16 %v662
        %v2068 = vunpack.c.h.b16 %v662
        %v2069 = vunpack.c.l.b16 %v663
        %v2070 = vunpack.c.h.b16 %v663
        %v2071 = vunpack.c.l.b16 %v664
        %v2072 = vunpack.c.h.b16 %v664
        %v2073 = vunpack.c.l.b16 %v665
        %v2074 = vunpack.c.h.b16 %v665
        %v2075 = vunpack.c.l.b16 %v666
        %v2076 = vunpack.c.h.b16 %v666
        %v2077 = vunpack.c.l.b16 %v667
        %v2078 = vunpack.c.h.b16 %v667
        %v2079 = vunpack.c.l.b16 %v668
        %v2080 = vunpack.c.h.b16 %v668
        %v2081 = vunpack.c.l.b16 %v669
        %v2082 = vunpack.c.h.b16 %v669
        %v2083 = vunpack.c.l.b16 %v670
        %v2084 = vunpack.c.h.b16 %v670
        %v2085 = vunpack.c.l.b16 %v671
        %v2086 = vunpack.c.h.b16 %v671
        %v2087 = vunpack.c.l.b16 %v672
        %v2088 = vunpack.c.h.b16 %v672
        %v2089 = vunpack.c.l.b16 %v673
        %v2090 = vunpack.c.h.b16 %v673
        %v2091 = vunpack.c.l.b16 %v674
        %v2092 = vunpack.c.h.b16 %v674
        %v2093 = vunpack.c.l.b16 %v675
        %v2094 = vunpack.c.h.b16 %v675
        %v2095 = vunpack.c.l.b16 %v676
        %v2096 = vunpack.c.h.b16 %v676
        %v2097 = vunpack.c.l.b16 %v677
        %v2098 = vunpack.c.h.b16 %v677
        %v2099 = vunpack.c.l.b16 %v678
        %v2100 = vunpack.c.h.b16 %v678
        %v2101 = vunpack.c.l.b16 %v679
        %v2102 = vunpack.c.h.b16 %v679
        %v2103 = vunpack.c.l.b16 %v680
        %v2104 = vunpack.c.h.b16 %v680
        %v2105 = vunpack.c.l.b16 %v681
        %v2106 = vunpack.c.h.b16 %v681
        %v2107 = vunpack.c.l.b16 %v682
        %v2108 = vunpack.c.h.b16 %v682
        %v2109 = vunpack.c.l.b16 %v683
        %v2110 = vunpack.c.h.b16 %v683
        %v2111 = vunpack.c.l.b16 %v684
        %v2112 = vunpack.c.h.b16 %v684
        %v2113 = vunpack.c.l.b16 %v685
        %v2114 = vunpack.c.h.b16 %v685
        %v2115 = vunpack.c.l.b16 %v686
        %v2116 = vunpack.c.h.b16 %v686
        %v2117 = vunpack.c.l.b16 %v687
        %v2118 = vunpack.c.h.b16 %v687
        %v2119 = vunpack.c.l.b16 %v688
        %v2120 = vunpack.c.h.b16 %v688
        %v2121 = vunpack.c.l.b16 %v689
        %v2122 = vunpack.c.h.b16 %v689
        %v2123 = vunpack.c.l.b16 %v690
        %v2124 = vunpack.c.h.b16 %v690
        %v2125 = vunpack.c.l.b16 %v691
        %v2126 = vunpack.c.h.b16 %v691
        %v2127 = vunpack.c.l.b16 %v692
        %v2128 = vunpack.c.h.b16 %v692
        %v2129 = vunpack.c.l.b16 %v693
        %v2130 = vunpack.c.h.b16 %v693
        %v2131 = vunpack.c.l.b16 %v694
        %v2132 = vunpack.c.h.b16 %v694
        %v2133 = vunpack.c.l.b16 %v695
        %v2134 = vunpack.c.h.b16 %v695
        %v2135 = vunpack.c.l.b16 %v696
        %v2136 = vunpack.c.h.b16 %v696
        %v2137 = vunpack.c.l.b16 %v697
        %v2138 = vunpack.c.h.b16 %v697
        %v2139 = vunpack.c.l.b16 %v698
        %v2140 = vunpack.c.h.b16 %v698
        %v2141 = vunpack.c.l.b16 %v699
        %v2142 = vunpack.c.h.b16 %v699
        %v2143 = vunpack.c.l.b16 %v700
        %v2144 = vunpack.c.h.b16 %v700
        %v2145 = vunpack.c.l.b16 %v701
        %v2146 = vunpack.c.h.b16 %v701
        %v2147 = vunpack.c.l.b16 %v702
        %v2148 = vunpack.c.h.b16 %v702
        %v2149 = vunpack.c.l.b16 %v703
        %v2150 = vunpack.c.h.b16 %v703
        %v2151 = vunpack.c.l.b16 %v704
        %v2152 = vunpack.c.h.b16 %v704
        %v2153 = vunpack.c.l.b16 %v705
        %v2154 = vunpack.c.h.b16 %v705
        %v2155 = vunpack.c.l.b16 %v706
        %v2156 = vunpack.c.h.b16 %v706
        %v2157 = vunpack.c.l.b16 %v707
        %v2158 = vunpack.c.h.b16 %v707
        %v2159 = vunpack.c.l.b16 %v708
        %v2160 = vunpack.c.h.b16 %v708
        %v2161 = vunpack.c.l.b16 %v709
        %v2162 = vunpack.c.h.b16 %v709
        %v2163 = vunpack.c.l.b16 %v710
        %v2164 = vunpack.c.h.b16 %v710
        %v2165 = vunpack.c.l.b16 %v711
        %v2166 = vunpack.c.h.b16 %v711
        %v2167 = vunpack.c.l.b16 %v712
        %v2168 = vunpack.c.h.b16 %v712
        %v2169 = vunpack.c.l.b16 %v713
        %v2170 = vunpack.c.h.b16 %v713
        %v2171 = vunpack.c.l.b16 %v714
        %v2172 = vunpack.c.h.b16 %v714
        %v2173 = vunpack.c.l.b16 %v715
        %v2174 = vunpack.c.h.b16 %v715
        %v2175 = vunpack.c.l.b16 %v716
        %v2176 = vunpack.c.h.b16 %v716
        %v2177 = vunpack.c.l.b16 %v717
        %v2178 = vunpack.c.h.b16 %v717
        %v2179 = vunpack.c.l.b16 %v718
        %v2180 = vunpack.c.h.b16 %v718
        %v2181 = vunpack.c.l.b16 %v719
        %v2182 = vunpack.c.h.b16 %v719
        %v2183 = vunpack.c.l.b16 %v720
        %v2184 = vunpack.c.h.b16 %v720
        %v2185 = vunpack.c.l.b16 %v721
        %v2186 = vunpack.c.h.b16 %v721
        %v2187 = vunpack.c.l.b16 %v722
        %v2188 = vunpack.c.h.b16 %v722
        %v2189 = vunpack.c.l.b16 %v723
        %v2190 = vunpack.c.h.b16 %v723
        %v2191 = vunpack.c.l.b16 %v724
        %v2192 = vunpack.c.h.b16 %v724
        %v2193 = vunpack.c.l.b16 %v725
        %v2194 = vunpack.c.h.b16 %v725
        %v2195 = vunpack.c.l.b16 %v726
        %v2196 = vunpack.c.h.b16 %v726
        %v2197 = vunpack.c.l.b16 %v727
        %v2198 = vunpack.c.h.b16 %v727
        %v2199 = vunpack.c.l.b16 %v728
        %v2200 = vunpack.c.h.b16 %v728
        %v2201 = vunpack.c.l.b16 %v729
        %v2202 = vunpack.c.h.b16 %v729
        %v2203 = vunpack.c.l.b16 %v730
        %v2204 = vunpack.c.h.b16 %v730
        %v2205 = vunpack.c.l.b16 %v731
        %v2206 = vunpack.c.h.b16 %v731
        %v2207 = vunpack.c.l.b16 %v732
        %v2208 = vunpack.c.h.b16 %v732
        %v2209 = vunpack.c.l.b16 %v733
        %v2210 = vunpack.c.h.b16 %v733
        %v2211 = vunpack.c.l.b16 %v734
        %v2212 = vunpack.c.h.b16 %v734
        %v2213 = vunpack.c.l.b16 %v735
        %v2214 = vunpack.c.h.b16 %v735
        %v2215 = vunpack.c.l.b16 %v736
        %v2216 = vunpack.c.h.b16 %v736
        %v2217 = vunpack.c.l.b16 %v737
        %v2218 = vunpack.c.h.b16 %v737
        %v2219 = vunpack.c.l.b16 %v738
        %v2220 = vunpack.c.h.b16 %v738
        %v2221 = vunpack.c.l.b16 %v739
        %v2222 = vunpack.c.h.b16 %v739
        %v2223 = vunpack.c.l.b16 %v740
        %v2224 = vunpack.c.h.b16 %v740
        %v2225 = vunpack.c.l.b16 %v741
        %v2226 = vunpack.c.h.b16 %v741
        %v2227 = vunpack.c.l.b16 %v742
        %v2228 = vunpack.c.h.b16 %v742
        %v2229 = vunpack.c.l.b16 %v743
        %v2230 = vunpack.c.h.b16 %v743
        %v2231 = vunpack.c.l.b16 %v744
        %v2232 = vunpack.c.h.b16 %v744
        %v2233 = vunpack.c.l.b16 %v745
        %v2234 = vunpack.c.h.b16 %v745
        %v2235 = vunpack.c.l.b16 %v746
        %v2236 = vunpack.c.h.b16 %v746
        %v2237 = vunpack.c.l.b16 %v747
        %v2238 = vunpack.c.h.b16 %v747
        %v2239 = vunpack.c.l.b16 %v748
        %v2240 = vunpack.c.h.b16 %v748
        %v2241 = vunpack.c.l.b16 %v749
        %v2242 = vunpack.c.h.b16 %v749
        %v2243 = vunpack.c.l.b16 %v750
        %v2244 = vunpack.c.h.b16 %v750
        %v2245 = vunpack.c.l.b16 %v751
        %v2246 = vunpack.c.h.b16 %v751
        %v2247 = vunpack.c.l.b16 %v752
        %v2248 = vunpack.c.h.b16 %v752
        %v2249 = vunpack.c.l.b16 %v753
        %v2250 = vunpack.c.h.b16 %v753
        %v2251 = vunpack.c.l.b16 %v754
        %v2252 = vunpack.c.h.b16 %v754
        %v2253 = vunpack.c.l.b16 %v755
        %v2254 = vunpack.c.h.b16 %v755
        %v2255 = vunpack.c.l.b16 %v756
        %v2256 = vunpack.c.h.b16 %v756
        %v2257 = vunpack.c.l.b16 %v757
        %v2258 = vunpack.c.h.b16 %v757
        %v2259 = vunpack.c.l.b16 %v758
        %v2260 = vunpack.c.h.b16 %v758
        %v2261 = vunpack.c.l.b16 %v759
        %v2262 = vunpack.c.h.b16 %v759
        %v2263 = vunpack.c.l.b16 %v760
        %v2264 = vunpack.c.h.b16 %v760
        %v2265 = vunpack.c.l.b16 %v761
        %v2266 = vunpack.c.h.b16 %v761
        %v2267 = vunpack.c.l.b16 %v762
        %v2268 = vunpack.c.h.b16 %v762
        %v2269 = vunpack.c.l.b16 %v763
        %v2270 = vunpack.c.h.b16 %v763
        %v2271 = vunpack.c.l.b16 %v764
        %v2272 = vunpack.c.h.b16 %v764
        %v2273 = vunpack.c.l.b16 %v765
        %v2274 = vunpack.c.h.b16 %v765
        %v2275 = vunpack.c.l.b16 %v766
        %v2276 = vunpack.c.h.b16 %v766
        %v2277 = vunpack.c.l.b16 %v767
        %v2278 = vunpack.c.h.b16 %v767
        %v2279 = vunpack.c.l.b16 %v768
        %v2280 = vunpack.c.h.b16 %v768
        %v2281 = vunpack.c.l.b16 %v769
        %v2282 = vunpack.c.h.b16 %v769
        %v2283 = vunpack.c.l.b16 %v770
        %v2284 = vunpack.c.h.b16 %v770
        %v2285 = vunpack.c.l.b16 %v771
        %v2286 = vunpack.c.h.b16 %v771
        %v2287 = vunpack.c.l.b16 %v772
        %v2288 = vunpack.c.h.b16 %v772
        %v2289 = vunpack.c.l.b16 %v773
        %v2290 = vunpack.c.h.b16 %v773
        %v2291 = vunpack.c.l.b16 %v774
        %v2292 = vunpack.c.h.b16 %v774
        %v2293 = vunpack.c.l.b16 %v775
        %v2294 = vunpack.c.h.b16 %v775
        %v2295 = vunpack.c.l.b16 %v776
        %v2296 = vunpack.c.h.b16 %v776
        %v2297 = vunpack.c.l.b16 %v777
        %v2298 = vunpack.c.h.b16 %v777
        %v2299 = vunpack.c.l.b16 %v778
        %v2300 = vunpack.c.h.b16 %v778
        %v2301 = vunpack.c.l.b16 %v779
        %v2302 = vunpack.c.h.b16 %v779
        %v2303 = vunpack.c.l.b16 %v780
        %v2304 = vunpack.c.h.b16 %v780
        %v2305 = vunpack.c.l.b16 %v781
        %v2306 = vunpack.c.h.b16 %v781
        %v2307 = vunpack.c.l.b16 %v782
        %v2308 = vunpack.c.h.b16 %v782
        %v2309 = vunpack.c.l.b16 %v783
        %v2310 = vunpack.c.h.b16 %v783
        %v2311 = vunpack.c.l.b16 %v784
        %v2312 = vunpack.c.h.b16 %v784
        %v2313 = vunpack.c.l.b16 %v785
        %v2314 = vunpack.c.h.b16 %v785
        %v2315 = vunpack.c.l.b16 %v786
        %v2316 = vunpack.c.h.b16 %v786
        %v2317 = vunpack.c.l.b16 %v787
        %v2318 = vunpack.c.h.b16 %v787
        %v2319 = vunpack.c.l.b16 %v788
        %v2320 = vunpack.c.h.b16 %v788
        %v2321 = vunpack.c.l.b16 %v789
        %v2322 = vunpack.c.h.b16 %v789
        %v2323 = vunpack.c.l.b16 %v790
        %v2324 = vunpack.c.h.b16 %v790
        %v2325 = vunpack.c.l.b16 %v791
        %v2326 = vunpack.c.h.b16 %v791
        %v2327 = vunpack.c.l.b16 %v792
        %v2328 = vunpack.c.h.b16 %v792
        %v2329 = vunpack.c.l.b16 %v793
        %v2330 = vunpack.c.h.b16 %v793
        %v2331 = vunpack.c.l.b16 %v794
        %v2332 = vunpack.c.h.b16 %v794
        %v2333 = vunpack.c.l.b16 %v795
        %v2334 = vunpack.c.h.b16 %v795
        %v2335 = vunpack.c.l.b16 %v796
        %v2336 = vunpack.c.h.b16 %v796
        %v2337 = vunpack.c.l.b16 %v797
        %v2338 = vunpack.c.h.b16 %v797
        %v2339 = vunpack.c.l.b16 %v798
        %v2340 = vunpack.c.h.b16 %v798
        %v2341 = vunpack.c.l.b16 %v799
        %v2342 = vunpack.c.h.b16 %v799
        %v2343 = vunpack.c.l.b16 %v800
        %v2344 = vunpack.c.h.b16 %v800
        %v2345 = vunpack.c.l.b16 %v801
        %v2346 = vunpack.c.h.b16 %v801
        %v2347 = vunpack.c.l.b16 %v802
        %v2348 = vunpack.c.h.b16 %v802
        %v2349 = vunpack.c.l.b16 %v803
        %v2350 = vunpack.c.h.b16 %v803
        %v2351 = vunpack.c.l.b16 %v804
        %v2352 = vunpack.c.h.b16 %v804
        %v2353 = vunpack.c.l.b16 %v805
        %v2354 = vunpack.c.h.b16 %v805
        %v2355 = vunpack.c.l.b16 %v806
        %v2356 = vunpack.c.h.b16 %v806
        %v2357 = vunpack.c.l.b16 %v807
        %v2358 = vunpack.c.h.b16 %v807
        %v2359 = vunpack.c.l.b16 %v808
        %v2360 = vunpack.c.h.b16 %v808
        %v2361 = vunpack.c.l.b16 %v809
        %v2362 = vunpack.c.h.b16 %v809
        %v2363 = vunpack.c.l.b16 %v810
        %v2364 = vunpack.c.h.b16 %v810
        %v2365 = vunpack.c.l.b16 %v811
        %v2366 = vunpack.c.h.b16 %v811
        %v2367 = vunpack.c.l.b16 %v812
        %v2368 = vunpack.c.h.b16 %v812
        %v2369 = vunpack.c.l.b16 %v813
        %v2370 = vunpack.c.h.b16 %v813
        %v2371 = vunpack.c.l.b16 %v814
        %v2372 = vunpack.c.h.b16 %v814
        %v2373 = vunpack.c.l.b16 %v815
        %v2374 = vunpack.c.h.b16 %v815
        %v2375 = vunpack.c.l.b16 %v816
        %v2376 = vunpack.c.h.b16 %v816
        %v2377 = vunpack.c.l.b16 %v817
        %v2378 = vunpack.c.h.b16 %v817
        %v2379 = vunpack.c.l.b16 %v818
        %v2380 = vunpack.c.h.b16 %v818
        %v2381 = vunpack.c.l.b16 %v819
        %v2382 = vunpack.c.h.b16 %v819
        %v2383 = vunpack.c.l.b16 %v820
        %v2384 = vunpack.c.h.b16 %v820
        %v2385 = vunpack.c.l.b16 %v821
        %v2386 = vunpack.c.h.b16 %v821
        %v2387 = vunpack.c.l.b16 %v822
        %v2388 = vunpack.c.h.b16 %v822
        %v2389 = vunpack.c.l.b16 %v823
        %v2390 = vunpack.c.h.b16 %v823
        %v2391 = vunpack.c.l.b16 %v824
        %v2392 = vunpack.c.h.b16 %v824
        %v2393 = vunpack.c.l.b16 %v825
        %v2394 = vunpack.c.h.b16 %v825
        %v2395 = vunpack.c.l.b16 %v826
        %v2396 = vunpack.c.h.b16 %v826
        %v2397 = vunpack.c.l.b16 %v827
        %v2398 = vunpack.c.h.b16 %v827
        %v2399 = vunpack.c.l.b16 %v828
        %v2400 = vunpack.c.h.b16 %v828
        %v2401 = vunpack.c.l.b16 %v829
        %v2402 = vunpack.c.h.b16 %v829
        %v2403 = vunpack.c.l.b16 %v830
        %v2404 = vunpack.c.h.b16 %v830
        %v2405 = vunpack.c.l.b16 %v831
        %v2406 = vunpack.c.h.b16 %v831
        %v2407 = vunpack.c.l.b16 %v832
        %v2408 = vunpack.c.h.b16 %v832
        %v2409 = vpack.c.b16 %v1393, %v1385
        %v2410 = vpack.c.b16 %v1394, %v1386
        %v2411 = vpack.c.b16 %v1395, %v1387
        %v2412 = vpack.c.b16 %v1396, %v1388
        %v2413 = vpack.c.b16 %v1397, %v1389
        %v2414 = vpack.c.b16 %v1398, %v1390
        %v2415 = vpack.c.b16 %v1399, %v1391
        %v2416 = vpack.c.b16 %v1400, %v1392
        %v2417 = vpack.c.b16 %v1409, %v1401
        %v2418 = vpack.c.b16 %v1410, %v1402
        %v2419 = vpack.c.b16 %v1411, %v1403
        %v2420 = vpack.c.b16 %v1412, %v1404
        %v2421 = vpack.c.b16 %v1413, %v1405
        %v2422 = vpack.c.b16 %v1414, %v1406
        %v2423 = vpack.c.b16 %v1415, %v1407
        %v2424 = vpack.c.b16 %v1416, %v1408
        %v2425 = vpack.c.b16 %v1425, %v1417
        %v2426 = vpack.c.b16 %v1426, %v1418
        %v2427 = vpack.c.b16 %v1427, %v1419
        %v2428 = vpack.c.b16 %v1428, %v1420
        %v2429 = vpack.c.b16 %v1429, %v1421
        %v2430 = vpack.c.b16 %v1430, %v1422
        %v2431 = vpack.c.b16 %v1431, %v1423
        %v2432 = vpack.c.b16 %v1432, %v1424
        %v2433 = vpack.c.b16 %v1441, %v1433
        %v2434 = vpack.c.b16 %v1442, %v1434
        %v2435 = vpack.c.b16 %v1443, %v1435
        %v2436 = vpack.c.b16 %v1444, %v1436
        %v2437 = vpack.c.b16 %v1445, %v1437
        %v2438 = vpack.c.b16 %v1446, %v1438
        %v2439 = vpack.c.b16 %v1447, %v1439
        %v2440 = vpack.c.b16 %v1448, %v1440
        %v2441 = vpack.c.b16 %v1457, %v1449
        %v2442 = vpack.c.b16 %v1458, %v1450
        %v2443 = vpack.c.b16 %v1459, %v1451
        %v2444 = vpack.c.b16 %v1460, %v1452
        %v2445 = vpack.c.b16 %v1461, %v1453
        %v2446 = vpack.c.b16 %v1462, %v1454
        %v2447 = vpack.c.b16 %v1463, %v1455
        %v2448 = vpack.c.b16 %v1464, %v1456
        %v2449 = vpack.c.b16 %v1473, %v1465
        %v2450 = vpack.c.b16 %v1474, %v1466
        %v2451 = vpack.c.b16 %v1475, %v1467
        %v2452 = vpack.c.b16 %v1476, %v1468
        %v2453 = vpack.c.b16 %v1477, %v1469
        %v2454 = vpack.c.b16 %v1478, %v1470
        %v2455 = vpack.c.b16 %v1479, %v1471
        %v2456 = vpack.c.b16 %v1480, %v1472
        %v2457 = vpack.c.b16 %v1489, %v1481
        %v2458 = vpack.c.b16 %v1490, %v1482
        %v2459 = vpack.c.b16 %v1491, %v1483
        %v2460 = vpack.c.b16 %v1492, %v1484
        %v2461 = vpack.c.b16 %v1493, %v1485
        %v2462 = vpack.c.b16 %v1494, %v1486
        %v2463 = vpack.c.b16 %v1495, %v1487
        %v2464 = vpack.c.b16 %v1496, %v1488
        %v2465 = vpack.c.b16 %v1505, %v1497
        %v2466 = vpack.c.b16 %v1506, %v1498
        %v2467 = vpack.c.b16 %v1507, %v1499
        %v2468 = vpack.c.b16 %v1508, %v1500
        %v2469 = vpack.c.b16 %v1509, %v1501
        %v2470 = vpack.c.b16 %v1510, %v1502
        %v2471 = vpack.c.b16 %v1511, %v1503
        %v2472 = vpack.c.b16 %v1512, %v1504
        %v2473 = vpack.c.b16 %v1521, %v1513
        %v2474 = vpack.c.b16 %v1522, %v1514
        %v2475 = vpack.c.b16 %v1523, %v1515
        %v2476 = vpack.c.b16 %v1524, %v1516
        %v2477 = vpack.c.b16 %v1525, %v1517
        %v2478 = vpack.c.b16 %v1526, %v1518
        %v2479 = vpack.c.b16 %v1527, %v1519
        %v2480 = vpack.c.b16 %v1528, %v1520
        %v2481 = vpack.c.b16 %v1537, %v1529
        %v2482 = vpack.c.b16 %v1538, %v1530
        %v2483 = vpack.c.b16 %v1539, %v1531
        %v2484 = vpack.c.b16 %v1540, %v1532
        %v2485 = vpack.c.b16 %v1541, %v1533
        %v2486 = vpack.c.b16 %v1542, %v1534
        %v2487 = vpack.c.b16 %v1543, %v1535
        %v2488 = vpack.c.b16 %v1544, %v1536
        %v2489 = vpack.c.b16 %v1553, %v1545
        %v2490 = vpack.c.b16 %v1554, %v1546
        %v2491 = vpack.c.b16 %v1555, %v1547
        %v2492 = vpack.c.b16 %v1556, %v1548
        %v2493 = vpack.c.b16 %v1557, %v1549
        %v2494 = vpack.c.b16 %v1558, %v1550
        %v2495 = vpack.c.b16 %v1559, %v1551
        %v2496 = vpack.c.b16 %v1560, %v1552
        %v2497 = vpack.c.b16 %v1569, %v1561
        %v2498 = vpack.c.b16 %v1570, %v1562
        %v2499 = vpack.c.b16 %v1571, %v1563
        %v2500 = vpack.c.b16 %v1572, %v1564
        %v2501 = vpack.c.b16 %v1573, %v1565
        %v2502 = vpack.c.b16 %v1574, %v1566
        %v2503 = vpack.c.b16 %v1575, %v1567
        %v2504 = vpack.c.b16 %v1576, %v1568
        %v2505 = vpack.c.b16 %v1585, %v1577
        %v2506 = vpack.c.b16 %v1586, %v1578
        %v2507 = vpack.c.b16 %v1587, %v1579
        %v2508 = vpack.c.b16 %v1588, %v1580
        %v2509 = vpack.c.b16 %v1589, %v1581
        %v2510 = vpack.c.b16 %v1590, %v1582
        %v2511 = vpack.c.b16 %v1591, %v1583
        %v2512 = vpack.c.b16 %v1592, %v1584
        %v2513 = vpack.c.b16 %v1601, %v1593
        %v2514 = vpack.c.b16 %v1602, %v1594
        %v2515 = vpack.c.b16 %v1603, %v1595
        %v2516 = vpack.c.b16 %v1604, %v1596
        %v2517 = vpack.c.b16 %v1605, %v1597
        %v2518 = vpack.c.b16 %v1606, %v1598
        %v2519 = vpack.c.b16 %v1607, %v1599
        %v2520 = vpack.c.b16 %v1608, %v1600
        %v2521 = vpack.c.b16 %v1617, %v1609
        %v2522 = vpack.c.b16 %v1618, %v1610
        %v2523 = vpack.c.b16 %v1619, %v1611
        %v2524 = vpack.c.b16 %v1620, %v1612
        %v2525 = vpack.c.b16 %v1621, %v1613
        %v2526 = vpack.c.b16 %v1622, %v1614
        %v2527 = vpack.c.b16 %v1623, %v1615
        %v2528 = vpack.c.b16 %v1624, %v1616
        %v2529 = vpack.c.b16 %v1633, %v1625
        %v2530 = vpack.c.b16 %v1634, %v1626
        %v2531 = vpack.c.b16 %v1635, %v1627
        %v2532 = vpack.c.b16 %v1636, %v1628
        %v2533 = vpack.c.b16 %v1637, %v1629
        %v2534 = vpack.c.b16 %v1638, %v1630
        %v2535 = vpack.c.b16 %v1639, %v1631
        %v2536 = vpack.c.b16 %v1640, %v1632
        %v2537 = vpack.c.b16 %v1649, %v1641
        %v2538 = vpack.c.b16 %v1650, %v1642
        %v2539 = vpack.c.b16 %v1651, %v1643
        %v2540 = vpack.c.b16 %v1652, %v1644
        %v2541 = vpack.c.b16 %v1653, %v1645
        %v2542 = vpack.c.b16 %v1654, %v1646
        %v2543 = vpack.c.b16 %v1655, %v1647
        %v2544 = vpack.c.b16 %v1656, %v1648
        %v2545 = vpack.c.b16 %v1665, %v1657
        %v2546 = vpack.c.b16 %v1666, %v1658
        %v2547 = vpack.c.b16 %v1667, %v1659
        %v2548 = vpack.c.b16 %v1668, %v1660
        %v2549 = vpack.c.b16 %v1669, %v1661
        %v2550 = vpack.c.b16 %v1670, %v1662
        %v2551 = vpack.c.b16 %v1671, %v1663
        %v2552 = vpack.c.b16 %v1672, %v1664
        %v2553 = vpack.c.b16 %v1681, %v1673
        %v2554 = vpack.c.b16 %v1682, %v1674
        %v2555 = vpack.c.b16 %v1683, %v1675
        %v2556 = vpack.c.b16 %v1684, %v1676
        %v2557 = vpack.c.b16 %v1685, %v1677
        %v2558 = vpack.c.b16 %v1686, %v1678
        %v2559 = vpack.c.b16 %v1687, %v1679
        %v2560 = vpack.c.b16 %v1688, %v1680
        %v2561 = vpack.c.b16 %v1697, %v1689
        %v2562 = vpack.c.b16 %v1698, %v1690
        %v2563 = vpack.c.b16 %v1699, %v1691
        %v2564 = vpack.c.b16 %v1700, %v1692
        %v2565 = vpack.c.b16 %v1701, %v1693
        %v2566 = vpack.c.b16 %v1702, %v1694
        %v2567 = vpack.c.b16 %v1703, %v1695
        %v2568 = vpack.c.b16 %v1704, %v1696
        %v2569 = vpack.c.b16 %v1713, %v1705
        %v2570 = vpack.c.b16 %v1714, %v1706
        %v2571 = vpack.c.b16 %v1715, %v1707
        %v2572 = vpack.c.b16 %v1716, %v1708
        %v2573 = vpack.c.b16 %v1717, %v1709
        %v2574 = vpack.c.b16 %v1718, %v1710
        %v2575 = vpack.c.b16 %v1719, %v1711
        %v2576 = vpack.c.b16 %v1720, %v1712
        %v2577 = vpack.c.b16 %v1729, %v1721
        %v2578 = vpack.c.b16 %v1730, %v1722
        %v2579 = vpack.c.b16 %v1731, %v1723
        %v2580 = vpack.c.b16 %v1732, %v1724
        %v2581 = vpack.c.b16 %v1733, %v1725
        %v2582 = vpack.c.b16 %v1734, %v1726
        %v2583 = vpack.c.b16 %v1735, %v1727
        %v2584 = vpack.c.b16 %v1736, %v1728
        %v2585 = vpack.c.b16 %v1745, %v1737
        %v2586 = vpack.c.b16 %v1746, %v1738
        %v2587 = vpack.c.b16 %v1747, %v1739
        %v2588 = vpack.c.b16 %v1748, %v1740
        %v2589 = vpack.c.b16 %v1749, %v1741
        %v2590 = vpack.c.b16 %v1750, %v1742
        %v2591 = vpack.c.b16 %v1751, %v1743
        %v2592 = vpack.c.b16 %v1752, %v1744
        %v2593 = vpack.c.b16 %v1761, %v1753
        %v2594 = vpack.c.b16 %v1762, %v1754
        %v2595 = vpack.c.b16 %v1763, %v1755
        %v2596 = vpack.c.b16 %v1764, %v1756
        %v2597 = vpack.c.b16 %v1765, %v1757
        %v2598 = vpack.c.b16 %v1766, %v1758
        %v2599 = vpack.c.b16 %v1767, %v1759
        %v2600 = vpack.c.b16 %v1768, %v1760
        %v2601 = vpack.c.b16 %v1777, %v1769
        %v2602 = vpack.c.b16 %v1778, %v1770
        %v2603 = vpack.c.b16 %v1779, %v1771
        %v2604 = vpack.c.b16 %v1780, %v1772
        %v2605 = vpack.c.b16 %v1781, %v1773
        %v2606 = vpack.c.b16 %v1782, %v1774
        %v2607 = vpack.c.b16 %v1783, %v1775
        %v2608 = vpack.c.b16 %v1784, %v1776
        %v2609 = vpack.c.b16 %v1793, %v1785
        %v2610 = vpack.c.b16 %v1794, %v1786
        %v2611 = vpack.c.b16 %v1795, %v1787
        %v2612 = vpack.c.b16 %v1796, %v1788
        %v2613 = vpack.c.b16 %v1797, %v1789
        %v2614 = vpack.c.b16 %v1798, %v1790
        %v2615 = vpack.c.b16 %v1799, %v1791
        %v2616 = vpack.c.b16 %v1800, %v1792
        %v2617 = vpack.c.b16 %v1809, %v1801
        %v2618 = vpack.c.b16 %v1810, %v1802
        %v2619 = vpack.c.b16 %v1811, %v1803
        %v2620 = vpack.c.b16 %v1812, %v1804
        %v2621 = vpack.c.b16 %v1813, %v1805
        %v2622 = vpack.c.b16 %v1814, %v1806
        %v2623 = vpack.c.b16 %v1815, %v1807
        %v2624 = vpack.c.b16 %v1816, %v1808
        %v2625 = vpack.c.b16 %v1825, %v1817
        %v2626 = vpack.c.b16 %v1826, %v1818
        %v2627 = vpack.c.b16 %v1827, %v1819
        %v2628 = vpack.c.b16 %v1828, %v1820
        %v2629 = vpack.c.b16 %v1829, %v1821
        %v2630 = vpack.c.b16 %v1830, %v1822
        %v2631 = vpack.c.b16 %v1831, %v1823
        %v2632 = vpack.c.b16 %v1832, %v1824
        %v2633 = vpack.c.b16 %v1841, %v1833
        %v2634 = vpack.c.b16 %v1842, %v1834
        %v2635 = vpack.c.b16 %v1843, %v1835
        %v2636 = vpack.c.b16 %v1844, %v1836
        %v2637 = vpack.c.b16 %v1845, %v1837
        %v2638 = vpack.c.b16 %v1846, %v1838
        %v2639 = vpack.c.b16 %v1847, %v1839
        %v2640 = vpack.c.b16 %v1848, %v1840
        %v2641 = vpack.c.b16 %v1857, %v1849
        %v2642 = vpack.c.b16 %v1858, %v1850
        %v2643 = vpack.c.b16 %v1859, %v1851
        %v2644 = vpack.c.b16 %v1860, %v1852
        %v2645 = vpack.c.b16 %v1861, %v1853
        %v2646 = vpack.c.b16 %v1862, %v1854
        %v2647 = vpack.c.b16 %v1863, %v1855
        %v2648 = vpack.c.b16 %v1864, %v1856
        %v2649 = vpack.c.b16 %v1873, %v1865
        %v2650 = vpack.c.b16 %v1874, %v1866
        %v2651 = vpack.c.b16 %v1875, %v1867
        %v2652 = vpack.c.b16 %v1876, %v1868
        %v2653 = vpack.c.b16 %v1877, %v1869
        %v2654 = vpack.c.b16 %v1878, %v1870
        %v2655 = vpack.c.b16 %v1879, %v1871
        %v2656 = vpack.c.b16 %v1880, %v1872
        %v2657 = vpack.c.b16 %v1889, %v1881
        %v2658 = vpack.c.b16 %v1890, %v1882
        %v2659 = vpack.c.b16 %v1891, %v1883
        %v2660 = vpack.c.b16 %v1892, %v1884
        %v2661 = vpack.c.b16 %v1893, %v1885
        %v2662 = vpack.c.b16 %v1894, %v1886
        %v2663 = vpack.c.b16 %v1895, %v1887
        %v2664 = vpack.c.b16 %v1896, %v1888
        %v2665 = vpack.c.b16 %v1905, %v1897
        %v2666 = vpack.c.b16 %v1906, %v1898
        %v2667 = vpack.c.b16 %v1907, %v1899
        %v2668 = vpack.c.b16 %v1908, %v1900
        %v2669 = vpack.c.b16 %v1909, %v1901
        %v2670 = vpack.c.b16 %v1910, %v1902
        %v2671 = vpack.c.b16 %v1911, %v1903
        %v2672 = vpack.c.b16 %v1912, %v1904
        %v2673 = vpack.c.b16 %v1921, %v1913
        %v2674 = vpack.c.b16 %v1922, %v1914
        %v2675 = vpack.c.b16 %v1923, %v1915
        %v2676 = vpack.c.b16 %v1924, %v1916
        %v2677 = vpack.c.b16 %v1925, %v1917
        %v2678 = vpack.c.b16 %v1926, %v1918
        %v2679 = vpack.c.b16 %v1927, %v1919
        %v2680 = vpack.c.b16 %v1928, %v1920
        %v2681 = vpack.c.b16 %v1937, %v1929
        %v2682 = vpack.c.b16 %v1938, %v1930
        %v2683 = vpack.c.b16 %v1939, %v1931
        %v2684 = vpack.c.b16 %v1940, %v1932
        %v2685 = vpack.c.b16 %v1941, %v1933
        %v2686 = vpack.c.b16 %v1942, %v1934
        %v2687 = vpack.c.b16 %v1943, %v1935
        %v2688 = vpack.c.b16 %v1944, %v1936
        %v2689 = vpack.c.b16 %v1953, %v1945
        %v2690 = vpack.c.b16 %v1954, %v1946
        %v2691 = vpack.c.b16 %v1955, %v1947
        %v2692 = vpack.c.b16 %v1956, %v1948
        %v2693 = vpack.c.b16 %v1957, %v1949
        %v2694 = vpack.c.b16 %v1958, %v1950
        %v2695 = vpack.c.b16 %v1959, %v1951
        %v2696 = vpack.c.b16 %v1960, %v1952
        %v2697 = vpack.c.b16 %v1969, %v1961
        %v2698 = vpack.c.b16 %v1970, %v1962
        %v2699 = vpack.c.b16 %v1971, %v1963
        %v2700 = vpack.c.b16 %v1972, %v1964
        %v2701 = vpack.c.b16 %v1973, %v1965
        %v2702 = vpack.c.b16 %v1974, %v1966
        %v2703 = vpack.c.b16 %v1975, %v1967
        %v2704 = vpack.c.b16 %v1976, %v1968
        %v2705 = vpack.c.b16 %v1985, %v1977
        %v2706 = vpack.c.b16 %v1986, %v1978
        %v2707 = vpack.c.b16 %v1987, %v1979
        %v2708 = vpack.c.b16 %v1988, %v1980
        %v2709 = vpack.c.b16 %v1989, %v1981
        %v2710 = vpack.c.b16 %v1990, %v1982
        %v2711 = vpack.c.b16 %v1991, %v1983
        %v2712 = vpack.c.b16 %v1992, %v1984
        %v2713 = vpack.c.b16 %v2001, %v1993
        %v2714 = vpack.c.b16 %v2002, %v1994
        %v2715 = vpack.c.b16 %v2003, %v1995
        %v2716 = vpack.c.b16 %v2004, %v1996
        %v2717 = vpack.c.b16 %v2005, %v1997
        %v2718 = vpack.c.b16 %v2006, %v1998
        %v2719 = vpack.c.b16 %v2007, %v1999
        %v2720 = vpack.c.b16 %v2008, %v2000
        %v2721 = vpack.c.b16 %v2017, %v2009
        %v2722 = vpack.c.b16 %v2018, %v2010
        %v2723 = vpack.c.b16 %v2019, %v2011
        %v2724 = vpack.c.b16 %v2020, %v2012
        %v2725 = vpack.c.b16 %v2021, %v2013
        %v2726 = vpack.c.b16 %v2022, %v2014
        %v2727 = vpack.c.b16 %v2023, %v2015
        %v2728 = vpack.c.b16 %v2024, %v2016
        %v2729 = vpack.c.b16 %v2033, %v2025
        %v2730 = vpack.c.b16 %v2034, %v2026
        %v2731 = vpack.c.b16 %v2035, %v2027
        %v2732 = vpack.c.b16 %v2036, %v2028
        %v2733 = vpack.c.b16 %v2037, %v2029
        %v2734 = vpack.c.b16 %v2038, %v2030
        %v2735 = vpack.c.b16 %v2039, %v2031
        %v2736 = vpack.c.b16 %v2040, %v2032
        %v2737 = vpack.c.b16 %v2049, %v2041
        %v2738 = vpack.c.b16 %v2050, %v2042
        %v2739 = vpack.c.b16 %v2051, %v2043
        %v2740 = vpack.c.b16 %v2052, %v2044
        %v2741 = vpack.c.b16 %v2053, %v2045
        %v2742 = vpack.c.b16 %v2054, %v2046
        %v2743 = vpack.c.b16 %v2055, %v2047
        %v2744 = vpack.c.b16 %v2056, %v2048
        %v2745 = vpack.c.b16 %v2065, %v2057
        %v2746 = vpack.c.b16 %v2066, %v2058
        %v2747 = vpack.c.b16 %v2067, %v2059
        %v2748 = vpack.c.b16 %v2068, %v2060
        %v2749 = vpack.c.b16 %v2069, %v2061
        %v2750 = vpack.c.b16 %v2070, %v2062
        %v2751 = vpack.c.b16 %v2071, %v2063
        %v2752 = vpack.c.b16 %v2072, %v2064
        %v2753 = vpack.c.b16 %v2081, %v2073
        %v2754 = vpack.c.b16 %v2082, %v2074
        %v2755 = vpack.c.b16 %v2083, %v2075
        %v2756 = vpack.c.b16 %v2084, %v2076
        %v2757 = vpack.c.b16 %v2085, %v2077
        %v2758 = vpack.c.b16 %v2086, %v2078
        %v2759 = vpack.c.b16 %v2087, %v2079
        %v2760 = vpack.c.b16 %v2088, %v2080
        %v2761 = vpack.c.b16 %v2097, %v2089
        %v2762 = vpack.c.b16 %v2098, %v2090
        %v2763 = vpack.c.b16 %v2099, %v2091
        %v2764 = vpack.c.b16 %v2100, %v2092
        %v2765 = vpack.c.b16 %v2101, %v2093
        %v2766 = vpack.c.b16 %v2102, %v2094
        %v2767 = vpack.c.b16 %v2103, %v2095
        %v2768 = vpack.c.b16 %v2104, %v2096
        %v2769 = vpack.c.b16 %v2113, %v2105
        %v2770 = vpack.c.b16 %v2114, %v2106
        %v2771 = vpack.c.b16 %v2115, %v2107
        %v2772 = vpack.c.b16 %v2116, %v2108
        %v2773 = vpack.c.b16 %v2117, %v2109
        %v2774 = vpack.c.b16 %v2118, %v2110
        %v2775 = vpack.c.b16 %v2119, %v2111
        %v2776 = vpack.c.b16 %v2120, %v2112
        %v2777 = vpack.c.b16 %v2129, %v2121
        %v2778 = vpack.c.b16 %v2130, %v2122
        %v2779 = vpack.c.b16 %v2131, %v2123
        %v2780 = vpack.c.b16 %v2132, %v2124
        %v2781 = vpack.c.b16 %v2133, %v2125
        %v2782 = vpack.c.b16 %v2134, %v2126
        %v2783 = vpack.c.b16 %v2135, %v2127
        %v2784 = vpack.c.b16 %v2136, %v2128
        %v2785 = vpack.c.b16 %v2145, %v2137
        %v2786 = vpack.c.b16 %v2146, %v2138
        %v2787 = vpack.c.b16 %v2147, %v2139
        %v2788 = vpack.c.b16 %v2148, %v2140
        %v2789 = vpack.c.b16 %v2149, %v2141
        %v2790 = vpack.c.b16 %v2150, %v2142
        %v2791 = vpack.c.b16 %v2151, %v2143
        %v2792 = vpack.c.b16 %v2152, %v2144
        %v2793 = vpack.c.b16 %v2161, %v2153
        %v2794 = vpack.c.b16 %v2162, %v2154
        %v2795 = vpack.c.b16 %v2163, %v2155
        %v2796 = vpack.c.b16 %v2164, %v2156
        %v2797 = vpack.c.b16 %v2165, %v2157
        %v2798 = vpack.c.b16 %v2166, %v2158
        %v2799 = vpack.c.b16 %v2167, %v2159
        %v2800 = vpack.c.b16 %v2168, %v2160
        %v2801 = vpack.c.b16 %v2177, %v2169
        %v2802 = vpack.c.b16 %v2178, %v2170
        %v2803 = vpack.c.b16 %v2179, %v2171
        %v2804 = vpack.c.b16 %v2180, %v2172
        %v2805 = vpack.c.b16 %v2181, %v2173
        %v2806 = vpack.c.b16 %v2182, %v2174
        %v2807 = vpack.c.b16 %v2183, %v2175
        %v2808 = vpack.c.b16 %v2184, %v2176
        %v2809 = vpack.c.b16 %v2193, %v2185
        %v2810 = vpack.c.b16 %v2194, %v2186
        %v2811 = vpack.c.b16 %v2195, %v2187
        %v2812 = vpack.c.b16 %v2196, %v2188
        %v2813 = vpack.c.b16 %v2197, %v2189
        %v2814 = vpack.c.b16 %v2198, %v2190
        %v2815 = vpack.c.b16 %v2199, %v2191
        %v2816 = vpack.c.b16 %v2200, %v2192
        %v2817 = vpack.c.b16 %v2209, %v2201
        %v2818 = vpack.c.b16 %v2210, %v2202
        %v2819 = vpack.c.b16 %v2211, %v2203
        %v2820 = vpack.c.b16 %v2212, %v2204
        %v2821 = vpack.c.b16 %v2213, %v2205
        %v2822 = vpack.c.b16 %v2214, %v2206
        %v2823 = vpack.c.b16 %v2215, %v2207
        %v2824 = vpack.c.b16 %v2216, %v2208
        %v2825 = vpack.c.b16 %v2225, %v2217
        %v2826 = vpack.c.b16 %v2226, %v2218
        %v2827 = vpack.c.b16 %v2227, %v2219
        %v2828 = vpack.c.b16 %v2228, %v2220
        %v2829 = vpack.c.b16 %v2229, %v2221
        %v2830 = vpack.c.b16 %v2230, %v2222
        %v2831 = vpack.c.b16 %v2231, %v2223
        %v2832 = vpack.c.b16 %v2232, %v2224
        %v2833 = vpack.c.b16 %v2241, %v2233
        %v2834 = vpack.c.b16 %v2242, %v2234
        %v2835 = vpack.c.b16 %v2243, %v2235
        %v2836 = vpack.c.b16 %v2244, %v2236
        %v2837 = vpack.c.b16 %v2245, %v2237
        %v2838 = vpack.c.b16 %v2246, %v2238
        %v2839 = vpack.c.b16 %v2247, %v2239
        %v2840 = vpack.c.b16 %v2248, %v2240
        %v2841 = vpack.c.b16 %v2257, %v2249
        %v2842 = vpack.c.b16 %v2258, %v2250
        %v2843 = vpack.c.b16 %v2259, %v2251
        %v2844 = vpack.c.b16 %v2260, %v2252
        %v2845 = vpack.c.b16 %v2261, %v2253
        %v2846 = vpack.c.b16 %v2262, %v2254
        %v2847 = vpack.c.b16 %v2263, %v2255
        %v2848 = vpack.c.b16 %v2264, %v2256
        %v2849 = vpack.c.b16 %v2273, %v2265
        %v2850 = vpack.c.b16 %v2274, %v2266
        %v2851 = vpack.c.b16 %v2275, %v2267
        %v2852 = vpack.c.b16 %v2276, %v2268
        %v2853 = vpack.c.b16 %v2277, %v2269
        %v2854 = vpack.c.b16 %v2278, %v2270
        %v2855 = vpack.c.b16 %v2279, %v2271
        %v2856 = vpack.c.b16 %v2280, %v2272
        %v2857 = vpack.c.b16 %v2289, %v2281
        %v2858 = vpack.c.b16 %v2290, %v2282
        %v2859 = vpack.c.b16 %v2291, %v2283
        %v2860 = vpack.c.b16 %v2292, %v2284
        %v2861 = vpack.c.b16 %v2293, %v2285
        %v2862 = vpack.c.b16 %v2294, %v2286
        %v2863 = vpack.c.b16 %v2295, %v2287
        %v2864 = vpack.c.b16 %v2296, %v2288
        %v2865 = vpack.c.b16 %v2305, %v2297
        %v2866 = vpack.c.b16 %v2306, %v2298
        %v2867 = vpack.c.b16 %v2307, %v2299
        %v2868 = vpack.c.b16 %v2308, %v2300
        %v2869 = vpack.c.b16 %v2309, %v2301
        %v2870 = vpack.c.b16 %v2310, %v2302
        %v2871 = vpack.c.b16 %v2311, %v2303
        %v2872 = vpack.c.b16 %v2312, %v2304
        %v2873 = vpack.c.b16 %v2321, %v2313
        %v2874 = vpack.c.b16 %v2322, %v2314
        %v2875 = vpack.c.b16 %v2323, %v2315
        %v2876 = vpack.c.b16 %v2324, %v2316
        %v2877 = vpack.c.b16 %v2325, %v2317
        %v2878 = vpack.c.b16 %v2326, %v2318
        %v2879 = vpack.c.b16 %v2327, %v2319
        %v2880 = vpack.c.b16 %v2328, %v2320
        %v2881 = vpack.c.b16 %v2337, %v2329
        %v2882 = vpack.c.b16 %v2338, %v2330
        %v2883 = vpack.c.b16 %v2339, %v2331
        %v2884 = vpack.c.b16 %v2340, %v2332
        %v2885 = vpack.c.b16 %v2341, %v2333
        %v2886 = vpack.c.b16 %v2342, %v2334
        %v2887 = vpack.c.b16 %v2343, %v2335
        %v2888 = vpack.c.b16 %v2344, %v2336
        %v2889 = vpack.c.b16 %v2353, %v2345
        %v2890 = vpack.c.b16 %v2354, %v2346
        %v2891 = vpack.c.b16 %v2355, %v2347
        %v2892 = vpack.c.b16 %v2356, %v2348
        %v2893 = vpack.c.b16 %v2357, %v2349
        %v2894 = vpack.c.b16 %v2358, %v2350
        %v2895 = vpack.c.b16 %v2359, %v2351
        %v2896 = vpack.c.b16 %v2360, %v2352
        %v2897 = vpack.c.b16 %v2369, %v2361
        %v2898 = vpack.c.b16 %v2370, %v2362
        %v2899 = vpack.c.b16 %v2371, %v2363
        %v2900 = vpack.c.b16 %v2372, %v2364
        %v2901 = vpack.c.b16 %v2373, %v2365
        %v2902 = vpack.c.b16 %v2374, %v2366
        %v2903 = vpack.c.b16 %v2375, %v2367
        %v2904 = vpack.c.b16 %v2376, %v2368
        %v2905 = vpack.c.b16 %v2385, %v2377
        %v2906 = vpack.c.b16 %v2386, %v2378
        %v2907 = vpack.c.b16 %v2387, %v2379
        %v2908 = vpack.c.b16 %v2388, %v2380
        %v2909 = vpack.c.b16 %v2389, %v2381
        %v2910 = vpack.c.b16 %v2390, %v2382
        %v2911 = vpack.c.b16 %v2391, %v2383
        %v2912 = vpack.c.b16 %v2392, %v2384
        %v2913 = vpack.c.b16 %v2401, %v2393
        %v2914 = vpack.c.b16 %v2402, %v2394
        %v2915 = vpack.c.b16 %v2403, %v2395
        %v2916 = vpack.c.b16 %v2404, %v2396
        %v2917 = vpack.c.b16 %v2405, %v2397
        %v2918 = vpack.c.b16 %v2406, %v2398
        %v2919 = vpack.c.b16 %v2407, %v2399
        %v2920 = vpack.c.b16 %v2408, %v2400
        %3433 = vmatprep.subr.bf16.mxu0 %v2410
        %3434 = vmatpush1.bf16.msra.mxu0 %v2409
        %3435 = vmatprep.subr.bf16.mxu0 %v2418
        %3436 = vmatpush1.bf16.msra.mxu0 %v2417
        %3437 = vmatprep.subr.bf16.mxu0 %v2426
        %3438 = vmatpush1.bf16.msra.mxu0 %v2425
        %3439 = vmatprep.subr.bf16.mxu0 %v2434
        %3440 = vmatpush1.bf16.msra.mxu0 %v2433
        %3441 = vmatprep.subr.bf16.mxu0 %v2442
        %3442 = vmatpush1.bf16.msra.mxu0 %v2441
        %3443 = vmatprep.subr.bf16.mxu0 %v2450
        %3444 = vmatpush1.bf16.msra.mxu0 %v2449
        %3445 = vmatprep.subr.bf16.mxu0 %v2458
        %3446 = vmatpush1.bf16.msra.mxu0 %v2457
        %3447 = vmatprep.subr.bf16.mxu0 %v2466
        %3448 = vmatpush1.bf16.msra.mxu0 %v2465
        %3449 = vmatprep.subr.bf16.mxu0 %v2474
        %3450 = vmatpush1.bf16.msra.mxu0 %v2473
        %3451 = vmatprep.subr.bf16.mxu0 %v2482
        %3452 = vmatpush1.bf16.msra.mxu0 %v2481
        %3453 = vmatprep.subr.bf16.mxu0 %v2490
        %3454 = vmatpush1.bf16.msra.mxu0 %v2489
        %3455 = vmatprep.subr.bf16.mxu0 %v2498
        %3456 = vmatpush1.bf16.msra.mxu0 %v2497
        %3457 = vmatprep.subr.bf16.mxu0 %v2506
        %3458 = vmatpush1.bf16.msra.mxu0 %v2505
        %3459 = vmatprep.subr.bf16.mxu0 %v2514
        %3460 = vmatpush1.bf16.msra.mxu0 %v2513
        %3461 = vmatprep.subr.bf16.mxu0 %v2522
        %3462 = vmatpush1.bf16.msra.mxu0 %v2521
        %3463 = vmatprep.subr.bf16.mxu0 %v2530
        %3464 = vmatpush1.bf16.msra.mxu0 %v2529
        %3465 = vmatprep.mubr.bf16.mxu0 %v858
        %3466 = vmatmul.mubr.bf16.gmra.mrb[0].mxu0 %v857
        %v3467 = vpop.f32.mrb[0].mxu0
        %v3468 = vadd.f32 0.0, %v3467
        %v3469 = vpop.f32.mrb[0].mxu0
        %v3470 = vadd.f32 0.0, %v3469
        %v3471 = vpop.f32.mrb[0].mxu0
        %v3472 = vadd.f32 0.0, %v3471
        %v3473 = vpop.f32.mrb[0].mxu0
        %v3474 = vadd.f32 0.0, %v3473
        %3475 = vdwg.mxu0
        %3476 = vmatprep.subr.bf16.mxu0 %v2538
        %3477 = vmatpush1.bf16.msra.mxu0 %v2537
        %3478 = vmatprep.subr.bf16.mxu0 %v2546
        %3479 = vmatpush1.bf16.msra.mxu0 %v2545
        %3480 = vmatprep.subr.bf16.mxu0 %v2554
        %3481 = vmatpush1.bf16.msra.mxu0 %v2553
        %3482 = vmatprep.subr.bf16.mxu0 %v2562
        %3483 = vmatpush1.bf16.msra.mxu0 %v2561
        %3484 = vmatprep.subr.bf16.mxu0 %v2570
        %3485 = vmatpush1.bf16.msra.mxu0 %v2569
        %3486 = vmatprep.subr.bf16.mxu0 %v2578
        %3487 = vmatpush1.bf16.msra.mxu0 %v2577
        %3488 = vmatprep.subr.bf16.mxu0 %v2586
        %3489 = vmatpush1.bf16.msra.mxu0 %v2585
        %3490 = vmatprep.subr.bf16.mxu0 %v2594
        %3491 = vmatpush1.bf16.msra.mxu0 %v2593
        %3492 = vmatprep.subr.bf16.mxu0 %v2602
        %3493 = vmatpush1.bf16.msra.mxu0 %v2601
        %3494 = vmatprep.subr.bf16.mxu0 %v2610
        %3495 = vmatpush1.bf16.msra.mxu0 %v2609
        %3496 = vmatprep.subr.bf16.mxu0 %v2618
        %3497 = vmatpush1.bf16.msra.mxu0 %v2617
        %3498 = vmatprep.subr.bf16.mxu0 %v2626
        %3499 = vmatpush1.bf16.msra.mxu0 %v2625
        %3500 = vmatprep.subr.bf16.mxu0 %v2634
        %3501 = vmatpush1.bf16.msra.mxu0 %v2633
        %3502 = vmatprep.subr.bf16.mxu0 %v2642
        %3503 = vmatpush1.bf16.msra.mxu0 %v2641
        %3504 = vmatprep.subr.bf16.mxu0 %v2650
        %3505 = vmatpush1.bf16.msra.mxu0 %v2649
        %3506 = vmatprep.subr.bf16.mxu0 %v2658
        %3507 = vmatpush1.bf16.msra.mxu0 %v2657
        %3508 = vmatprep.mubr.bf16.mxu0 %v860
        %3509 = vmatmul.mubr.bf16.gmra.mrb[0].mxu0 %v859
        %v3510 = vpop.f32.mrb[0].mxu0
        %v3511 = vadd.f32 %v3468, %v3510
        %v3512 = vpop.f32.mrb[0].mxu0
        %v3513 = vadd.f32 %v3470, %v3512
        %v3514 = vpop.f32.mrb[0].mxu0
        %v3515 = vadd.f32 %v3472, %v3514
        %v3516 = vpop.f32.mrb[0].mxu0
        %v3517 = vadd.f32 %v3474, %v3516
        %3518 = vdwg.mxu0
        %3519 = vmatprep.subr.bf16.mxu0 %v2666
        %3520 = vmatpush1.bf16.msra.mxu0 %v2665
        %3521 = vmatprep.subr.bf16.mxu0 %v2674
        %3522 = vmatpush1.bf16.msra.mxu0 %v2673
        %3523 = vmatprep.subr.bf16.mxu0 %v2682
        %3524 = vmatpush1.bf16.msra.mxu0 %v2681
        %3525 = vmatprep.subr.bf16.mxu0 %v2690
        %3526 = vmatpush1.bf16.msra.mxu0 %v2689
        %3527 = vmatprep.subr.bf16.mxu0 %v2698
        %3528 = vmatpush1.bf16.msra.mxu0 %v2697
        %3529 = vmatprep.subr.bf16.mxu0 %v2706
        %3530 = vmatpush1.bf16.msra.mxu0 %v2705
        %3531 = vmatprep.subr.bf16.mxu0 %v2714
        %3532 = vmatpush1.bf16.msra.mxu0 %v2713
        %3533 = vmatprep.subr.bf16.mxu0 %v2722
        %3534 = vmatpush1.bf16.msra.mxu0 %v2721
        %3535 = vmatprep.subr.bf16.mxu0 %v2730
        %3536 = vmatpush1.bf16.msra.mxu0 %v2729
        %3537 = vmatprep.subr.bf16.mxu0 %v2738
        %3538 = vmatpush1.bf16.msra.mxu0 %v2737
        %3539 = vmatprep.subr.bf16.mxu0 %v2746
        %3540 = vmatpush1.bf16.msra.mxu0 %v2745
        %3541 = vmatprep.subr.bf16.mxu0 %v2754
        %3542 = vmatpush1.bf16.msra.mxu0 %v2753
        %3543 = vmatprep.subr.bf16.mxu0 %v2762
        %3544 = vmatpush1.bf16.msra.mxu0 %v2761
        %3545 = vmatprep.subr.bf16.mxu0 %v2770
        %3546 = vmatpush1.bf16.msra.mxu0 %v2769
        %3547 = vmatprep.subr.bf16.mxu0 %v2778
        %3548 = vmatpush1.bf16.msra.mxu0 %v2777
        %3549 = vmatprep.subr.bf16.mxu0 %v2786
        %3550 = vmatpush1.bf16.msra.mxu0 %v2785
        %3551 = vmatprep.mubr.bf16.mxu0 %v862
        %3552 = vmatmul.mubr.bf16.gmra.mrb[0].mxu0 %v861
        %v3553 = vpop.f32.mrb[0].mxu0
        %v3554 = vadd.f32 %v3511, %v3553
        %v3555 = vpop.f32.mrb[0].mxu0
        %v3556 = vadd.f32 %v3513, %v3555
        %v3557 = vpop.f32.mrb[0].mxu0
        %v3558 = vadd.f32 %v3515, %v3557
        %v3559 = vpop.f32.mrb[0].mxu0
        %v3560 = vadd.f32 %v3517, %v3559
        %3561 = vdwg.mxu0
        %3562 = vmatprep.subr.bf16.mxu0 %v2794
        %3563 = vmatpush1.bf16.msra.mxu0 %v2793
        %3564 = vmatprep.subr.bf16.mxu0 %v2802
        %3565 = vmatpush1.bf16.msra.mxu0 %v2801
        %3566 = vmatprep.subr.bf16.mxu0 %v2810
        %3567 = vmatpush1.bf16.msra.mxu0 %v2809
        %3568 = vmatprep.subr.bf16.mxu0 %v2818
        %3569 = vmatpush1.bf16.msra.mxu0 %v2817
        %3570 = vmatprep.subr.bf16.mxu0 %v2826
        %3571 = vmatpush1.bf16.msra.mxu0 %v2825
        %3572 = vmatprep.subr.bf16.mxu0 %v2834
        %3573 = vmatpush1.bf16.msra.mxu0 %v2833
        %3574 = vmatprep.subr.bf16.mxu0 %v2842
        %3575 = vmatpush1.bf16.msra.mxu0 %v2841
        %3576 = vmatprep.subr.bf16.mxu0 %v2850
        %3577 = vmatpush1.bf16.msra.mxu0 %v2849
        %3578 = vmatprep.subr.bf16.mxu0 %v2858
        %3579 = vmatpush1.bf16.msra.mxu0 %v2857
        %3580 = vmatprep.subr.bf16.mxu0 %v2866
        %3581 = vmatpush1.bf16.msra.mxu0 %v2865
        %3582 = vmatprep.subr.bf16.mxu0 %v2874
        %3583 = vmatpush1.bf16.msra.mxu0 %v2873
        %3584 = vmatprep.subr.bf16.mxu0 %v2882
        %3585 = vmatpush1.bf16.msra.mxu0 %v2881
        %3586 = vmatprep.subr.bf16.mxu0 %v2890
        %3587 = vmatpush1.bf16.msra.mxu0 %v2889
        %3588 = vmatprep.subr.bf16.mxu0 %v2898
        %3589 = vmatpush1.bf16.msra.mxu0 %v2897
        %3590 = vmatprep.subr.bf16.mxu0 %v2906
        %3591 = vmatpush1.bf16.msra.mxu0 %v2905
        %3592 = vmatprep.subr.bf16.mxu0 %v2914
        %3593 = vmatpush1.bf16.msra.mxu0 %v2913
        %3594 = vmatprep.mubr.bf16.mxu0 %v864
        %3595 = vmatmul.mubr.bf16.gmra.mrb[0].mxu0 %v863
        %v3596 = vpop.f32.mrb[0].mxu0
        %v3597 = vadd.f32 %v3554, %v3596
        %v3598 = vpop.f32.mrb[0].mxu0
        %v3599 = vadd.f32 %v3556, %v3598
        %v3600 = vpop.f32.mrb[0].mxu0
        %v3601 = vadd.f32 %v3558, %v3600
        %v3602 = vpop.f32.mrb[0].mxu0
        %v3603 = vadd.f32 %v3560, %v3602
        %3604 = vdwg.mxu0
        %3605 = vmatprep.subr.bf16.mxu0 %v2412
        %3606 = vmatpush1.bf16.msra.mxu0 %v2411
        %3607 = vmatprep.subr.bf16.mxu0 %v2420
        %3608 = vmatpush1.bf16.msra.mxu0 %v2419
        %3609 = vmatprep.subr.bf16.mxu0 %v2428
        %3610 = vmatpush1.bf16.msra.mxu0 %v2427
        %3611 = vmatprep.subr.bf16.mxu0 %v2436
        %3612 = vmatpush1.bf16.msra.mxu0 %v2435
        %3613 = vmatprep.subr.bf16.mxu0 %v2444
        %3614 = vmatpush1.bf16.msra.mxu0 %v2443
        %3615 = vmatprep.subr.bf16.mxu0 %v2452
        %3616 = vmatpush1.bf16.msra.mxu0 %v2451
        %3617 = vmatprep.subr.bf16.mxu0 %v2460
        %3618 = vmatpush1.bf16.msra.mxu0 %v2459
        %3619 = vmatprep.subr.bf16.mxu0 %v2468
        %3620 = vmatpush1.bf16.msra.mxu0 %v2467
        %3621 = vmatprep.subr.bf16.mxu0 %v2476
        %3622 = vmatpush1.bf16.msra.mxu0 %v2475
        %3623 = vmatprep.subr.bf16.mxu0 %v2484
        %3624 = vmatpush1.bf16.msra.mxu0 %v2483
        %3625 = vmatprep.subr.bf16.mxu0 %v2492
        %3626 = vmatpush1.bf16.msra.mxu0 %v2491
        %3627 = vmatprep.subr.bf16.mxu0 %v2500
        %3628 = vmatpush1.bf16.msra.mxu0 %v2499
        %3629 = vmatprep.subr.bf16.mxu0 %v2508
        %3630 = vmatpush1.bf16.msra.mxu0 %v2507
        %3631 = vmatprep.subr.bf16.mxu0 %v2516
        %3632 = vmatpush1.bf16.msra.mxu0 %v2515
        %3633 = vmatprep.subr.bf16.mxu0 %v2524
        %3634 = vmatpush1.bf16.msra.mxu0 %v2523
        %3635 = vmatprep.subr.bf16.mxu0 %v2532
        %3636 = vmatpush1.bf16.msra.mxu0 %v2531
        %3637 = vmatprep.mubr.bf16.mxu0 %v858
        %3638 = vmatmul.mubr.bf16.gmra.mrb[0].mxu0 %v857
        %v3639 = vpop.f32.mrb[0].mxu0
        %v3640 = vadd.f32 0.0, %v3639
        %v3641 = vpop.f32.mrb[0].mxu0
        %v3642 = vadd.f32 0.0, %v3641
        %v3643 = vpop.f32.mrb[0].mxu0
        %v3644 = vadd.f32 0.0, %v3643
        %v3645 = vpop.f32.mrb[0].mxu0
        %v3646 = vadd.f32 0.0, %v3645
        %3647 = vdwg.mxu0
        %3648 = vmatprep.subr.bf16.mxu0 %v2540
        %3649 = vmatpush1.bf16.msra.mxu0 %v2539
        %3650 = vmatprep.subr.bf16.mxu0 %v2548
        %3651 = vmatpush1.bf16.msra.mxu0 %v2547
        %3652 = vmatprep.subr.bf16.mxu0 %v2556
        %3653 = vmatpush1.bf16.msra.mxu0 %v2555
        %3654 = vmatprep.subr.bf16.mxu0 %v2564
        %3655 = vmatpush1.bf16.msra.mxu0 %v2563
        %3656 = vmatprep.subr.bf16.mxu0 %v2572
        %3657 = vmatpush1.bf16.msra.mxu0 %v2571
        %3658 = vmatprep.subr.bf16.mxu0 %v2580
        %3659 = vmatpush1.bf16.msra.mxu0 %v2579
        %3660 = vmatprep.subr.bf16.mxu0 %v2588
        %3661 = vmatpush1.bf16.msra.mxu0 %v2587
        %3662 = vmatprep.subr.bf16.mxu0 %v2596
        %3663 = vmatpush1.bf16.msra.mxu0 %v2595
        %3664 = vmatprep.subr.bf16.mxu0 %v2604
        %3665 = vmatpush1.bf16.msra.mxu0 %v2603
        %3666 = vmatprep.subr.bf16.mxu0 %v2612
        %3667 = vmatpush1.bf16.msra.mxu0 %v2611
        %3668 = vmatprep.subr.bf16.mxu0 %v2620
        %3669 = vmatpush1.bf16.msra.mxu0 %v2619
        %3670 = vmatprep.subr.bf16.mxu0 %v2628
        %3671 = vmatpush1.bf16.msra.mxu0 %v2627
        %3672 = vmatprep.subr.bf16.mxu0 %v2636
        %3673 = vmatpush1.bf16.msra.mxu0 %v2635
        %3674 = vmatprep.subr.bf16.mxu0 %v2644
        %3675 = vmatpush1.bf16.msra.mxu0 %v2643
        %3676 = vmatprep.subr.bf16.mxu0 %v2652
        %3677 = vmatpush1.bf16.msra.mxu0 %v2651
        %3678 = vmatprep.subr.bf16.mxu0 %v2660
        %3679 = vmatpush1.bf16.msra.mxu0 %v2659
        %3680 = vmatprep.mubr.bf16.mxu0 %v860
        %3681 = vmatmul.mubr.bf16.gmra.mrb[0].mxu0 %v859
        %v3682 = vpop.f32.mrb[0].mxu0
        %v3683 = vadd.f32 %v3640, %v3682
        %v3684 = vpop.f32.mrb[0].mxu0
        %v3685 = vadd.f32 %v3642, %v3684
        %v3686 = vpop.f32.mrb[0].mxu0
        %v3687 = vadd.f32 %v3644, %v3686
        %v3688 = vpop.f32.mrb[0].mxu0
        %v3689 = vadd.f32 %v3646, %v3688
        %3690 = vdwg.mxu0
        %3691 = vmatprep.subr.bf16.mxu0 %v2668
        %3692 = vmatpush1.bf16.msra.mxu0 %v2667
        %3693 = vmatprep.subr.bf16.mxu0 %v2676
        %3694 = vmatpush1.bf16.msra.mxu0 %v2675
        %3695 = vmatprep.subr.bf16.mxu0 %v2684
        %3696 = vmatpush1.bf16.msra.mxu0 %v2683
        %3697 = vmatprep.subr.bf16.mxu0 %v2692
        %3698 = vmatpush1.bf16.msra.mxu0 %v2691
        %3699 = vmatprep.subr.bf16.mxu0 %v2700
        %3700 = vmatpush1.bf16.msra.mxu0 %v2699
        %3701 = vmatprep.subr.bf16.mxu0 %v2708
        %3702 = vmatpush1.bf16.msra.mxu0 %v2707
        %3703 = vmatprep.subr.bf16.mxu0 %v2716
        %3704 = vmatpush1.bf16.msra.mxu0 %v2715
        %3705 = vmatprep.subr.bf16.mxu0 %v2724
        %3706 = vmatpush1.bf16.msra.mxu0 %v2723
        %3707 = vmatprep.subr.bf16.mxu0 %v2732
        %3708 = vmatpush1.bf16.msra.mxu0 %v2731
        %3709 = vmatprep.subr.bf16.mxu0 %v2740
        %3710 = vmatpush1.bf16.msra.mxu0 %v2739
        %3711 = vmatprep.subr.bf16.mxu0 %v2748
        %3712 = vmatpush1.bf16.msra.mxu0 %v2747
        %3713 = vmatprep.subr.bf16.mxu0 %v2756
        %3714 = vmatpush1.bf16.msra.mxu0 %v2755
        %3715 = vmatprep.subr.bf16.mxu0 %v2764
        %3716 = vmatpush1.bf16.msra.mxu0 %v2763
        %3717 = vmatprep.subr.bf16.mxu0 %v2772
        %3718 = vmatpush1.bf16.msra.mxu0 %v2771
        %3719 = vmatprep.subr.bf16.mxu0 %v2780
        %3720 = vmatpush1.bf16.msra.mxu0 %v2779
        %3721 = vmatprep.subr.bf16.mxu0 %v2788
        %3722 = vmatpush1.bf16.msra.mxu0 %v2787
        %3723 = vmatprep.mubr.bf16.mxu0 %v862
        %3724 = vmatmul.mubr.bf16.gmra.mrb[0].mxu0 %v861
        %v3725 = vpop.f32.mrb[0].mxu0
        %v3726 = vadd.f32 %v3683, %v3725
        %v3727 = vpop.f32.mrb[0].mxu0
        %v3728 = vadd.f32 %v3685, %v3727
        %v3729 = vpop.f32.mrb[0].mxu0
        %v3730 = vadd.f32 %v3687, %v3729
        %v3731 = vpop.f32.mrb[0].mxu0
        %v3732 = vadd.f32 %v3689, %v3731
        %3733 = vdwg.mxu0
        %3734 = vmatprep.subr.bf16.mxu0 %v2796
        %3735 = vmatpush1.bf16.msra.mxu0 %v2795
        %3736 = vmatprep.subr.bf16.mxu0 %v2804
        %3737 = vmatpush1.bf16.msra.mxu0 %v2803
        %3738 = vmatprep.subr.bf16.mxu0 %v2812
        %3739 = vmatpush1.bf16.msra.mxu0 %v2811
        %3740 = vmatprep.subr.bf16.mxu0 %v2820
        %3741 = vmatpush1.bf16.msra.mxu0 %v2819
        %3742 = vmatprep.subr.bf16.mxu0 %v2828
        %3743 = vmatpush1.bf16.msra.mxu0 %v2827
        %3744 = vmatprep.subr.bf16.mxu0 %v2836
        %3745 = vmatpush1.bf16.msra.mxu0 %v2835
        %3746 = vmatprep.subr.bf16.mxu0 %v2844
        %3747 = vmatpush1.bf16.msra.mxu0 %v2843
        %3748 = vmatprep.subr.bf16.mxu0 %v2852
        %3749 = vmatpush1.bf16.msra.mxu0 %v2851
        %3750 = vmatprep.subr.bf16.mxu0 %v2860
        %3751 = vmatpush1.bf16.msra.mxu0 %v2859
        %3752 = vmatprep.subr.bf16.mxu0 %v2868
        %3753 = vmatpush1.bf16.msra.mxu0 %v2867
        %3754 = vmatprep.subr.bf16.mxu0 %v2876
        %3755 = vmatpush1.bf16.msra.mxu0 %v2875
        %3756 = vmatprep.subr.bf16.mxu0 %v2884
        %3757 = vmatpush1.bf16.msra.mxu0 %v2883
        %3758 = vmatprep.subr.bf16.mxu0 %v2892
        %3759 = vmatpush1.bf16.msra.mxu0 %v2891
        %3760 = vmatprep.subr.bf16.mxu0 %v2900
        %3761 = vmatpush1.bf16.msra.mxu0 %v2899
        %3762 = vmatprep.subr.bf16.mxu0 %v2908
        %3763 = vmatpush1.bf16.msra.mxu0 %v2907
        %3764 = vmatprep.subr.bf16.mxu0 %v2916
        %3765 = vmatpush1.bf16.msra.mxu0 %v2915
        %3766 = vmatprep.mubr.bf16.mxu0 %v864
        %3767 = vmatmul.mubr.bf16.gmra.mrb[0].mxu0 %v863
        %v3768 = vpop.f32.mrb[0].mxu0
        %v3769 = vadd.f32 %v3726, %v3768
        %v3770 = vpop.f32.mrb[0].mxu0
        %v3771 = vadd.f32 %v3728, %v3770
        %v3772 = vpop.f32.mrb[0].mxu0
        %v3773 = vadd.f32 %v3730, %v3772
        %v3774 = vpop.f32.mrb[0].mxu0
        %v3775 = vadd.f32 %v3732, %v3774
        %3776 = vdwg.mxu0
        %3777 = vmatprep.subr.bf16.mxu0 %v2414
        %3778 = vmatpush1.bf16.msra.mxu0 %v2413
        %3779 = vmatprep.subr.bf16.mxu0 %v2422
        %3780 = vmatpush1.bf16.msra.mxu0 %v2421
        %3781 = vmatprep.subr.bf16.mxu0 %v2430
        %3782 = vmatpush1.bf16.msra.mxu0 %v2429
        %3783 = vmatprep.subr.bf16.mxu0 %v2438
        %3784 = vmatpush1.bf16.msra.mxu0 %v2437
        %3785 = vmatprep.subr.bf16.mxu0 %v2446
        %3786 = vmatpush1.bf16.msra.mxu0 %v2445
        %3787 = vmatprep.subr.bf16.mxu0 %v2454
        %3788 = vmatpush1.bf16.msra.mxu0 %v2453
        %3789 = vmatprep.subr.bf16.mxu0 %v2462
        %3790 = vmatpush1.bf16.msra.mxu0 %v2461
        %3791 = vmatprep.subr.bf16.mxu0 %v2470
        %3792 = vmatpush1.bf16.msra.mxu0 %v2469
        %3793 = vmatprep.subr.bf16.mxu0 %v2478
        %3794 = vmatpush1.bf16.msra.mxu0 %v2477
        %3795 = vmatprep.subr.bf16.mxu0 %v2486
        %3796 = vmatpush1.bf16.msra.mxu0 %v2485
        %3797 = vmatprep.subr.bf16.mxu0 %v2494
        %3798 = vmatpush1.bf16.msra.mxu0 %v2493
        %3799 = vmatprep.subr.bf16.mxu0 %v2502
        %3800 = vmatpush1.bf16.msra.mxu0 %v2501
        %3801 = vmatprep.subr.bf16.mxu0 %v2510
        %3802 = vmatpush1.bf16.msra.mxu0 %v2509
        %3803 = vmatprep.subr.bf16.mxu0 %v2518
        %3804 = vmatpush1.bf16.msra.mxu0 %v2517
        %3805 = vmatprep.subr.bf16.mxu0 %v2526
        %3806 = vmatpush1.bf16.msra.mxu0 %v2525
        %3807 = vmatprep.subr.bf16.mxu0 %v2534
        %3808 = vmatpush1.bf16.msra.mxu0 %v2533
        %3809 = vmatprep.mubr.bf16.mxu0 %v858
        %3810 = vmatmul.mubr.bf16.gmra.mrb[0].mxu0 %v857
        %v3811 = vpop.f32.mrb[0].mxu0
        %v3812 = vadd.f32 0.0, %v3811
        %v3813 = vpop.f32.mrb[0].mxu0
        %v3814 = vadd.f32 0.0, %v3813
        %v3815 = vpop.f32.mrb[0].mxu0
        %v3816 = vadd.f32 0.0, %v3815
        %v3817 = vpop.f32.mrb[0].mxu0
        %v3818 = vadd.f32 0.0, %v3817
        %3819 = vdwg.mxu0
        %3820 = vmatprep.subr.bf16.mxu0 %v2542
        %3821 = vmatpush1.bf16.msra.mxu0 %v2541
        %3822 = vmatprep.subr.bf16.mxu0 %v2550
        %3823 = vmatpush1.bf16.msra.mxu0 %v2549
        %3824 = vmatprep.subr.bf16.mxu0 %v2558
        %3825 = vmatpush1.bf16.msra.mxu0 %v2557
        %3826 = vmatprep.subr.bf16.mxu0 %v2566
        %3827 = vmatpush1.bf16.msra.mxu0 %v2565
        %3828 = vmatprep.subr.bf16.mxu0 %v2574
        %3829 = vmatpush1.bf16.msra.mxu0 %v2573
        %3830 = vmatprep.subr.bf16.mxu0 %v2582
        %3831 = vmatpush1.bf16.msra.mxu0 %v2581
        %3832 = vmatprep.subr.bf16.mxu0 %v2590
        %3833 = vmatpush1.bf16.msra.mxu0 %v2589
        %3834 = vmatprep.subr.bf16.mxu0 %v2598
        %3835 = vmatpush1.bf16.msra.mxu0 %v2597
        %3836 = vmatprep.subr.bf16.mxu0 %v2606
        %3837 = vmatpush1.bf16.msra.mxu0 %v2605
        %3838 = vmatprep.subr.bf16.mxu0 %v2614
        %3839 = vmatpush1.bf16.msra.mxu0 %v2613
        %3840 = vmatprep.subr.bf16.mxu0 %v2622
        %3841 = vmatpush1.bf16.msra.mxu0 %v2621
        %3842 = vmatprep.subr.bf16.mxu0 %v2630
        %3843 = vmatpush1.bf16.msra.mxu0 %v2629
        %3844 = vmatprep.subr.bf16.mxu0 %v2638
        %3845 = vmatpush1.bf16.msra.mxu0 %v2637
        %3846 = vmatprep.subr.bf16.mxu0 %v2646
        %3847 = vmatpush1.bf16.msra.mxu0 %v2645
        %3848 = vmatprep.subr.bf16.mxu0 %v2654
        %3849 = vmatpush1.bf16.msra.mxu0 %v2653
        %3850 = vmatprep.subr.bf16.mxu0 %v2662
        %3851 = vmatpush1.bf16.msra.mxu0 %v2661
        %3852 = vmatprep.mubr.bf16.mxu0 %v860
        %3853 = vmatmul.mubr.bf16.gmra.mrb[0].mxu0 %v859
        %v3854 = vpop.f32.mrb[0].mxu0
        %v3855 = vadd.f32 %v3812, %v3854
        %v3856 = vpop.f32.mrb[0].mxu0
        %v3857 = vadd.f32 %v3814, %v3856
        %v3858 = vpop.f32.mrb[0].mxu0
        %v3859 = vadd.f32 %v3816, %v3858
        %v3860 = vpop.f32.mrb[0].mxu0
        %v3861 = vadd.f32 %v3818, %v3860
        %3862 = vdwg.mxu0
        %3863 = vmatprep.subr.bf16.mxu0 %v2670
        %3864 = vmatpush1.bf16.msra.mxu0 %v2669
        %3865 = vmatprep.subr.bf16.mxu0 %v2678
        %3866 = vmatpush1.bf16.msra.mxu0 %v2677
        %3867 = vmatprep.subr.bf16.mxu0 %v2686
        %3868 = vmatpush1.bf16.msra.mxu0 %v2685
        %3869 = vmatprep.subr.bf16.mxu0 %v2694
        %3870 = vmatpush1.bf16.msra.mxu0 %v2693
        %3871 = vmatprep.subr.bf16.mxu0 %v2702
        %3872 = vmatpush1.bf16.msra.mxu0 %v2701
        %3873 = vmatprep.subr.bf16.mxu0 %v2710
        %3874 = vmatpush1.bf16.msra.mxu0 %v2709
        %3875 = vmatprep.subr.bf16.mxu0 %v2718
        %3876 = vmatpush1.bf16.msra.mxu0 %v2717
        %3877 = vmatprep.subr.bf16.mxu0 %v2726
        %3878 = vmatpush1.bf16.msra.mxu0 %v2725
        %3879 = vmatprep.subr.bf16.mxu0 %v2734
        %3880 = vmatpush1.bf16.msra.mxu0 %v2733
        %3881 = vmatprep.subr.bf16.mxu0 %v2742
        %3882 = vmatpush1.bf16.msra.mxu0 %v2741
        %3883 = vmatprep.subr.bf16.mxu0 %v2750
        %3884 = vmatpush1.bf16.msra.mxu0 %v2749
        %3885 = vmatprep.subr.bf16.mxu0 %v2758
        %3886 = vmatpush1.bf16.msra.mxu0 %v2757
        %3887 = vmatprep.subr.bf16.mxu0 %v2766
        %3888 = vmatpush1.bf16.msra.mxu0 %v2765
        %3889 = vmatprep.subr.bf16.mxu0 %v2774
        %3890 = vmatpush1.bf16.msra.mxu0 %v2773
        %3891 = vmatprep.subr.bf16.mxu0 %v2782
        %3892 = vmatpush1.bf16.msra.mxu0 %v2781
        %3893 = vmatprep.subr.bf16.mxu0 %v2790
        %3894 = vmatpush1.bf16.msra.mxu0 %v2789
        %3895 = vmatprep.mubr.bf16.mxu0 %v862
        %3896 = vmatmul.mubr.bf16.gmra.mrb[0].mxu0 %v861
        %v3897 = vpop.f32.mrb[0].mxu0
        %v3898 = vadd.f32 %v3855, %v3897
        %v3899 = vpop.f32.mrb[0].mxu0
        %v3900 = vadd.f32 %v3857, %v3899
        %v3901 = vpop.f32.mrb[0].mxu0
        %v3902 = vadd.f32 %v3859, %v3901
        %v3903 = vpop.f32.mrb[0].mxu0
        %v3904 = vadd.f32 %v3861, %v3903
        %3905 = vdwg.mxu0
        %3906 = vmatprep.subr.bf16.mxu0 %v2798
        %3907 = vmatpush1.bf16.msra.mxu0 %v2797
        %3908 = vmatprep.subr.bf16.mxu0 %v2806
        %3909 = vmatpush1.bf16.msra.mxu0 %v2805
        %3910 = vmatprep.subr.bf16.mxu0 %v2814
        %3911 = vmatpush1.bf16.msra.mxu0 %v2813
        %3912 = vmatprep.subr.bf16.mxu0 %v2822
        %3913 = vmatpush1.bf16.msra.mxu0 %v2821
        %3914 = vmatprep.subr.bf16.mxu0 %v2830
        %3915 = vmatpush1.bf16.msra.mxu0 %v2829
        %3916 = vmatprep.subr.bf16.mxu0 %v2838
        %3917 = vmatpush1.bf16.msra.mxu0 %v2837
        %3918 = vmatprep.subr.bf16.mxu0 %v2846
        %3919 = vmatpush1.bf16.msra.mxu0 %v2845
        %3920 = vmatprep.subr.bf16.mxu0 %v2854
        %3921 = vmatpush1.bf16.msra.mxu0 %v2853
        %3922 = vmatprep.subr.bf16.mxu0 %v2862
        %3923 = vmatpush1.bf16.msra.mxu0 %v2861
        %3924 = vmatprep.subr.bf16.mxu0 %v2870
        %3925 = vmatpush1.bf16.msra.mxu0 %v2869
        %3926 = vmatprep.subr.bf16.mxu0 %v2878
        %3927 = vmatpush1.bf16.msra.mxu0 %v2877
        %3928 = vmatprep.subr.bf16.mxu0 %v2886
        %3929 = vmatpush1.bf16.msra.mxu0 %v2885
        %3930 = vmatprep.subr.bf16.mxu0 %v2894
        %3931 = vmatpush1.bf16.msra.mxu0 %v2893
        %3932 = vmatprep.subr.bf16.mxu0 %v2902
        %3933 = vmatpush1.bf16.msra.mxu0 %v2901
        %3934 = vmatprep.subr.bf16.mxu0 %v2910
        %3935 = vmatpush1.bf16.msra.mxu0 %v2909
        %3936 = vmatprep.subr.bf16.mxu0 %v2918
        %3937 = vmatpush1.bf16.msra.mxu0 %v2917
        %3938 = vmatprep.mubr.bf16.mxu0 %v864
        %3939 = vmatmul.mubr.bf16.gmra.mrb[0].mxu0 %v863
        %v3940 = vpop.f32.mrb[0].mxu0
        %v3941 = vadd.f32 %v3898, %v3940
        %v3942 = vpop.f32.mrb[0].mxu0
        %v3943 = vadd.f32 %v3900, %v3942
        %v3944 = vpop.f32.mrb[0].mxu0
        %v3945 = vadd.f32 %v3902, %v3944
        %v3946 = vpop.f32.mrb[0].mxu0
        %v3947 = vadd.f32 %v3904, %v3946
        %3948 = vdwg.mxu0
        %3949 = vmatprep.subr.bf16.mxu0 %v2416
        %3950 = vmatpush1.bf16.msra.mxu0 %v2415
        %3951 = vmatprep.subr.bf16.mxu0 %v2424
        %3952 = vmatpush1.bf16.msra.mxu0 %v2423
        %3953 = vmatprep.subr.bf16.mxu0 %v2432
        %3954 = vmatpush1.bf16.msra.mxu0 %v2431
        %3955 = vmatprep.subr.bf16.mxu0 %v2440
        %3956 = vmatpush1.bf16.msra.mxu0 %v2439
        %3957 = vmatprep.subr.bf16.mxu0 %v2448
        %3958 = vmatpush1.bf16.msra.mxu0 %v2447
        %3959 = vmatprep.subr.bf16.mxu0 %v2456
        %3960 = vmatpush1.bf16.msra.mxu0 %v2455
        %3961 = vmatprep.subr.bf16.mxu0 %v2464
        %3962 = vmatpush1.bf16.msra.mxu0 %v2463
        %3963 = vmatprep.subr.bf16.mxu0 %v2472
        %3964 = vmatpush1.bf16.msra.mxu0 %v2471
        %3965 = vmatprep.subr.bf16.mxu0 %v2480
        %3966 = vmatpush1.bf16.msra.mxu0 %v2479
        %3967 = vmatprep.subr.bf16.mxu0 %v2488
        %3968 = vmatpush1.bf16.msra.mxu0 %v2487
        %3969 = vmatprep.subr.bf16.mxu0 %v2496
        %3970 = vmatpush1.bf16.msra.mxu0 %v2495
        %3971 = vmatprep.subr.bf16.mxu0 %v2504
        %3972 = vmatpush1.bf16.msra.mxu0 %v2503
        %3973 = vmatprep.subr.bf16.mxu0 %v2512
        %3974 = vmatpush1.bf16.msra.mxu0 %v2511
        %3975 = vmatprep.subr.bf16.mxu0 %v2520
        %3976 = vmatpush1.bf16.msra.mxu0 %v2519
        %3977 = vmatprep.subr.bf16.mxu0 %v2528
        %3978 = vmatpush1.bf16.msra.mxu0 %v2527
        %3979 = vmatprep.subr.bf16.mxu0 %v2536
        %3980 = vmatpush1.bf16.msra.mxu0 %v2535
        %3981 = vmatprep.mubr.bf16.mxu0 %v858
        %3982 = vmatmul.mubr.bf16.gmra.mrb[0].mxu0 %v857
        %v3983 = vpop.f32.mrb[0].mxu0
        %v3984 = vadd.f32 0.0, %v3983
        %v3985 = vpop.f32.mrb[0].mxu0
        %v3986 = vadd.f32 0.0, %v3985
        %v3987 = vpop.f32.mrb[0].mxu0
        %v3988 = vadd.f32 0.0, %v3987
        %v3989 = vpop.f32.mrb[0].mxu0
        %v3990 = vadd.f32 0.0, %v3989
        %3991 = vdwg.mxu0
        %3992 = vmatprep.subr.bf16.mxu0 %v2544
        %3993 = vmatpush1.bf16.msra.mxu0 %v2543
        %3994 = vmatprep.subr.bf16.mxu0 %v2552
        %3995 = vmatpush1.bf16.msra.mxu0 %v2551
        %3996 = vmatprep.subr.bf16.mxu0 %v2560
        %3997 = vmatpush1.bf16.msra.mxu0 %v2559
        %3998 = vmatprep.subr.bf16.mxu0 %v2568
        %3999 = vmatpush1.bf16.msra.mxu0 %v2567
        %4000 = vmatprep.subr.bf16.mxu0 %v2576
        %4001 = vmatpush1.bf16.msra.mxu0 %v2575
        %4002 = vmatprep.subr.bf16.mxu0 %v2584
        %4003 = vmatpush1.bf16.msra.mxu0 %v2583
        %4004 = vmatprep.subr.bf16.mxu0 %v2592
        %4005 = vmatpush1.bf16.msra.mxu0 %v2591
        %4006 = vmatprep.subr.bf16.mxu0 %v2600
        %4007 = vmatpush1.bf16.msra.mxu0 %v2599
        %4008 = vmatprep.subr.bf16.mxu0 %v2608
        %4009 = vmatpush1.bf16.msra.mxu0 %v2607
        %4010 = vmatprep.subr.bf16.mxu0 %v2616
        %4011 = vmatpush1.bf16.msra.mxu0 %v2615
        %4012 = vmatprep.subr.bf16.mxu0 %v2624
        %4013 = vmatpush1.bf16.msra.mxu0 %v2623
        %4014 = vmatprep.subr.bf16.mxu0 %v2632
        %4015 = vmatpush1.bf16.msra.mxu0 %v2631
        %4016 = vmatprep.subr.bf16.mxu0 %v2640
        %4017 = vmatpush1.bf16.msra.mxu0 %v2639
        %4018 = vmatprep.subr.bf16.mxu0 %v2648
        %4019 = vmatpush1.bf16.msra.mxu0 %v2647
        %4020 = vmatprep.subr.bf16.mxu0 %v2656
        %4021 = vmatpush1.bf16.msra.mxu0 %v2655
        %4022 = vmatprep.subr.bf16.mxu0 %v2664
        %4023 = vmatpush1.bf16.msra.mxu0 %v2663
        %4024 = vmatprep.mubr.bf16.mxu0 %v860
        %4025 = vmatmul.mubr.bf16.gmra.mrb[0].mxu0 %v859
        %v4026 = vpop.f32.mrb[0].mxu0
        %v4027 = vadd.f32 %v3984, %v4026
        %v4028 = vpop.f32.mrb[0].mxu0
        %v4029 = vadd.f32 %v3986, %v4028
        %v4030 = vpop.f32.mrb[0].mxu0
        %v4031 = vadd.f32 %v3988, %v4030
        %v4032 = vpop.f32.mrb[0].mxu0
        %v4033 = vadd.f32 %v3990, %v4032
        %4034 = vdwg.mxu0
        %4035 = vmatprep.subr.bf16.mxu0 %v2672
        %4036 = vmatpush1.bf16.msra.mxu0 %v2671
        %4037 = vmatprep.subr.bf16.mxu0 %v2680
        %4038 = vmatpush1.bf16.msra.mxu0 %v2679
        %4039 = vmatprep.subr.bf16.mxu0 %v2688
        %4040 = vmatpush1.bf16.msra.mxu0 %v2687
        %4041 = vmatprep.subr.bf16.mxu0 %v2696
        %4042 = vmatpush1.bf16.msra.mxu0 %v2695
        %4043 = vmatprep.subr.bf16.mxu0 %v2704
        %4044 = vmatpush1.bf16.msra.mxu0 %v2703
        %4045 = vmatprep.subr.bf16.mxu0 %v2712
        %4046 = vmatpush1.bf16.msra.mxu0 %v2711
        %4047 = vmatprep.subr.bf16.mxu0 %v2720
        %4048 = vmatpush1.bf16.msra.mxu0 %v2719
        %4049 = vmatprep.subr.bf16.mxu0 %v2728
        %4050 = vmatpush1.bf16.msra.mxu0 %v2727
        %4051 = vmatprep.subr.bf16.mxu0 %v2736
        %4052 = vmatpush1.bf16.msra.mxu0 %v2735
        %4053 = vmatprep.subr.bf16.mxu0 %v2744
        %4054 = vmatpush1.bf16.msra.mxu0 %v2743
        %4055 = vmatprep.subr.bf16.mxu0 %v2752
        %4056 = vmatpush1.bf16.msra.mxu0 %v2751
        %4057 = vmatprep.subr.bf16.mxu0 %v2760
        %4058 = vmatpush1.bf16.msra.mxu0 %v2759
        %4059 = vmatprep.subr.bf16.mxu0 %v2768
        %4060 = vmatpush1.bf16.msra.mxu0 %v2767
        %4061 = vmatprep.subr.bf16.mxu0 %v2776
        %4062 = vmatpush1.bf16.msra.mxu0 %v2775
        %4063 = vmatprep.subr.bf16.mxu0 %v2784
        %4064 = vmatpush1.bf16.msra.mxu0 %v2783
        %4065 = vmatprep.subr.bf16.mxu0 %v2792
        %4066 = vmatpush1.bf16.msra.mxu0 %v2791
        %4067 = vmatprep.mubr.bf16.mxu0 %v862
        %4068 = vmatmul.mubr.bf16.gmra.mrb[0].mxu0 %v861
        %v4069 = vpop.f32.mrb[0].mxu0
        %v4070 = vadd.f32 %v4027, %v4069
        %v4071 = vpop.f32.mrb[0].mxu0
        %v4072 = vadd.f32 %v4029, %v4071
        %v4073 = vpop.f32.mrb[0].mxu0
        %v4074 = vadd.f32 %v4031, %v4073
        %v4075 = vpop.f32.mrb[0].mxu0
        %v4076 = vadd.f32 %v4033, %v4075
        %4077 = vdwg.mxu0
        %4078 = vmatprep.subr.bf16.mxu0 %v2800
        %4079 = vmatpush1.bf16.msra.mxu0 %v2799
        %4080 = vmatprep.subr.bf16.mxu0 %v2808
        %4081 = vmatpush1.bf16.msra.mxu0 %v2807
        %4082 = vmatprep.subr.bf16.mxu0 %v2816
        %4083 = vmatpush1.bf16.msra.mxu0 %v2815
        %4084 = vmatprep.subr.bf16.mxu0 %v2824
        %4085 = vmatpush1.bf16.msra.mxu0 %v2823
        %4086 = vmatprep.subr.bf16.mxu0 %v2832
        %4087 = vmatpush1.bf16.msra.mxu0 %v2831
        %4088 = vmatprep.subr.bf16.mxu0 %v2840
        %4089 = vmatpush1.bf16.msra.mxu0 %v2839
        %4090 = vmatprep.subr.bf16.mxu0 %v2848
        %4091 = vmatpush1.bf16.msra.mxu0 %v2847
        %4092 = vmatprep.subr.bf16.mxu0 %v2856
        %4093 = vmatpush1.bf16.msra.mxu0 %v2855
        %4094 = vmatprep.subr.bf16.mxu0 %v2864
        %4095 = vmatpush1.bf16.msra.mxu0 %v2863
        %4096 = vmatprep.subr.bf16.mxu0 %v2872
        %4097 = vmatpush1.bf16.msra.mxu0 %v2871
        %4098 = vmatprep.subr.bf16.mxu0 %v2880
        %4099 = vmatpush1.bf16.msra.mxu0 %v2879
        %4100 = vmatprep.subr.bf16.mxu0 %v2888
        %4101 = vmatpush1.bf16.msra.mxu0 %v2887
        %4102 = vmatprep.subr.bf16.mxu0 %v2896
        %4103 = vmatpush1.bf16.msra.mxu0 %v2895
        %4104 = vmatprep.subr.bf16.mxu0 %v2904
        %4105 = vmatpush1.bf16.msra.mxu0 %v2903
        %4106 = vmatprep.subr.bf16.mxu0 %v2912
        %4107 = vmatpush1.bf16.msra.mxu0 %v2911
        %4108 = vmatprep.subr.bf16.mxu0 %v2920
        %4109 = vmatpush1.bf16.msra.mxu0 %v2919
        %4110 = vmatprep.mubr.bf16.mxu0 %v864
        %4111 = vmatmul.mubr.bf16.gmra.mrb[0].mxu0 %v863
        %v4112 = vpop.f32.mrb[0].mxu0
        %v4113 = vadd.f32 %v4070, %v4112
        %v4114 = vpop.f32.mrb[0].mxu0
        %v4115 = vadd.f32 %v4072, %v4114
        %v4116 = vpop.f32.mrb[0].mxu0
        %v4117 = vadd.f32 %v4074, %v4116
        %v4118 = vpop.f32.mrb[0].mxu0
        %v4119 = vadd.f32 %v4076, %v4118
        %4120 = vdwg.mxu0
        %v4121 = vmul.f32 %v3597, %v3597
        %v4122 = vmul.f32 %v3599, %v3599
        %v4123 = vmul.f32 %v3769, %v3769
        %v4124 = vmul.f32 %v3771, %v3771
        %v4125 = vmul.f32 %v3601, %v3601
        %v4126 = vmul.f32 %v3603, %v3603
        %v4127 = vmul.f32 %v3773, %v3773
        %v4128 = vmul.f32 %v3775, %v3775
        %v4129 = vmul.f32 %v3941, %v3941
        %v4130 = vmul.f32 %v3943, %v3943
        %v4131 = vmul.f32 %v4113, %v4113
        %v4132 = vmul.f32 %v4115, %v4115
        %v4133 = vmul.f32 %v3945, %v3945
        %v4134 = vmul.f32 %v3947, %v3947
        %v4135 = vmul.f32 %v4117, %v4117
        %v4136 = vmul.f32 %v4119, %v4119
        %v4137 = vadd.f32 %v4121, %v4129
        %v4138 = vadd.f32 %v4122, %v4130
        %v4139 = vadd.f32 %v4123, %v4131
        %v4140 = vadd.f32 %v4124, %v4132
        %v4141 = vadd.f32 %v4125, %v4133
        %v4142 = vadd.f32 %v4126, %v4134
        %v4143 = vadd.f32 %v4127, %v4135
        %v4144 = vadd.f32 %v4128, %v4136
        %v4145 = vrsqrt.pop %v4137
        %v4146 = vmul.f32 %v4137, %v4145
        %vm4147 = vcmp.eq.f32.partialorder %v4137, inf
        %v4148 = vsel %vm4147, %v4137, %v4146
        %vm4149 = vcmp.eq.f32.partialorder %v4137, 0.0
        %v4150 = vand.u32 %v4137, 2147483648
        %v4151 = vsel %vm4149, %v4150, %v4148
        %v4152 = vrsqrt.pop %v4138
        %v4153 = vmul.f32 %v4138, %v4152
        %vm4154 = vcmp.eq.f32.partialorder %v4138, inf
        %v4155 = vsel %vm4154, %v4138, %v4153
        %vm4156 = vcmp.eq.f32.partialorder %v4138, 0.0
        %v4157 = vand.u32 %v4138, 2147483648
        %v4158 = vsel %vm4156, %v4157, %v4155
        %v4159 = vrsqrt.pop %v4139
        %v4160 = vmul.f32 %v4139, %v4159
        %vm4161 = vcmp.eq.f32.partialorder %v4139, inf
        %v4162 = vsel %vm4161, %v4139, %v4160
        %vm4163 = vcmp.eq.f32.partialorder %v4139, 0.0
        %v4164 = vand.u32 %v4139, 2147483648
        %v4165 = vsel %vm4163, %v4164, %v4162
        %v4166 = vrsqrt.pop %v4140
        %v4167 = vmul.f32 %v4140, %v4166
        %vm4168 = vcmp.eq.f32.partialorder %v4140, inf
        %v4169 = vsel %vm4168, %v4140, %v4167
        %vm4170 = vcmp.eq.f32.partialorder %v4140, 0.0
        %v4171 = vand.u32 %v4140, 2147483648
        %v4172 = vsel %vm4170, %v4171, %v4169
        %v4173 = vrsqrt.pop %v4141
        %v4174 = vmul.f32 %v4141, %v4173
        %vm4175 = vcmp.eq.f32.partialorder %v4141, inf
        %v4176 = vsel %vm4175, %v4141, %v4174
        %vm4177 = vcmp.eq.f32.partialorder %v4141, 0.0
        %v4178 = vand.u32 %v4141, 2147483648
        %v4179 = vsel %vm4177, %v4178, %v4176
        %v4180 = vrsqrt.pop %v4142
        %v4181 = vmul.f32 %v4142, %v4180
        %vm4182 = vcmp.eq.f32.partialorder %v4142, inf
        %v4183 = vsel %vm4182, %v4142, %v4181
        %vm4184 = vcmp.eq.f32.partialorder %v4142, 0.0
        %v4185 = vand.u32 %v4142, 2147483648
        %v4186 = vsel %vm4184, %v4185, %v4183
        %v4187 = vrsqrt.pop %v4143
        %v4188 = vmul.f32 %v4143, %v4187
        %vm4189 = vcmp.eq.f32.partialorder %v4143, inf
        %v4190 = vsel %vm4189, %v4143, %v4188
        %vm4191 = vcmp.eq.f32.partialorder %v4143, 0.0
        %v4192 = vand.u32 %v4143, 2147483648
        %v4193 = vsel %vm4191, %v4192, %v4190
        %v4194 = vrsqrt.pop %v4144
        %v4195 = vmul.f32 %v4144, %v4194
        %vm4196 = vcmp.eq.f32.partialorder %v4144, inf
        %v4197 = vsel %vm4196, %v4144, %v4195
        %vm4198 = vcmp.eq.f32.partialorder %v4144, 0.0
        %v4199 = vand.u32 %v4144, 2147483648
        %v4200 = vsel %vm4198, %v4199, %v4197
        %v4201 = vld [vmem:[%s2] sm:$0xff]
        %v4202 = vld [vmem:[%s2 + $0x8] sm:$0xff]
        %v4203 = vld [vmem:[%s2 + $0x10] sm:$0xff]
        %v4204 = vld [vmem:[%s2 + $0x18] sm:$0xff]
        %v4205 = vld [vmem:[%s2 + $0x20] sm:$0xff]
        %v4206 = vld [vmem:[%s2 + $0x28] sm:$0xff]
        %v4207 = vld [vmem:[%s2 + $0x30] sm:$0xff]
        %v4208 = vld [vmem:[%s2 + $0x38] sm:$0xff]
        %v4209 = vld [vmem:[%s2 + $0x40] sm:$0xff]
        %v4210 = vld [vmem:[%s2 + $0x48] sm:$0xff]
        %v4211 = vld [vmem:[%s2 + $0x50] sm:$0xff]
        %v4212 = vld [vmem:[%s2 + $0x58] sm:$0xff]
        %v4213 = vld [vmem:[%s2 + $0x60] sm:$0xff]
        %v4214 = vld [vmem:[%s2 + $0x68] sm:$0xff]
        %v4215 = vld [vmem:[%s2 + $0x70] sm:$0xff]
        %v4216 = vld [vmem:[%s2 + $0x78] sm:$0xff]
        %v4217 = vld [vmem:[%s2 + $0x80] sm:$0xff]
        %v4218 = vld [vmem:[%s2 + $0x88] sm:$0xff]
        %v4219 = vld [vmem:[%s2 + $0x90] sm:$0xff]
        %v4220 = vld [vmem:[%s2 + $0x98] sm:$0xff]
        %v4221 = vld [vmem:[%s2 + $0xa0] sm:$0xff]
        %v4222 = vld [vmem:[%s2 + $0xa8] sm:$0xff]
        %v4223 = vld [vmem:[%s2 + $0xb0] sm:$0xff]
        %v4224 = vld [vmem:[%s2 + $0xb8] sm:$0xff]
        %v4225 = vld [vmem:[%s2 + $0xc0] sm:$0xff]
        %v4226 = vld [vmem:[%s2 + $0xc8] sm:$0xff]
        %v4227 = vld [vmem:[%s2 + $0xd0] sm:$0xff]
        %v4228 = vld [vmem:[%s2 + $0xd8] sm:$0xff]
        %v4229 = vld [vmem:[%s2 + $0xe0] sm:$0xff]
        %v4230 = vld [vmem:[%s2 + $0xe8] sm:$0xff]
        %v4231 = vld [vmem:[%s2 + $0xf0] sm:$0xff]
        %v4232 = vld [vmem:[%s2 + $0xf8] sm:$0xff]
        %v4233 = vld [vmem:[%s2 + $0x100] sm:$0xff]
        %v4234 = vld [vmem:[%s2 + $0x108] sm:$0xff]
        %v4235 = vld [vmem:[%s2 + $0x110] sm:$0xff]
        %v4236 = vld [vmem:[%s2 + $0x118] sm:$0xff]
        %v4237 = vld [vmem:[%s2 + $0x120] sm:$0xff]
        %v4238 = vld [vmem:[%s2 + $0x128] sm:$0xff]
        %v4239 = vld [vmem:[%s2 + $0x130] sm:$0xff]
        %v4240 = vld [vmem:[%s2 + $0x138] sm:$0xff]
        %v4241 = vld [vmem:[%s2 + $0x140] sm:$0xff]
        %v4242 = vld [vmem:[%s2 + $0x148] sm:$0xff]
        %v4243 = vld [vmem:[%s2 + $0x150] sm:$0xff]
        %v4244 = vld [vmem:[%s2 + $0x158] sm:$0xff]
        %v4245 = vld [vmem:[%s2 + $0x160] sm:$0xff]
        %v4246 = vld [vmem:[%s2 + $0x168] sm:$0xff]
        %v4247 = vld [vmem:[%s2 + $0x170] sm:$0xff]
        %v4248 = vld [vmem:[%s2 + $0x178] sm:$0xff]
        %v4249 = vld [vmem:[%s2 + $0x180] sm:$0xff]
        %v4250 = vld [vmem:[%s2 + $0x188] sm:$0xff]
        %v4251 = vld [vmem:[%s2 + $0x190] sm:$0xff]
        %v4252 = vld [vmem:[%s2 + $0x198] sm:$0xff]
        %v4253 = vld [vmem:[%s2 + $0x1a0] sm:$0xff]
        %v4254 = vld [vmem:[%s2 + $0x1a8] sm:$0xff]
        %v4255 = vld [vmem:[%s2 + $0x1b0] sm:$0xff]
        %v4256 = vld [vmem:[%s2 + $0x1b8] sm:$0xff]
        %v4257 = vld [vmem:[%s2 + $0x1c0] sm:$0xff]
        %v4258 = vld [vmem:[%s2 + $0x1c8] sm:$0xff]
        %v4259 = vld [vmem:[%s2 + $0x1d0] sm:$0xff]
        %v4260 = vld [vmem:[%s2 + $0x1d8] sm:$0xff]
        %v4261 = vld [vmem:[%s2 + $0x1e0] sm:$0xff]
        %v4262 = vld [vmem:[%s2 + $0x1e8] sm:$0xff]
        %v4263 = vld [vmem:[%s2 + $0x1f0] sm:$0xff]
        %v4264 = vld [vmem:[%s2 + $0x1f8] sm:$0xff]
        %4265 = vmatprep.subr.mxu0 0.0
        %4266 = vmatpush1.msra.mxu0 %v4201
        %4267 = vmatprep.subr.mxu0 0.0
        %4268 = vmatpush1.msra.mxu0 %v4202
        %4269 = vmatprep.subr.mxu0 0.0
        %4270 = vmatpush1.msra.mxu0 %v4203
        %4271 = vmatprep.subr.mxu0 0.0
        %4272 = vmatpush1.msra.mxu0 %v4204
        %4273 = vmatprep.subr.mxu0 0.0
        %4274 = vmatpush1.msra.mxu0 %v4205
        %4275 = vmatprep.subr.mxu0 0.0
        %4276 = vmatpush1.msra.mxu0 %v4206
        %4277 = vmatprep.subr.mxu0 0.0
        %4278 = vmatpush1.msra.mxu0 %v4207
        %4279 = vmatprep.subr.mxu0 0.0
        %4280 = vmatpush1.msra.mxu0 %v4208
        %4281 = vmatprep.subr.mxu0 0.0
        %4282 = vmatpush1.msra.mxu0 %v4209
        %4283 = vmatprep.subr.mxu0 0.0
        %4284 = vmatpush1.msra.mxu0 %v4210
        %4285 = vmatprep.subr.mxu0 0.0
        %4286 = vmatpush1.msra.mxu0 %v4211
        %4287 = vmatprep.subr.mxu0 0.0
        %4288 = vmatpush1.msra.mxu0 %v4212
        %4289 = vmatprep.subr.mxu0 0.0
        %4290 = vmatpush1.msra.mxu0 %v4213
        %4291 = vmatprep.subr.mxu0 0.0
        %4292 = vmatpush1.msra.mxu0 %v4214
        %4293 = vmatprep.subr.mxu0 0.0
        %4294 = vmatpush1.msra.mxu0 %v4215
        %4295 = vmatprep.subr.mxu0 0.0
        %4296 = vmatpush1.msra.mxu0 %v4216
        %4297 = vmatprep.subr.mxu0 0.0
        %4298 = vmatpush1.msra.mxu0 %v4217
        %4299 = vmatprep.subr.mxu0 0.0
        %4300 = vmatpush1.msra.mxu0 %v4218
        %4301 = vmatprep.subr.mxu0 0.0
        %4302 = vmatpush1.msra.mxu0 %v4219
        %4303 = vmatprep.subr.mxu0 0.0
        %4304 = vmatpush1.msra.mxu0 %v4220
        %4305 = vmatprep.subr.mxu0 0.0
        %4306 = vmatpush1.msra.mxu0 %v4221
        %4307 = vmatprep.subr.mxu0 0.0
        %4308 = vmatpush1.msra.mxu0 %v4222
        %4309 = vmatprep.subr.mxu0 0.0
        %4310 = vmatpush1.msra.mxu0 %v4223
        %4311 = vmatprep.subr.mxu0 0.0
        %4312 = vmatpush1.msra.mxu0 %v4224
        %4313 = vmatprep.subr.mxu0 0.0
        %4314 = vmatpush1.msra.mxu0 %v4225
        %4315 = vmatprep.subr.mxu0 0.0
        %4316 = vmatpush1.msra.mxu0 %v4226
        %4317 = vmatprep.subr.mxu0 0.0
        %4318 = vmatpush1.msra.mxu0 %v4227
        %4319 = vmatprep.subr.mxu0 0.0
        %4320 = vmatpush1.msra.mxu0 %v4228
        %4321 = vmatprep.subr.mxu0 0.0
        %4322 = vmatpush1.msra.mxu0 %v4229
        %4323 = vmatprep.subr.mxu0 0.0
        %4324 = vmatpush1.msra.mxu0 %v4230
        %4325 = vmatprep.subr.mxu0 0.0
        %4326 = vmatpush1.msra.mxu0 %v4231
        %4327 = vmatprep.subr.mxu0 0.0
        %4328 = vmatpush1.msra.mxu0 %v4232
        %4329 = vmatprep.mubr.f32.mxu0 %v4158
        %4330 = vmatmul.mubr.f32.gmra.mrb[0].mxu0 %v4151
        %v4331 = vpop.f32.mrb[0].mxu0
        %v4332 = vadd.f32 0.0, %v4331
        %v4333 = vpop.f32.mrb[0].mxu0
        %4334 = vmatprep.mubr.f32.mxu0 %v4186
        %4335 = vmatmul.mubr.f32.gmra.mrb[0].mxu0 %v4179
        %v4336 = vpop.f32.mrb[0].mxu0
        %v4337 = vadd.f32 0.0, %v4336
        %v4338 = vpop.f32.mrb[0].mxu0
        %4339 = vdwg.mxu0
        %4340 = vmatprep.subr.mxu0 0.0
        %4341 = vmatpush1.msra.mxu0 %v4233
        %4342 = vmatprep.subr.mxu0 0.0
        %4343 = vmatpush1.msra.mxu0 %v4234
        %4344 = vmatprep.subr.mxu0 0.0
        %4345 = vmatpush1.msra.mxu0 %v4235
        %4346 = vmatprep.subr.mxu0 0.0
        %4347 = vmatpush1.msra.mxu0 %v4236
        %4348 = vmatprep.subr.mxu0 0.0
        %4349 = vmatpush1.msra.mxu0 %v4237
        %4350 = vmatprep.subr.mxu0 0.0
        %4351 = vmatpush1.msra.mxu0 %v4238
        %4352 = vmatprep.subr.mxu0 0.0
        %4353 = vmatpush1.msra.mxu0 %v4239
        %4354 = vmatprep.subr.mxu0 0.0
        %4355 = vmatpush1.msra.mxu0 %v4240
        %4356 = vmatprep.subr.mxu0 0.0
        %4357 = vmatpush1.msra.mxu0 %v4241
        %4358 = vmatprep.subr.mxu0 0.0
        %4359 = vmatpush1.msra.mxu0 %v4242
        %4360 = vmatprep.subr.mxu0 0.0
        %4361 = vmatpush1.msra.mxu0 %v4243
        %4362 = vmatprep.subr.mxu0 0.0
        %4363 = vmatpush1.msra.mxu0 %v4244
        %4364 = vmatprep.subr.mxu0 0.0
        %4365 = vmatpush1.msra.mxu0 %v4245
        %4366 = vmatprep.subr.mxu0 0.0
        %4367 = vmatpush1.msra.mxu0 %v4246
        %4368 = vmatprep.subr.mxu0 0.0
        %4369 = vmatpush1.msra.mxu0 %v4247
        %4370 = vmatprep.subr.mxu0 0.0
        %4371 = vmatpush1.msra.mxu0 %v4248
        %4372 = vmatprep.subr.mxu0 0.0
        %4373 = vmatpush1.msra.mxu0 %v4249
        %4374 = vmatprep.subr.mxu0 0.0
        %4375 = vmatpush1.msra.mxu0 %v4250
        %4376 = vmatprep.subr.mxu0 0.0
        %4377 = vmatpush1.msra.mxu0 %v4251
        %4378 = vmatprep.subr.mxu0 0.0
        %4379 = vmatpush1.msra.mxu0 %v4252
        %4380 = vmatprep.subr.mxu0 0.0
        %4381 = vmatpush1.msra.mxu0 %v4253
        %4382 = vmatprep.subr.mxu0 0.0
        %4383 = vmatpush1.msra.mxu0 %v4254
        %4384 = vmatprep.subr.mxu0 0.0
        %4385 = vmatpush1.msra.mxu0 %v4255
        %4386 = vmatprep.subr.mxu0 0.0
        %4387 = vmatpush1.msra.mxu0 %v4256
        %4388 = vmatprep.subr.mxu0 0.0
        %4389 = vmatpush1.msra.mxu0 %v4257
        %4390 = vmatprep.subr.mxu0 0.0
        %4391 = vmatpush1.msra.mxu0 %v4258
        %4392 = vmatprep.subr.mxu0 0.0
        %4393 = vmatpush1.msra.mxu0 %v4259
        %4394 = vmatprep.subr.mxu0 0.0
        %4395 = vmatpush1.msra.mxu0 %v4260
        %4396 = vmatprep.subr.mxu0 0.0
        %4397 = vmatpush1.msra.mxu0 %v4261
        %4398 = vmatprep.subr.mxu0 0.0
        %4399 = vmatpush1.msra.mxu0 %v4262
        %4400 = vmatprep.subr.mxu0 0.0
        %4401 = vmatpush1.msra.mxu0 %v4263
        %4402 = vmatprep.subr.mxu0 0.0
        %4403 = vmatpush1.msra.mxu0 %v4264
        %4404 = vmatprep.mubr.f32.mxu0 %v4172
        %4405 = vmatmul.mubr.f32.gmra.mrb[0].mxu0 %v4165
        %v4406 = vpop.f32.mrb[0].mxu0
        %v4407 = vadd.f32 %v4332, %v4406
        %v4408 = vpop.f32.mrb[0].mxu0
        %4409 = vmatprep.mubr.f32.mxu0 %v4200
        %4410 = vmatmul.mubr.f32.gmra.mrb[0].mxu0 %v4193
        %v4411 = vpop.f32.mrb[0].mxu0
        %v4412 = vadd.f32 %v4337, %v4411
        %v4413 = vpop.f32.mrb[0].mxu0
        %4414 = vdwg.mxu0
        %v4415 = vmax.f32 %v4407, 1e-10
        %v4416 = vmax.f32 %v4412, 1e-10
        %v4417 = vlog2.pop %v4415
        %v4418 = vmul.f32 %v4417, 0.6931472
        %v4419 = vlog2.pop %v4416
        %v4420 = vmul.f32 %v4419, 0.6931472
        %v4421 = vld [vmem:[#allocation6] sm:$0xff]
        %v4422 = vld [vmem:[#allocation6 + $0x8] sm:$0xff]
        %v4423 = vld [vmem:[#allocation6 + $0x10] sm:$0xff]
        %v4424 = vld [vmem:[#allocation6 + $0x18] sm:$0xff]
        %v4425 = vld [vmem:[#allocation6 + $0x20] sm:$0xff]
        %v4426 = vld [vmem:[#allocation6 + $0x28] sm:$0xff]
        %v4427 = vld [vmem:[#allocation6 + $0x30] sm:$0xff]
        %v4428 = vld [vmem:[#allocation6 + $0x38] sm:$0xff]
        %v4429 = vld [vmem:[#allocation6 + $0x40] sm:$0xff]
        %v4430 = vld [vmem:[#allocation6 + $0x48] sm:$0xff]
        %v4431 = vld [vmem:[#allocation7] sm:$0x1]
        %v4433 = vlaneseq
        %v4434 = vshrl.u32 %v4433, 7
        %v4435 = vsub.s32 0, %v4434
        %v4436 = vrot.slane %v4431, %v4435
        %vm4438 = vcmask 654336
        %v4440 = vsel %vm4438, %v4418, 0
        %v4443 = vsel %vm4438, %v4420, 0
        %4445 = vmatprep.subr.mxu0 0.0
        %4446 = vmatpush1.msra.mxu0 %v4421
        %4447 = vmatprep.subr.mxu0 0.0
        %4448 = vmatpush1.msra.mxu0 %v4422
        %4449 = vmatprep.subr.mxu0 0.0
        %4450 = vmatpush1.msra.mxu0 %v4423
        %4451 = vmatprep.subr.mxu0 0.0
        %4452 = vmatpush1.msra.mxu0 %v4424
        %4453 = vmatprep.subr.mxu0 0.0
        %4454 = vmatpush1.msra.mxu0 %v4425
        %4455 = vmatprep.subr.mxu0 0.0
        %4456 = vmatpush1.msra.mxu0 %v4426
        %4457 = vmatprep.subr.mxu0 0.0
        %4458 = vmatpush1.msra.mxu0 %v4427
        %4459 = vmatprep.subr.mxu0 0.0
        %4460 = vmatpush1.msra.mxu0 %v4428
        %4461 = vmatprep.subr.mxu0 0.0
        %4462 = vmatpush1.msra.mxu0 %v4429
        %4463 = vmatprep.subr.mxu0 0.0
        %4464 = vmatpush1.msra.mxu0 %v4430
        %4465 = vmatprep.subr.mxu0 0.0
        %4466 = vmatpush1.msra.mxu0 0.0
        %4467 = vmatprep.subr.mxu0 0.0
        %4468 = vmatpush1.msra.mxu0 0.0
        %4469 = vmatprep.subr.mxu0 0.0
        %4470 = vmatpush1.msra.mxu0 0.0
        %4471 = vmatprep.subr.mxu0 0.0
        %4472 = vmatpush1.msra.mxu0 0.0
        %4473 = vmatprep.subr.mxu0 0.0
        %4474 = vmatpush1.msra.mxu0 0.0
        %4475 = vmatprep.subr.mxu0 0.0
        %4476 = vmatpush1.msra.mxu0 0.0
        %4477 = vmatprep.subr.mxu0 0.0
        %4478 = vmatpush1.msra.mxu0 0.0
        %4479 = vmatprep.subr.mxu0 0.0
        %4480 = vmatpush1.msra.mxu0 0.0
        %4481 = vmatprep.subr.mxu0 0.0
        %4482 = vmatpush1.msra.mxu0 0.0
        %4483 = vmatprep.subr.mxu0 0.0
        %4484 = vmatpush1.msra.mxu0 0.0
        %4485 = vmatprep.subr.mxu0 0.0
        %4486 = vmatpush1.msra.mxu0 0.0
        %4487 = vmatprep.subr.mxu0 0.0
        %4488 = vmatpush1.msra.mxu0 0.0
        %4489 = vmatprep.subr.mxu0 0.0
        %4490 = vmatpush1.msra.mxu0 0.0
        %4491 = vmatprep.subr.mxu0 0.0
        %4492 = vmatpush1.msra.mxu0 0.0
        %4493 = vmatprep.subr.mxu0 0.0
        %4494 = vmatpush1.msra.mxu0 0.0
        %4495 = vmatprep.subr.mxu0 0.0
        %4496 = vmatpush1.msra.mxu0 0.0
        %4497 = vmatprep.subr.mxu0 0.0
        %4498 = vmatpush1.msra.mxu0 0.0
        %4499 = vmatprep.subr.mxu0 0.0
        %4500 = vmatpush1.msra.mxu0 0.0
        %4501 = vmatprep.subr.mxu0 0.0
        %4502 = vmatpush1.msra.mxu0 0.0
        %4503 = vmatprep.subr.mxu0 0.0
        %4504 = vmatpush1.msra.mxu0 0.0
        %4505 = vmatprep.subr.mxu0 0.0
        %4506 = vmatpush1.msra.mxu0 0.0
        %4507 = vmatprep.subr.mxu0 0.0
        %4508 = vmatpush1.msra.mxu0 0.0
        %4509 = vmatprep.mubr.f32.mxu0 0.0
        %4510 = vmatmul.mubr.f32.gmra.mrb[0].mxu0 %v4440
        %v4511 = vpop.f32.mrb[0].mxu0
        %v4512 = vadd.f32 %v4436, %v4511
        %v4513 = vpop.f32.mrb[0].mxu0
        %4514 = vmatprep.mubr.f32.mxu0 0.0
        %4515 = vmatmul.mubr.f32.gmra.mrb[0].mxu0 %v4443
        %v4516 = vpop.f32.mrb[0].mxu0
        %v4517 = vadd.f32 %v4436, %v4516
        %v4518 = vpop.f32.mrb[0].mxu0
        %4519 = vdwg.mxu0
        %4520 = vxpose.xlu0.b32.start [1/16] %v4512, 128
        %4521 = vxpose.xlu0.b32.cont [2/16] %v4517, 128
        %4522 = vxpose.xlu0.b32.cont [3/16] 0.0, 128
        %4523 = vxpose.xlu0.b32.cont [4/16] 0.0, 128
        %4524 = vxpose.xlu0.b32.cont [5/16] 0.0, 128
        %4525 = vxpose.xlu0.b32.cont [6/16] 0.0, 128
        %4526 = vxpose.xlu0.b32.cont [7/16] 0.0, 128
        %4527 = vxpose.xlu0.b32.cont [8/16] 0.0, 128
        %4528 = vxpose.xlu0.b32.cont [9/16] 0.0, 128
        %4529 = vxpose.xlu0.b32.cont [10/16] 0.0, 128
        %4530 = vxpose.xlu0.b32.cont [11/16] 0.0, 128
        %4531 = vxpose.xlu0.b32.cont [12/16] 0.0, 128
        %4532 = vxpose.xlu0.b32.cont [13/16] 0.0, 128
        %4533 = vxpose.xlu0.b32.cont [14/16] 0.0, 128
        %4534 = vxpose.xlu0.b32.cont [15/16] 0.0, 128
        %4535 = vxpose.xlu0.b32.end [16/16] 0.0, 128
        %v4536 = vpop.trf.xlu0
        %v4537 = vpop.trf.xlu0
        %v4538 = vpop.trf.xlu0
        %v4539 = vpop.trf.xlu0
        %v4540 = vpop.trf.xlu0
        %v4541 = vpop.trf.xlu0
        %v4542 = vpop.trf.xlu0
        %v4543 = vpop.trf.xlu0
        %v4544 = vpop.trf.xlu0
        %v4545 = vpop.trf.xlu0
        %v4546 = vpop.trf.xlu0
        %v4547 = vpop.trf.xlu0
        %v4548 = vpop.trf.xlu0
        %v4549 = vpop.trf.xlu0
        %v4550 = vpop.trf.xlu0
        %v4551 = vpop.trf.xlu0
        %vm4552 = vcmask 130048
        %4553 = vst.msk [vmem:[%s312] sm:$0xff] %vm4552, %v4536
        %4554 = vst.msk [vmem:[%s312 + $0x8] sm:$0xff] %vm4552, %v4537
        %4555 = vst.msk [vmem:[%s312 + $0x10] sm:$0xff] %vm4552, %v4538
        %4556 = vst.msk [vmem:[%s312 + $0x18] sm:$0xff] %vm4552, %v4539
        %4557 = vst.msk [vmem:[%s312 + $0x20] sm:$0xff] %vm4552, %v4540
        %4558 = vst.msk [vmem:[%s312 + $0x28] sm:$0xff] %vm4552, %v4541
        %4559 = vst.msk [vmem:[%s312 + $0x30] sm:$0xff] %vm4552, %v4542
        %4560 = vst.msk [vmem:[%s312 + $0x38] sm:$0xff] %vm4552, %v4543
        %4561 = vst.msk [vmem:[%s312 + $0x40] sm:$0xff] %vm4552, %v4544
        %4562 = vst.msk [vmem:[%s312 + $0x48] sm:$0xff] %vm4552, %v4545
        %4563 = vst.msk [vmem:[%s312 + $0x50] sm:$0xff] %vm4552, %v4546
        %4564 = vst.msk [vmem:[%s312 + $0x58] sm:$0xff] %vm4552, %v4547
        %4565 = vst.msk [vmem:[%s312 + $0x60] sm:$0xff] %vm4552, %v4548
        %4566 = vst.msk [vmem:[%s312 + $0x68] sm:$0xff] %vm4552, %v4549
        %4567 = vst.msk [vmem:[%s312 + $0x70] sm:$0xff] %vm4552, %v4550
        %4568 = vst.msk [vmem:[%s312 + $0x78] sm:$0xff] %vm4552, %v4551
        %p4569 = scmp.lt.s32.totalorder %s25, 1
        %s4570 = scalar_select %p4569, %s25, 1
        %p4571 = scmp.lt.s32.totalorder %s26, 0
        %s4572 = scalar_select %p4571, %s26, 0
        %s4573 = smul.addr %s4570, 16
        %s4574 = sadd.s32 %s4572, %s4573
        %s4575 = smul.addr %s4574, 8
        %s4576 = scalar_lea.vmem %s5, %s4575
        // Predicated region
        $region57: #{tpu_custom_call.1} parent=39 // pred_check
          %p4577 = pneg %p165
        $region58: #{tpu_custom_call.1} parent=39 // pred_check_branch
          %4579 = sbr.rel (%p4577) target = $region60
        $region59: #{tpu_custom_call.1} parent=39 // pred_region
          _
        $region60: #{tpu_custom_call.1} parent=39 // pred_fallthru
          _
      $region40: #{tpu_custom_call.1} parent=5 // pred_fallthru
        _
      %p4580 = scmp.le.s32.totalorder 2, %s16
      // Predicated region
      $region61: #{tpu_custom_call.1} parent=5 // pred_check
        %p4581 = pneg %p4580
      $region62: #{tpu_custom_call.1} parent=5 // pred_check_branch
        %4583 = sbr.rel (%p4581) target = $region64
      $region63: #{tpu_custom_call.1} parent=5 // pred_region
        %s4584 = ssub.s32 %s16, 2
        // Predicated region
        $region65: #{tpu_custom_call.1} parent=63 // pred_check
          %p4585 = pneg %p171
        $region66: #{tpu_custom_call.1} parent=63 // pred_check_branch
          %4587 = sbr.rel (%p4585) target = $region68
        $region67: #{tpu_custom_call.1} parent=63 // pred_region
          %p4588 = scmp.lt.s32.totalorder %s27, 1
          %s4589 = scalar_select %p4588, %s27, 1
          %p4590 = scmp.lt.s32.totalorder %s28, 0
          %s4591 = scalar_select %p4590, %s28, 0
          %s4592 = smul.addr %s4589, 16
          %s4593 = sadd.s32 %s4591, %s4592
          %s4594 = smul.addr %s4593, 8
          %s4595 = scalar_lea.vmem %s5, %s4594
        $region68: #{tpu_custom_call.1} parent=63 // pred_fallthru
          _
      $region64: #{tpu_custom_call.1} parent=5 // pred_fallthru
        _
    $region6: #{tpu_custom_call.1} parent=1 // loop_footer
      %s20 = sadd.s32 1, %s16
    $region7: #{tpu_custom_call.1} parent=1 // loop_footer_branch
      %15 = sbr.rel target = $region3
    $region8: #{tpu_custom_call.1} parent=1 // loop_exit
      _
    %4596 = vsyncpa [#allocation3], 1
    %s4597 = scalar_lea.sflag [#allocation3], 1
    %4598 = vsyncpa %s4597, 1
    %4599 = vsyncpa [#allocation5], 1
    %4600 = vsyncpa [#allocation8], 1

</llo_original>
